<compile_context>
chip_gen: v7x
topology: tpu7x:2x2x1
jax: 0.10.0
libtpu: 0.0.40
codegen_flags: <defaults>
</compile_context>

<pallas_src>
import math
import jax
import jax.numpy as jnp
from jax import lax
from jax.experimental import pallas as pl
from jax.experimental.pallas import tpu as pltpu  # noqa: F401 (TPU backend)

# ---- problem sizes (small, consistent with DecoderBlock defaults) ----
B, N, D = 2, 8, 32          # batch, seq, hidden
H = 8                       # num_heads (DecoderBlock default)
HD = D // H                 # head dim = 4
FF = int(D * 4 * (2 / 3))   # ff_dim = 85
FFP = 128                   # ff_dim padded to a lane-dense width
EPS = 1e-8                  # RMSNorm epsilon
THETA = 10000.0             # rotary base (lucidrains RotaryEmbedding default)
START_POS = 0
NEG = -1e30                 # mask fill (finite, avoids NaN; equivalent after softmax)


def _rms(x, g):
    ms = jnp.mean(x * x, axis=-1, keepdims=True)
    return x * lax.rsqrt(ms + EPS) * g


def decoder_block_kernel(x_ref, g1_ref, g2_ref,
                         wqkv_ref, wo_ref,
                         cos_ref, sin_ref, rot_ref, bias_ref,
                         w1g_ref, w2_ref,
                         o_ref):
    x = x_ref[...]                                     # (B*N, D)

    # ---------- RMSNorm 1 + fused QKV projection on the flattened slab ----------
    xn = _rms(x, g1_ref[...])
    qkv = jnp.dot(xn, wqkv_ref[...],
                  preferred_element_type=jnp.float32)  # (B*N, 3D), wq pre-scaled

    qk = qkv[:, :2 * D]                                # (B*N, 2D) = [q | k]
    v = qkv[:, 2 * D:]                                 # (B*N, D)

    # ---------- rotary embedding on [q | k] in one shot (block-diag rotate_half) ----
    cos = cos_ref[...]                                 # (B*N, 2D)
    sin = sin_ref[...]                                 # (B*N, 2D)
    qk = qk * cos + jnp.dot(qk, rot_ref[...],
                            preferred_element_type=jnp.float32) * sin
    q = qk[:, :D]                                      # (B*N, D)
    k = qk[:, D:]                                      # (B*N, D)

    # ---------- causal multi-head attention (batched over B inside each head) -------
    q3 = q.reshape(B, N, D)
    k3 = k.reshape(B, N, D)
    v3 = v.reshape(B, N, D)
    bias = bias_ref[...]                               # (N, N) additive {0, NEG}
    # TODO(synk): padding_mask support (None in this configuration).

    ctx_heads = []
    for h in range(H):                                 # unrolled; tiny head dim
        lo, hi = h * HD, (h + 1) * HD
        qh = q3[:, :, lo:hi]                           # (B, N, HD)
        kh = k3[:, :, lo:hi]
        vh = v3[:, :, lo:hi]
        s = jnp.einsum('bnd,bmd->bnm', qh, kh,
                       preferred_element_type=jnp.float32) + bias
        s = s - jnp.max(s, axis=-1, keepdims=True)
        p = jnp.exp(s)
        p = p / jnp.sum(p, axis=-1, keepdims=True)
        ctx_heads.append(jnp.einsum('bnm,bmd->bnd', p, vh,
                                    preferred_element_type=jnp.float32))
    ctx = jnp.concatenate(ctx_heads, axis=-1).reshape(B * N, D)
    attn = jnp.dot(ctx, wo_ref[...], preferred_element_type=jnp.float32)
    x = x + attn                                       # dropout (eval) = identity

    # ---------- RMSNorm 2 + SwiGLU feed-forward (gate/value fused, FF padded) -------
    xn2 = _rms(x, g2_ref[...])
    hgv = jnp.dot(xn2, w1g_ref[...], preferred_element_type=jnp.float32)  # (B*N, 2*FFP)
    h1 = hgv[:, :FFP]
    hv = hgv[:, FFP:]
    h1 = h1 * jax.nn.sigmoid(h1)                       # SiLU
    y = jnp.dot(h1 * hv, w2_ref[...], preferred_element_type=jnp.float32)
    o_ref[...] = x + y                                 # dropout (eval) = identity


def _rotary_cos_sin():
    """Per-head rotary tables (N, HD), interleaved-pair convention."""
    inv_freq = 1.0 / (THETA ** (jnp.arange(0, HD, 2, dtype=jnp.float32) / HD))
    t = jnp.arange(N, dtype=jnp.float32)
    freqs = jnp.outer(t, inv_freq)                 # (N, HD//2)
    freqs = jnp.repeat(freqs, 2, axis=-1)          # (N, HD), pairwise repeated
    return jnp.cos(freqs), jnp.sin(freqs)


def make_rotary_tables():
    cos, sin = _rotary_cos_sin()
    # tile across 2*H head-slots (q heads then k heads on the lane axis) and batch (rows)
    cos_full = jnp.tile(cos, (B, 2 * H))           # (B*N, 2D)
    sin_full = jnp.tile(sin, (B, 2 * H))
    # rotate_half (interleaved) as a right-multiply matrix:
    # (q @ P)[:, 2i] = -q[:, 2i+1],  (q @ P)[:, 2i+1] = q[:, 2i]
    P = jnp.zeros((HD, HD), jnp.float32)
    idx = jnp.arange(0, HD, 2)
    P = P.at[idx + 1, idx].set(-1.0)
    P = P.at[idx, idx + 1].set(1.0)
    # block-diagonal (2D, 2D): 2*H copies of P on the diagonal (covers q and k lanes)
    R = jnp.zeros((2 * D, 2 * D), jnp.float32)
    for h in range(2 * H):
        R = R.at[h * HD:(h + 1) * HD, h * HD:(h + 1) * HD].set(P)
    return cos_full, sin_full, R


def make_mask_bias():
    # allowed iff (col < start_pos) or (col <= row), as in MultiHeadAttention
    row = jnp.arange(N)[:, None]
    col = jnp.arange(N)[None, :]
    allowed = (col < START_POS) | (col <= row)
    return jnp.where(allowed, 0.0, NEG).astype(jnp.float32)


def decoder_block(x, params):
    g1, g2, wq, wk, wv, wo, w1, wg, w2 = params
    cos, sin, R = make_rotary_tables()
    bias = make_mask_bias()

    # fold 1/sqrt(head_dim) into wq (exact: rotary is linear), fuse QKV into one weight
    wq_s = wq * (1.0 / math.sqrt(HD))
    wqkv = jnp.concatenate([wq_s, wk, wv], axis=1)          # (D, 3D)

    # zero-pad FFN to a lane-dense width (bit-compatible: pad units contribute 0),
    # fuse the SiLU branch and the gate branch into one weight
    w1p = jnp.zeros((D, FFP), jnp.float32).at[:, :FF].set(w1)
    wgp = jnp.zeros((D, FFP), jnp.float32).at[:, :FF].set(wg)
    w1g = jnp.concatenate([w1p, wgp], axis=1)                # (D, 2*FFP)
    w2p = jnp.zeros((FFP, D), jnp.float32).at[:FF, :].set(w2)

    out = pl.pallas_call(
        decoder_block_kernel,
        out_shape=jax.ShapeDtypeStruct((B * N, D), jnp.float32),
        # grid-less call: every operand is a single whole-array VMEM block
    )(x.reshape(B * N, D), g1.reshape(1, D), g2.reshape(1, D),
      wqkv, wo, cos, sin, R, bias, w1g, w2p)
    return out.reshape(B, N, D)


# ------------------------- pure-JAX reference -------------------------
def reference(x, params):
    g1, g2, wq, wk, wv, wo, w1, wg, w2 = params
    cos, sin = _rotary_cos_sin()

    def rms(t, g):
        return t * lax.rsqrt(jnp.mean(t * t, axis=-1, keepdims=True) + EPS) * g

    def rot_half(t):
        x1 = t[..., 0::2]
        x2 = t[..., 1::2]
        return jnp.stack((-x2, x1), axis=-1).reshape(t.shape)

    xn = rms(x, g1)
    q = xn @ wq
    k = xn @ wk
    v = xn @ wv
    to_heads = lambda t: t.reshape(B, N, H, HD).transpose(0, 2, 1, 3)
    qh, kh, vh = to_heads(q), to_heads(k), to_heads(v)
    qh = qh * cos + rot_half(qh) * sin
    kh = kh * cos + rot_half(kh) * sin
    s = jnp.einsum('bhnd,bhmd->bhnm', qh, kh) / math.sqrt(HD)
    row = jnp.arange(N)[:, None]
    col = jnp.arange(N)[None, :]
    allowed = (col < START_POS) | (col <= row)
    s = jnp.where(allowed, s, -jnp.inf)
    p = jax.nn.softmax(s, axis=-1)
    o = jnp.einsum('bhnm,bhmd->bhnd', p, vh)
    o = o.transpose(0, 2, 1, 3).reshape(B, N, D) @ wo
    x = x + o
    xn2 = rms(x, g2)
    h1 = xn2 @ w1
    h1 = h1 * jax.nn.sigmoid(h1)
    y = (h1 * (xn2 @ wg)) @ w2
    return x + y


def init_params(key):
    ks = jax.random.split(key, 8)
    g1 = jnp.ones((D,), jnp.float32)
    g2 = jnp.ones((D,), jnp.float32)
    s_d = 1.0 / math.sqrt(D)
    s_f = 1.0 / math.sqrt(FF)
    wq = jax.random.normal(ks[0], (D, D), jnp.float32) * s_d
    wk = jax.random.normal(ks[1], (D, D), jnp.float32) * s_d
    wv = jax.random.normal(ks[2], (D, D), jnp.float32) * s_d
    wo = jax.random.normal(ks[3], (D, D), jnp.float32) * s_d
    w1 = jax.random.normal(ks[4], (D, FF), jnp.float32) * s_d
    wg = jax.random.normal(ks[5], (D, FF), jnp.float32) * s_d
    w2 = jax.random.normal(ks[6], (FF, D), jnp.float32) * s_f
    return (g1, g2, wq, wk, wv, wo, w1, wg, w2)


if __name__ == "__main__":
    key = jax.random.PRNGKey(0)
    kx, kp = jax.random.split(key)
    x = jax.random.normal(kx, (B, N, D), jnp.float32)
    params = init_params(kp)

    out = decoder_block(x, params)
    out = jax.block_until_ready(out)

    ref = reference(x, params)
    assert out.shape == (B, N, D)
    assert jnp.allclose(out, ref, rtol=1e-4, atol=1e-4), (
        f"max abs err {jnp.max(jnp.abs(out - ref))}")
    print("KERNEL_OK")
</pallas_src>

<mosaic_0001>
module attributes {stable_mosaic.version = 11 : i64} {
  func.func @decoder_block_kernel(%arg0: memref<16x32xf32, #tpu.memory_space<vmem>>, %arg1: memref<1x32xf32, #tpu.memory_space<vmem>>, %arg2: memref<1x32xf32, #tpu.memory_space<vmem>>, %arg3: memref<32x96xf32, #tpu.memory_space<vmem>>, %arg4: memref<32x32xf32, #tpu.memory_space<vmem>>, %arg5: memref<16x64xf32, #tpu.memory_space<vmem>>, %arg6: memref<16x64xf32, #tpu.memory_space<vmem>>, %arg7: memref<64x64xf32, #tpu.memory_space<vmem>>, %arg8: memref<8x8xf32, #tpu.memory_space<vmem>>, %arg9: memref<32x256xf32, #tpu.memory_space<vmem>>, %arg10: memref<128x32xf32, #tpu.memory_space<vmem>>, %arg11: memref<16x32xf32, #tpu.memory_space<vmem>>) attributes {dimension_semantics = [], scalar_prefetch = 0 : i64, scratch_operands = 0 : i64, tpu.core_type = #tpu.core_type<tc>} {
    %c0 = arith.constant 0 : index
    %c0_0 = arith.constant 0 : index
    %0 = vector.load %arg0[%c0, %c0_0] : memref<16x32xf32, #tpu.memory_space<vmem>>, vector<16x32xf32>
    %c0_1 = arith.constant 0 : index
    %c0_2 = arith.constant 0 : index
    %1 = vector.load %arg1[%c0_1, %c0_2] : memref<1x32xf32, #tpu.memory_space<vmem>>, vector<1x32xf32>
    %2 = arith.mulf %0, %0 : vector<16x32xf32>
    %cst = arith.constant dense<0.000000e+00> : vector<16xf32>
    %3 = vector.multi_reduction <add>, %2, %cst [1] : vector<16x32xf32> to vector<16xf32>
    %4 = vector.shape_cast %3 : vector<16xf32> to vector<16x1xf32>
    %cst_3 = arith.constant 3.200000e+01 : f32
    %5 = vector.broadcast %cst_3 : f32 to vector<16x1xf32>
    %6 = arith.divf %4, %5 : vector<16x1xf32>
    %cst_4 = arith.constant 9.99999993E-9 : f32
    %7 = vector.broadcast %cst_4 : f32 to vector<16x1xf32>
    %8 = arith.addf %6, %7 : vector<16x1xf32>
    %9 = math.rsqrt %8 : vector<16x1xf32>
    %10 = vector.broadcast %9 : vector<16x1xf32> to vector<16x32xf32>
    %11 = arith.mulf %0, %10 : vector<16x32xf32>
    %12 = vector.broadcast %1 : vector<1x32xf32> to vector<16x32xf32>
    %13 = arith.mulf %11, %12 : vector<16x32xf32>
    %c0_5 = arith.constant 0 : index
    %c0_6 = arith.constant 0 : index
    %14 = vector.load %arg3[%c0_5, %c0_6] : memref<32x96xf32, #tpu.memory_space<vmem>>, vector<32x96xf32>
    %cst_7 = arith.constant dense<0.000000e+00> : vector<16x96xf32>
    %15 = tpu.matmul %13, %14, %cst_7 {dimension_numbers = #tpu.dot_dimension_numbers<[1], [0], [0], [1], [0, 0, 1, 1], [], []>} : vector<16x32xf32>, vector<32x96xf32>, vector<16x96xf32> -> vector<16x96xf32>
    %16 = vector.extract_strided_slice %15 {offsets = [0, 0], sizes = [16, 64], strides = [1, 1]} : vector<16x96xf32> to vector<16x64xf32>
    %17 = vector.extract_strided_slice %15 {offsets = [0, 64], sizes = [16, 32], strides = [1, 1]} : vector<16x96xf32> to vector<16x32xf32>
    %c0_8 = arith.constant 0 : index
    %c0_9 = arith.constant 0 : index
    %18 = vector.load %arg5[%c0_8, %c0_9] : memref<16x64xf32, #tpu.memory_space<vmem>>, vector<16x64xf32>
    %c0_10 = arith.constant 0 : index
    %c0_11 = arith.constant 0 : index
    %19 = vector.load %arg6[%c0_10, %c0_11] : memref<16x64xf32, #tpu.memory_space<vmem>>, vector<16x64xf32>
    %20 = arith.mulf %16, %18 : vector<16x64xf32>
    %c0_12 = arith.constant 0 : index
    %c0_13 = arith.constant 0 : index
    %21 = vector.load %arg7[%c0_12, %c0_13] : memref<64x64xf32, #tpu.memory_space<vmem>>, vector<64x64xf32>
    %cst_14 = arith.constant dense<0.000000e+00> : vector<16x64xf32>
    %22 = tpu.matmul %16, %21, %cst_14 {dimension_numbers = #tpu.dot_dimension_numbers<[1], [0], [0], [1], [0, 0, 1, 1], [], []>} : vector<16x64xf32>, vector<64x64xf32>, vector<16x64xf32> -> vector<16x64xf32>
    %23 = arith.mulf %22, %19 : vector<16x64xf32>
    %24 = arith.addf %20, %23 : vector<16x64xf32>
    %25 = vector.extract_strided_slice %24 {offsets = [0, 0], sizes = [16, 32], strides = [1, 1]} : vector<16x64xf32> to vector<16x32xf32>
    %26 = vector.extract_strided_slice %24 {offsets = [0, 32], sizes = [16, 32], strides = [1, 1]} : vector<16x64xf32> to vector<16x32xf32>
    %27 = vector.shape_cast %25 : vector<16x32xf32> to vector<2x8x32xf32>
    %28 = vector.shape_cast %26 : vector<16x32xf32> to vector<2x8x32xf32>
    %29 = vector.shape_cast %17 : vector<16x32xf32> to vector<2x8x32xf32>
    %c0_15 = arith.constant 0 : index
    %c0_16 = arith.constant 0 : index
    %30 = vector.load %arg8[%c0_15, %c0_16] : memref<8x8xf32, #tpu.memory_space<vmem>>, vector<8x8xf32>
    %31 = vector.extract_strided_slice %27 {offsets = [0, 0, 0], sizes = [2, 8, 4], strides = [1, 1, 1]} : vector<2x8x32xf32> to vector<2x8x4xf32>
    %32 = vector.extract_strided_slice %28 {offsets = [0, 0, 0], sizes = [2, 8, 4], strides = [1, 1, 1]} : vector<2x8x32xf32> to vector<2x8x4xf32>
    %33 = vector.extract_strided_slice %29 {offsets = [0, 0, 0], sizes = [2, 8, 4], strides = [1, 1, 1]} : vector<2x8x32xf32> to vector<2x8x4xf32>
    "tpu.trace_start"() <{level = 10 : i32, message = "bnd,bmd->bnm"}> : () -> ()
    %cst_17 = arith.constant dense<0.000000e+00> : vector<2x8x8xf32>
    %34 = tpu.matmul %31, %32, %cst_17 {dimension_numbers = #tpu.dot_dimension_numbers<[2], [2], [1], [1], [0, 0, 0, 1, 1, 1], [0], [0]>} : vector<2x8x4xf32>, vector<2x8x4xf32>, vector<2x8x8xf32> -> vector<2x8x8xf32>
    "tpu.trace_stop"() : () -> ()
    %35 = vector.shape_cast %30 : vector<8x8xf32> to vector<1x8x8xf32>
    %36 = vector.broadcast %35 : vector<1x8x8xf32> to vector<2x8x8xf32>
    %37 = arith.addf %34, %36 : vector<2x8x8xf32>
    %cst_18 = arith.constant dense<0xFF800000> : vector<2x8xf32>
    %38 = vector.multi_reduction <maximumf>, %37, %cst_18 [2] : vector<2x8x8xf32> to vector<2x8xf32>
    %39 = vector.shape_cast %38 : vector<2x8xf32> to vector<2x8x1xf32>
    %40 = vector.broadcast %39 : vector<2x8x1xf32> to vector<2x8x8xf32>
    %41 = arith.subf %37, %40 : vector<2x8x8xf32>
    %42 = math.exp %41 : vector<2x8x8xf32>
    %cst_19 = arith.constant dense<0.000000e+00> : vector<2x8xf32>
    %43 = vector.multi_reduction <add>, %42, %cst_19 [2] : vector<2x8x8xf32> to vector<2x8xf32>
    %44 = vector.shape_cast %43 : vector<2x8xf32> to vector<2x8x1xf32>
    %45 = vector.broadcast %44 : vector<2x8x1xf32> to vector<2x8x8xf32>
    %46 = arith.divf %42, %45 : vector<2x8x8xf32>
    "tpu.trace_start"() <{level = 10 : i32, message = "bnm,bmd->bnd"}> : () -> ()
    %cst_20 = arith.constant dense<0.000000e+00> : vector<2x8x4xf32>
    %47 = tpu.matmul %46, %33, %cst_20 {dimension_numbers = #tpu.dot_dimension_numbers<[2], [1], [1], [2], [0, 0, 0, 1, 1, 2], [0], [0]>} : vector<2x8x8xf32>, vector<2x8x4xf32>, vector<2x8x4xf32> -> vector<2x8x4xf32>
    "tpu.trace_stop"() : () -> ()
    %48 = vector.extract_strided_slice %27 {offsets = [0, 0, 4], sizes = [2, 8, 4], strides = [1, 1, 1]} : vector<2x8x32xf32> to vector<2x8x4xf32>
    %49 = vector.extract_strided_slice %28 {offsets = [0, 0, 4], sizes = [2, 8, 4], strides = [1, 1, 1]} : vector<2x8x32xf32> to vector<2x8x4xf32>
    %50 = vector.extract_strided_slice %29 {offsets = [0, 0, 4], sizes = [2, 8, 4], strides = [1, 1, 1]} : vector<2x8x32xf32> to vector<2x8x4xf32>
    "tpu.trace_start"() <{level = 10 : i32, message = "bnd,bmd->bnm"}> : () -> ()
    %cst_21 = arith.constant dense<0.000000e+00> : vector<2x8x8xf32>
    %51 = tpu.matmul %48, %49, %cst_21 {dimension_numbers = #tpu.dot_dimension_numbers<[2], [2], [1], [1], [0, 0, 0, 1, 1, 1], [0], [0]>} : vector<2x8x4xf32>, vector<2x8x4xf32>, vector<2x8x8xf32> -> vector<2x8x8xf32>
    "tpu.trace_stop"() : () -> ()
    %52 = vector.shape_cast %30 : vector<8x8xf32> to vector<1x8x8xf32>
    %53 = vector.broadcast %52 : vector<1x8x8xf32> to vector<2x8x8xf32>
    %54 = arith.addf %51, %53 : vector<2x8x8xf32>
    %cst_22 = arith.constant dense<0xFF800000> : vector<2x8xf32>
    %55 = vector.multi_reduction <maximumf>, %54, %cst_22 [2] : vector<2x8x8xf32> to vector<2x8xf32>
    %56 = vector.shape_cast %55 : vector<2x8xf32> to vector<2x8x1xf32>
    %57 = vector.broadcast %56 : vector<2x8x1xf32> to vector<2x8x8xf32>
    %58 = arith.subf %54, %57 : vector<2x8x8xf32>
    %59 = math.exp %58 : vector<2x8x8xf32>
    %cst_23 = arith.constant dense<0.000000e+00> : vector<2x8xf32>
    %60 = vector.multi_reduction <add>, %59, %cst_23 [2] : vector<2x8x8xf32> to vector<2x8xf32>
    %61 = vector.shape_cast %60 : vector<2x8xf32> to vector<2x8x1xf32>
    %62 = vector.broadcast %61 : vector<2x8x1xf32> to vector<2x8x8xf32>
    %63 = arith.divf %59, %62 : vector<2x8x8xf32>
    "tpu.trace_start"() <{level = 10 : i32, message = "bnm,bmd->bnd"}> : () -> ()
    %cst_24 = arith.constant dense<0.000000e+00> : vector<2x8x4xf32>
    %64 = tpu.matmul %63, %50, %cst_24 {dimension_numbers = #tpu.dot_dimension_numbers<[2], [1], [1], [2], [0, 0, 0, 1, 1, 2], [0], [0]>} : vector<2x8x8xf32>, vector<2x8x4xf32>, vector<2x8x4xf32> -> vector<2x8x4xf32>
    "tpu.trace_stop"() : () -> ()
    %65 = vector.extract_strided_slice %27 {offsets = [0, 0, 8], sizes = [2, 8, 4], strides = [1, 1, 1]} : vector<2x8x32xf32> to vector<2x8x4xf32>
    %66 = vector.extract_strided_slice %28 {offsets = [0, 0, 8], sizes = [2, 8, 4], strides = [1, 1, 1]} : vector<2x8x32xf32> to vector<2x8x4xf32>
    %67 = vector.extract_strided_slice %29 {offsets = [0, 0, 8], sizes = [2, 8, 4], strides = [1, 1, 1]} : vector<2x8x32xf32> to vector<2x8x4xf32>
    "tpu.trace_start"() <{level = 10 : i32, message = "bnd,bmd->bnm"}> : () -> ()
    %cst_25 = arith.constant dense<0.000000e+00> : vector<2x8x8xf32>
    %68 = tpu.matmul %65, %66, %cst_25 {dimension_numbers = #tpu.dot_dimension_numbers<[2], [2], [1], [1], [0, 0, 0, 1, 1, 1], [0], [0]>} : vector<2x8x4xf32>, vector<2x8x4xf32>, vector<2x8x8xf32> -> vector<2x8x8xf32>
    "tpu.trace_stop"() : () -> ()
    %69 = vector.shape_cast %30 : vector<8x8xf32> to vector<1x8x8xf32>
    %70 = vector.broadcast %69 : vector<1x8x8xf32> to vector<2x8x8xf32>
    %71 = arith.addf %68, %70 : vector<2x8x8xf32>
    %cst_26 = arith.constant dense<0xFF800000> : vector<2x8xf32>
    %72 = vector.multi_reduction <maximumf>, %71, %cst_26 [2] : vector<2x8x8xf32> to vector<2x8xf32>
    %73 = vector.shape_cast %72 : vector<2x8xf32> to vector<2x8x1xf32>
    %74 = vector.broadcast %73 : vector<2x8x1xf32> to vector<2x8x8xf32>
    %75 = arith.subf %71, %74 : vector<2x8x8xf32>
    %76 = math.exp %75 : vector<2x8x8xf32>
    %cst_27 = arith.constant dense<0.000000e+00> : vector<2x8xf32>
    %77 = vector.multi_reduction <add>, %76, %cst_27 [2] : vector<2x8x8xf32> to vector<2x8xf32>
    %78 = vector.shape_cast %77 : vector<2x8xf32> to vector<2x8x1xf32>
    %79 = vector.broadcast %78 : vector<2x8x1xf32> to vector<2x8x8xf32>
    %80 = arith.divf %76, %79 : vector<2x8x8xf32>
    "tpu.trace_start"() <{level = 10 : i32, message = "bnm,bmd->bnd"}> : () -> ()
    %cst_28 = arith.constant dense<0.000000e+00> : vector<2x8x4xf32>
    %81 = tpu.matmul %80, %67, %cst_28 {dimension_numbers = #tpu.dot_dimension_numbers<[2], [1], [1], [2], [0, 0, 0, 1, 1, 2], [0], [0]>} : vector<2x8x8xf32>, vector<2x8x4xf32>, vector<2x8x4xf32> -> vector<2x8x4xf32>
    "tpu.trace_stop"() : () -> ()
    %82 = vector.extract_strided_slice %27 {offsets = [0, 0, 12], sizes = [2, 8, 4], strides = [1, 1, 1]} : vector<2x8x32xf32> to vector<2x8x4xf32>
    %83 = vector.extract_strided_slice %28 {offsets = [0, 0, 12], sizes = [2, 8, 4], strides = [1, 1, 1]} : vector<2x8x32xf32> to vector<2x8x4xf32>
    %84 = vector.extract_strided_slice %29 {offsets = [0, 0, 12], sizes = [2, 8, 4], strides = [1, 1, 1]} : vector<2x8x32xf32> to vector<2x8x4xf32>
    "tpu.trace_start"() <{level = 10 : i32, message = "bnd,bmd->bnm"}> : () -> ()
    %cst_29 = arith.constant dense<0.000000e+00> : vector<2x8x8xf32>
    %85 = tpu.matmul %82, %83, %cst_29 {dimension_numbers = #tpu.dot_dimension_numbers<[2], [2], [1], [1], [0, 0, 0, 1, 1, 1], [0], [0]>} : vector<2x8x4xf32>, vector<2x8x4xf32>, vector<2x8x8xf32> -> vector<2x8x8xf32>
    "tpu.trace_stop"() : () -> ()
    %86 = vector.shape_cast %30 : vector<8x8xf32> to vector<1x8x8xf32>
    %87 = vector.broadcast %86 : vector<1x8x8xf32> to vector<2x8x8xf32>
    %88 = arith.addf %85, %87 : vector<2x8x8xf32>
    %cst_30 = arith.constant dense<0xFF800000> : vector<2x8xf32>
    %89 = vector.multi_reduction <maximumf>, %88, %cst_30 [2] : vector<2x8x8xf32> to vector<2x8xf32>
    %90 = vector.shape_cast %89 : vector<2x8xf32> to vector<2x8x1xf32>
    %91 = vector.broadcast %90 : vector<2x8x1xf32> to vector<2x8x8xf32>
    %92 = arith.subf %88, %91 : vector<2x8x8xf32>
    %93 = math.exp %92 : vector<2x8x8xf32>
    %cst_31 = arith.constant dense<0.000000e+00> : vector<2x8xf32>
    %94 = vector.multi_reduction <add>, %93, %cst_31 [2] : vector<2x8x8xf32> to vector<2x8xf32>
    %95 = vector.shape_cast %94 : vector<2x8xf32> to vector<2x8x1xf32>
    %96 = vector.broadcast %95 : vector<2x8x1xf32> to vector<2x8x8xf32>
    %97 = arith.divf %93, %96 : vector<2x8x8xf32>
    "tpu.trace_start"() <{level = 10 : i32, message = "bnm,bmd->bnd"}> : () -> ()
    %cst_32 = arith.constant dense<0.000000e+00> : vector<2x8x4xf32>
    %98 = tpu.matmul %97, %84, %cst_32 {dimension_numbers = #tpu.dot_dimension_numbers<[2], [1], [1], [2], [0, 0, 0, 1, 1, 2], [0], [0]>} : vector<2x8x8xf32>, vector<2x8x4xf32>, vector<2x8x4xf32> -> vector<2x8x4xf32>
    "tpu.trace_stop"() : () -> ()
    %99 = vector.extract_strided_slice %27 {offsets = [0, 0, 16], sizes = [2, 8, 4], strides = [1, 1, 1]} : vector<2x8x32xf32> to vector<2x8x4xf32>
    %100 = vector.extract_strided_slice %28 {offsets = [0, 0, 16], sizes = [2, 8, 4], strides = [1, 1, 1]} : vector<2x8x32xf32> to vector<2x8x4xf32>
    %101 = vector.extract_strided_slice %29 {offsets = [0, 0, 16], sizes = [2, 8, 4], strides = [1, 1, 1]} : vector<2x8x32xf32> to vector<2x8x4xf32>
    "tpu.trace_start"() <{level = 10 : i32, message = "bnd,bmd->bnm"}> : () -> ()
    %cst_33 = arith.constant dense<0.000000e+00> : vector<2x8x8xf32>
    %102 = tpu.matmul %99, %100, %cst_33 {dimension_numbers = #tpu.dot_dimension_numbers<[2], [2], [1], [1], [0, 0, 0, 1, 1, 1], [0], [0]>} : vector<2x8x4xf32>, vector<2x8x4xf32>, vector<2x8x8xf32> -> vector<2x8x8xf32>
    "tpu.trace_stop"() : () -> ()
    %103 = vector.shape_cast %30 : vector<8x8xf32> to vector<1x8x8xf32>
    %104 = vector.broadcast %103 : vector<1x8x8xf32> to vector<2x8x8xf32>
    %105 = arith.addf %102, %104 : vector<2x8x8xf32>
    %cst_34 = arith.constant dense<0xFF800000> : vector<2x8xf32>
    %106 = vector.multi_reduction <maximumf>, %105, %cst_34 [2] : vector<2x8x8xf32> to vector<2x8xf32>
    %107 = vector.shape_cast %106 : vector<2x8xf32> to vector<2x8x1xf32>
    %108 = vector.broadcast %107 : vector<2x8x1xf32> to vector<2x8x8xf32>
    %109 = arith.subf %105, %108 : vector<2x8x8xf32>
    %110 = math.exp %109 : vector<2x8x8xf32>
    %cst_35 = arith.constant dense<0.000000e+00> : vector<2x8xf32>
    %111 = vector.multi_reduction <add>, %110, %cst_35 [2] : vector<2x8x8xf32> to vector<2x8xf32>
    %112 = vector.shape_cast %111 : vector<2x8xf32> to vector<2x8x1xf32>
    %113 = vector.broadcast %112 : vector<2x8x1xf32> to vector<2x8x8xf32>
    %114 = arith.divf %110, %113 : vector<2x8x8xf32>
    "tpu.trace_start"() <{level = 10 : i32, message = "bnm,bmd->bnd"}> : () -> ()
    %cst_36 = arith.constant dense<0.000000e+00> : vector<2x8x4xf32>
    %115 = tpu.matmul %114, %101, %cst_36 {dimension_numbers = #tpu.dot_dimension_numbers<[2], [1], [1], [2], [0, 0, 0, 1, 1, 2], [0], [0]>} : vector<2x8x8xf32>, vector<2x8x4xf32>, vector<2x8x4xf32> -> vector<2x8x4xf32>
    "tpu.trace_stop"() : () -> ()
    %116 = vector.extract_strided_slice %27 {offsets = [0, 0, 20], sizes = [2, 8, 4], strides = [1, 1, 1]} : vector<2x8x32xf32> to vector<2x8x4xf32>
    %117 = vector.extract_strided_slice %28 {offsets = [0, 0, 20], sizes = [2, 8, 4], strides = [1, 1, 1]} : vector<2x8x32xf32> to vector<2x8x4xf32>
    %118 = vector.extract_strided_slice %29 {offsets = [0, 0, 20], sizes = [2, 8, 4], strides = [1, 1, 1]} : vector<2x8x32xf32> to vector<2x8x4xf32>
    "tpu.trace_start"() <{level = 10 : i32, message = "bnd,bmd->bnm"}> : () -> ()
    %cst_37 = arith.constant dense<0.000000e+00> : vector<2x8x8xf32>
    %119 = tpu.matmul %116, %117, %cst_37 {dimension_numbers = #tpu.dot_dimension_numbers<[2], [2], [1], [1], [0, 0, 0, 1, 1, 1], [0], [0]>} : vector<2x8x4xf32>, vector<2x8x4xf32>, vector<2x8x8xf32> -> vector<2x8x8xf32>
    "tpu.trace_stop"() : () -> ()
    %120 = vector.shape_cast %30 : vector<8x8xf32> to vector<1x8x8xf32>
    %121 = vector.broadcast %120 : vector<1x8x8xf32> to vector<2x8x8xf32>
    %122 = arith.addf %119, %121 : vector<2x8x8xf32>
    %cst_38 = arith.constant dense<0xFF800000> : vector<2x8xf32>
    %123 = vector.multi_reduction <maximumf>, %122, %cst_38 [2] : vector<2x8x8xf32> to vector<2x8xf32>
    %124 = vector.shape_cast %123 : vector<2x8xf32> to vector<2x8x1xf32>
    %125 = vector.broadcast %124 : vector<2x8x1xf32> to vector<2x8x8xf32>
    %126 = arith.subf %122, %125 : vector<2x8x8xf32>
    %127 = math.exp %126 : vector<2x8x8xf32>
    %cst_39 = arith.constant dense<0.000000e+00> : vector<2x8xf32>
    %128 = vector.multi_reduction <add>, %127, %cst_39 [2] : vector<2x8x8xf32> to vector<2x8xf32>
    %129 = vector.shape_cast %128 : vector<2x8xf32> to vector<2x8x1xf32>
    %130 = vector.broadcast %129 : vector<2x8x1xf32> to vector<2x8x8xf32>
    %131 = arith.divf %127, %130 : vector<2x8x8xf32>
    "tpu.trace_start"() <{level = 10 : i32, message = "bnm,bmd->bnd"}> : () -> ()
    %cst_40 = arith.constant dense<0.000000e+00> : vector<2x8x4xf32>
    %132 = tpu.matmul %131, %118, %cst_40 {dimension_numbers = #tpu.dot_dimension_numbers<[2], [1], [1], [2], [0, 0, 0, 1, 1, 2], [0], [0]>} : vector<2x8x8xf32>, vector<2x8x4xf32>, vector<2x8x4xf32> -> vector<2x8x4xf32>
    "tpu.trace_stop"() : () -> ()
    %133 = vector.extract_strided_slice %27 {offsets = [0, 0, 24], sizes = [2, 8, 4], strides = [1, 1, 1]} : vector<2x8x32xf32> to vector<2x8x4xf32>
    %134 = vector.extract_strided_slice %28 {offsets = [0, 0, 24], sizes = [2, 8, 4], strides = [1, 1, 1]} : vector<2x8x32xf32> to vector<2x8x4xf32>
    %135 = vector.extract_strided_slice %29 {offsets = [0, 0, 24], sizes = [2, 8, 4], strides = [1, 1, 1]} : vector<2x8x32xf32> to vector<2x8x4xf32>
    "tpu.trace_start"() <{level = 10 : i32, message = "bnd,bmd->bnm"}> : () -> ()
    %cst_41 = arith.constant dense<0.000000e+00> : vector<2x8x8xf32>
    %136 = tpu.matmul %133, %134, %cst_41 {dimension_numbers = #tpu.dot_dimension_numbers<[2], [2], [1], [1], [0, 0, 0, 1, 1, 1], [0], [0]>} : vector<2x8x4xf32>, vector<2x8x4xf32>, vector<2x8x8xf32> -> vector<2x8x8xf32>
    "tpu.trace_stop"() : () -> ()
    %137 = vector.shape_cast %30 : vector<8x8xf32> to vector<1x8x8xf32>
    %138 = vector.broadcast %137 : vector<1x8x8xf32> to vector<2x8x8xf32>
    %139 = arith.addf %136, %138 : vector<2x8x8xf32>
    %cst_42 = arith.constant dense<0xFF800000> : vector<2x8xf32>
    %140 = vector.multi_reduction <maximumf>, %139, %cst_42 [2] : vector<2x8x8xf32> to vector<2x8xf32>
    %141 = vector.shape_cast %140 : vector<2x8xf32> to vector<2x8x1xf32>
    %142 = vector.broadcast %141 : vector<2x8x1xf32> to vector<2x8x8xf32>
    %143 = arith.subf %139, %142 : vector<2x8x8xf32>
    %144 = math.exp %143 : vector<2x8x8xf32>
    %cst_43 = arith.constant dense<0.000000e+00> : vector<2x8xf32>
    %145 = vector.multi_reduction <add>, %144, %cst_43 [2] : vector<2x8x8xf32> to vector<2x8xf32>
    %146 = vector.shape_cast %145 : vector<2x8xf32> to vector<2x8x1xf32>
    %147 = vector.broadcast %146 : vector<2x8x1xf32> to vector<2x8x8xf32>
    %148 = arith.divf %144, %147 : vector<2x8x8xf32>
    "tpu.trace_start"() <{level = 10 : i32, message = "bnm,bmd->bnd"}> : () -> ()
    %cst_44 = arith.constant dense<0.000000e+00> : vector<2x8x4xf32>
    %149 = tpu.matmul %148, %135, %cst_44 {dimension_numbers = #tpu.dot_dimension_numbers<[2], [1], [1], [2], [0, 0, 0, 1, 1, 2], [0], [0]>} : vector<2x8x8xf32>, vector<2x8x4xf32>, vector<2x8x4xf32> -> vector<2x8x4xf32>
    "tpu.trace_stop"() : () -> ()
    %150 = vector.extract_strided_slice %27 {offsets = [0, 0, 28], sizes = [2, 8, 4], strides = [1, 1, 1]} : vector<2x8x32xf32> to vector<2x8x4xf32>
    %151 = vector.extract_strided_slice %28 {offsets = [0, 0, 28], sizes = [2, 8, 4], strides = [1, 1, 1]} : vector<2x8x32xf32> to vector<2x8x4xf32>
    %152 = vector.extract_strided_slice %29 {offsets = [0, 0, 28], sizes = [2, 8, 4], strides = [1, 1, 1]} : vector<2x8x32xf32> to vector<2x8x4xf32>
    "tpu.trace_start"() <{level = 10 : i32, message = "bnd,bmd->bnm"}> : () -> ()
    %cst_45 = arith.constant dense<0.000000e+00> : vector<2x8x8xf32>
    %153 = tpu.matmul %150, %151, %cst_45 {dimension_numbers = #tpu.dot_dimension_numbers<[2], [2], [1], [1], [0, 0, 0, 1, 1, 1], [0], [0]>} : vector<2x8x4xf32>, vector<2x8x4xf32>, vector<2x8x8xf32> -> vector<2x8x8xf32>
    "tpu.trace_stop"() : () -> ()
    %154 = vector.shape_cast %30 : vector<8x8xf32> to vector<1x8x8xf32>
    %155 = vector.broadcast %154 : vector<1x8x8xf32> to vector<2x8x8xf32>
    %156 = arith.addf %153, %155 : vector<2x8x8xf32>
    %cst_46 = arith.constant dense<0xFF800000> : vector<2x8xf32>
    %157 = vector.multi_reduction <maximumf>, %156, %cst_46 [2] : vector<2x8x8xf32> to vector<2x8xf32>
    %158 = vector.shape_cast %157 : vector<2x8xf32> to vector<2x8x1xf32>
    %159 = vector.broadcast %158 : vector<2x8x1xf32> to vector<2x8x8xf32>
    %160 = arith.subf %156, %159 : vector<2x8x8xf32>
    %161 = math.exp %160 : vector<2x8x8xf32>
    %cst_47 = arith.constant dense<0.000000e+00> : vector<2x8xf32>
    %162 = vector.multi_reduction <add>, %161, %cst_47 [2] : vector<2x8x8xf32> to vector<2x8xf32>
    %163 = vector.shape_cast %162 : vector<2x8xf32> to vector<2x8x1xf32>
    %164 = vector.broadcast %163 : vector<2x8x1xf32> to vector<2x8x8xf32>
    %165 = arith.divf %161, %164 : vector<2x8x8xf32>
    "tpu.trace_start"() <{level = 10 : i32, message = "bnm,bmd->bnd"}> : () -> ()
    %cst_48 = arith.constant dense<0.000000e+00> : vector<2x8x4xf32>
    %166 = tpu.matmul %165, %152, %cst_48 {dimension_numbers = #tpu.dot_dimension_numbers<[2], [1], [1], [2], [0, 0, 0, 1, 1, 2], [0], [0]>} : vector<2x8x8xf32>, vector<2x8x4xf32>, vector<2x8x4xf32> -> vector<2x8x4xf32>
    "tpu.trace_stop"() : () -> ()
    %167 = tpu.concatenate %47, %64, %81, %98, %115, %132, %149, %166 in 2 : vector<2x8x4xf32>, vector<2x8x4xf32>, vector<2x8x4xf32>, vector<2x8x4xf32>, vector<2x8x4xf32>, vector<2x8x4xf32>, vector<2x8x4xf32>, vector<2x8x4xf32> -> vector<2x8x32xf32>
    %168 = vector.shape_cast %167 : vector<2x8x32xf32> to vector<16x32xf32>
    %c0_49 = arith.constant 0 : index
    %c0_50 = arith.constant 0 : index
    %169 = vector.load %arg4[%c0_49, %c0_50] : memref<32x32xf32, #tpu.memory_space<vmem>>, vector<32x32xf32>
    %cst_51 = arith.constant dense<0.000000e+00> : vector<16x32xf32>
    %170 = tpu.matmul %168, %169, %cst_51 {dimension_numbers = #tpu.dot_dimension_numbers<[1], [0], [0], [1], [0, 0, 1, 1], [], []>} : vector<16x32xf32>, vector<32x32xf32>, vector<16x32xf32> -> vector<16x32xf32>
    %171 = arith.addf %0, %170 : vector<16x32xf32>
    %c0_52 = arith.constant 0 : index
    %c0_53 = arith.constant 0 : index
    %172 = vector.load %arg2[%c0_52, %c0_53] : memref<1x32xf32, #tpu.memory_space<vmem>>, vector<1x32xf32>
    %173 = arith.mulf %171, %171 : vector<16x32xf32>
    %cst_54 = arith.constant dense<0.000000e+00> : vector<16xf32>
    %174 = vector.multi_reduction <add>, %173, %cst_54 [1] : vector<16x32xf32> to vector<16xf32>
    %175 = vector.shape_cast %174 : vector<16xf32> to vector<16x1xf32>
    %cst_55 = arith.constant 3.200000e+01 : f32
    %176 = vector.broadcast %cst_55 : f32 to vector<16x1xf32>
    %177 = arith.divf %175, %176 : vector<16x1xf32>
    %cst_56 = arith.constant 9.99999993E-9 : f32
    %178 = vector.broadcast %cst_56 : f32 to vector<16x1xf32>
    %179 = arith.addf %177, %178 : vector<16x1xf32>
    %180 = math.rsqrt %179 : vector<16x1xf32>
    %181 = vector.broadcast %180 : vector<16x1xf32> to vector<16x32xf32>
    %182 = arith.mulf %171, %181 : vector<16x32xf32>
    %183 = vector.broadcast %172 : vector<1x32xf32> to vector<16x32xf32>
    %184 = arith.mulf %182, %183 : vector<16x32xf32>
    %c0_57 = arith.constant 0 : index
    %c0_58 = arith.constant 0 : index
    %185 = vector.load %arg9[%c0_57, %c0_58] : memref<32x256xf32, #tpu.memory_space<vmem>>, vector<32x256xf32>
    %cst_59 = arith.constant dense<0.000000e+00> : vector<16x256xf32>
    %186 = tpu.matmul %184, %185, %cst_59 {dimension_numbers = #tpu.dot_dimension_numbers<[1], [0], [0], [1], [0, 0, 1, 1], [], []>} : vector<16x32xf32>, vector<32x256xf32>, vector<16x256xf32> -> vector<16x256xf32>
    %187 = vector.extract_strided_slice %186 {offsets = [0, 0], sizes = [16, 128], strides = [1, 1]} : vector<16x256xf32> to vector<16x128xf32>
    %188 = vector.extract_strided_slice %186 {offsets = [0, 128], sizes = [16, 128], strides = [1, 1]} : vector<16x256xf32> to vector<16x128xf32>
    %189 = arith.negf %187 : vector<16x128xf32>
    %190 = math.exp %189 : vector<16x128xf32>
    %cst_60 = arith.constant 1.000000e+00 : f32
    %191 = vector.broadcast %cst_60 : f32 to vector<16x128xf32>
    %192 = arith.addf %191, %190 : vector<16x128xf32>
    %193 = arith.divf %191, %192 : vector<16x128xf32>
    %194 = arith.mulf %187, %193 : vector<16x128xf32>
    %195 = arith.mulf %194, %188 : vector<16x128xf32>
    %c0_61 = arith.constant 0 : index
    %c0_62 = arith.constant 0 : index
    %196 = vector.load %arg10[%c0_61, %c0_62] : memref<128x32xf32, #tpu.memory_space<vmem>>, vector<128x32xf32>
    %cst_63 = arith.constant dense<0.000000e+00> : vector<16x32xf32>
    %197 = tpu.matmul %195, %196, %cst_63 {dimension_numbers = #tpu.dot_dimension_numbers<[1], [0], [0], [1], [0, 0, 1, 1], [], []>} : vector<16x128xf32>, vector<128x32xf32>, vector<16x32xf32> -> vector<16x32xf32>
    %198 = arith.addf %171, %197 : vector<16x32xf32>
    %c0_64 = arith.constant 0 : index
    %c0_65 = arith.constant 0 : index
    %199 = vector.load %arg11[%c0_64, %c0_65] : memref<16x32xf32, #tpu.memory_space<vmem>>, vector<16x32xf32>
    tpu.vector_store %arg11[%c0_64, %c0_65], %198 {strides = array<i32>} : memref<16x32xf32, #tpu.memory_space<vmem>>, vector<16x32xf32>,
    return
  }
}

</mosaic_0001>

<llo_original>
// kernel: tpu_custom_call.1
$region0: #{tpu_custom_call.1}
  #allocation0 [shape = 'u32[]', space=smem, size = 0x4, offset = 0x4, fixed_abs, tag = 'smem constant byte address 0x4 - core index']
  #allocation1 [shape = 'u32[144,128]{1,0:T(1,128)}', space=vmem, size = 0x12000, scoped, tag = 'internal scratch']
  %s0 = inlined_call_operand.hbm [shape: f32[16,32], index: 0, kind: input, shape index: {}]
  %s1 = inlined_call_operand.vmem [shape: f32[1,32], index: 1, kind: input, shape index: {}]
  %s2 = inlined_call_operand.vmem [shape: f32[1,32], index: 2, kind: input, shape index: {}]
  %s3 = inlined_call_operand.vmem [shape: f32[32,96], index: 3, kind: input, shape index: {}]
  %s4 = inlined_call_operand.hbm [shape: f32[32,32], index: 4, kind: input, shape index: {}]
  %s5 = inlined_call_operand.hbm [shape: f32[16,64], index: 5, kind: input, shape index: {}]
  %s6 = inlined_call_operand.hbm [shape: f32[16,64], index: 6, kind: input, shape index: {}]
  %s7 = inlined_call_operand.vmem [shape: f32[64,64], index: 7, kind: input, shape index: {}]
  %s8 = inlined_call_operand.hbm [shape: f32[8,8], index: 8, kind: input, shape index: {}]
  %s9 = inlined_call_operand.vmem [shape: f32[32,256], index: 9, kind: input, shape index: {}]
  %s10 = inlined_call_operand.vmem [shape: f32[128,32], index: 10, kind: input, shape index: {}]
  %s11 = inlined_call_operand.hbm [shape: f32[16,32], index: 11, kind: output, shape index: {}]
  %s12 = sld [smem:[#allocation0]]
  $region74: #{tpu_custom_call.1} parent=0
    _
  %s14 = ssub.s32 1, %s12
  %s15 = scalar_select 0, %s14, %s12
  $region1: #{tpu_custom_call.1} parent=0
    #allocation2 [shape = 'u8[8192]{0}', space=vmem, size = 0x2000, scoped, tag = 'input window, operand 0, single buffered']
    #allocation3 [shape = 's32[1]{0}', space=sflag, size = 0x4, scoped, tag = 'scoped memory for tpu_custom_call.1']
    #allocation4 [shape = 's32[1]{0}', space=sflag, size = 0x4, scoped, tag = 'scoped memory for tpu_custom_call.1']
    #allocation5 [shape = 'u8[16384]{0}', space=vmem, size = 0x4000, scoped, tag = 'input window, operand 4, single buffered']
    #allocation6 [shape = 's32[1]{0}', space=sflag, size = 0x4, scoped, tag = 'scoped memory for tpu_custom_call.1']
    #allocation7 [shape = 'u8[8192]{0}', space=vmem, size = 0x2000, scoped, tag = 'input window, operand 5, single buffered']
    #allocation8 [shape = 'u8[8192]{0}', space=vmem, size = 0x2000, scoped, tag = 'input window, operand 6, single buffered']
    #allocation9 [shape = 's32[1]{0}', space=sflag, size = 0x4, scoped, tag = 'scoped memory for tpu_custom_call.1']
    #allocation10 [shape = 'u8[4096]{0}', space=vmem, size = 0x1000, scoped, tag = 'input window, operand 8, single buffered']
    #allocation11 [shape = 'u8[8192]{0}', space=vmem, size = 0x2000, scoped, tag = 'output window, operand 0, single buffered']
    %16 = vsyncpa [#allocation3], 0
    %17 = vsyncpa [#allocation6], 0
    %18 = vsyncpa [#allocation9], 0
    %19 = vsyncpa [#allocation4], 0
    // Predicated region
    $region2: #{tpu_custom_call.1} parent=1 // pred_check
      _
    $region3: #{tpu_custom_call.1} parent=1 // pred_check_branch
      %21 = sbr.rel (0) target = $region5
    $region4: #{tpu_custom_call.1} parent=1 // pred_region
      %s23 = ssub.s32 256, 256
      %24 = vsyncadd [#allocation3], %s23
      %s25 = sshll.u32 [#allocation2], 4
      %s26 = int_to_ptr.vmem [resolvable:$true] %s25
      %31 = dma.hbm_to_vmem [thread:$0]  %s0, 256, %s26, [#allocation3], 128, 128, 8
    $region5: #{tpu_custom_call.1} parent=1 // pred_fallthru
      _
    // Predicated region
    $region6: #{tpu_custom_call.1} parent=1 // pred_check
      _
    $region7: #{tpu_custom_call.1} parent=1 // pred_check_branch
      %33 = sbr.rel (0) target = $region9
    $region8: #{tpu_custom_call.1} parent=1 // pred_region
      _
    $region9: #{tpu_custom_call.1} parent=1 // pred_fallthru
      _
    // Predicated region
    $region10: #{tpu_custom_call.1} parent=1 // pred_check
      _
    $region11: #{tpu_custom_call.1} parent=1 // pred_check_branch
      %35 = sbr.rel (0) target = $region13
    $region12: #{tpu_custom_call.1} parent=1 // pred_region
      _
    $region13: #{tpu_custom_call.1} parent=1 // pred_fallthru
      _
    // Predicated region
    $region14: #{tpu_custom_call.1} parent=1 // pred_check
      _
    $region15: #{tpu_custom_call.1} parent=1 // pred_check_branch
      %37 = sbr.rel (0) target = $region17
    $region16: #{tpu_custom_call.1} parent=1 // pred_region
      _
    $region17: #{tpu_custom_call.1} parent=1 // pred_fallthru
      _
    // Predicated region
    $region18: #{tpu_custom_call.1} parent=1 // pred_check
      _
    $region19: #{tpu_custom_call.1} parent=1 // pred_check_branch
      %39 = sbr.rel (0) target = $region21
    $region20: #{tpu_custom_call.1} parent=1 // pred_region
      %s41 = ssub.s32 512, 512
      %42 = vsyncadd [#allocation6], %s41
      %s43 = sshll.u32 [#allocation5], 4
      %s44 = int_to_ptr.vmem [resolvable:$true] %s43
      %49 = dma.hbm_to_vmem [thread:$0]  %s4, 512, %s44, [#allocation6], 128, 128, 8
    $region21: #{tpu_custom_call.1} parent=1 // pred_fallthru
      _
    // Predicated region
    $region22: #{tpu_custom_call.1} parent=1 // pred_check
      _
    $region23: #{tpu_custom_call.1} parent=1 // pred_check_branch
      %51 = sbr.rel (0) target = $region25
    $region24: #{tpu_custom_call.1} parent=1 // pred_region
      %s53 = ssub.s32 256, 256
      %54 = vsyncadd [#allocation6], %s53
      %s55 = sshll.u32 [#allocation7], 4
      %s56 = int_to_ptr.vmem [resolvable:$true] %s55
      %61 = dma.hbm_to_vmem [thread:$0]  %s5, 256, %s56, [#allocation6], 128, 128, 8
    $region25: #{tpu_custom_call.1} parent=1 // pred_fallthru
      _
    // Predicated region
    $region26: #{tpu_custom_call.1} parent=1 // pred_check
      _
    $region27: #{tpu_custom_call.1} parent=1 // pred_check_branch
      %63 = sbr.rel (0) target = $region29
    $region28: #{tpu_custom_call.1} parent=1 // pred_region
      %s65 = ssub.s32 256, 256
      %66 = vsyncadd [#allocation9], %s65
      %s67 = sshll.u32 [#allocation8], 4
      %s68 = int_to_ptr.vmem [resolvable:$true] %s67
      %73 = dma.hbm_to_vmem [thread:$0]  %s6, 256, %s68, [#allocation9], 128, 128, 8
    $region29: #{tpu_custom_call.1} parent=1 // pred_fallthru
      _
    // Predicated region
    $region30: #{tpu_custom_call.1} parent=1 // pred_check
      _
    $region31: #{tpu_custom_call.1} parent=1 // pred_check_branch
      %75 = sbr.rel (0) target = $region33
    $region32: #{tpu_custom_call.1} parent=1 // pred_region
      _
    $region33: #{tpu_custom_call.1} parent=1 // pred_fallthru
      _
    // Predicated region
    $region34: #{tpu_custom_call.1} parent=1 // pred_check
      _
    $region35: #{tpu_custom_call.1} parent=1 // pred_check_branch
      %77 = sbr.rel (0) target = $region37
    $region36: #{tpu_custom_call.1} parent=1 // pred_region
      %s79 = ssub.s32 128, 128
      %80 = vsyncadd [#allocation9], %s79
      %s82 = sshll.u32 [#allocation10], 4
      %s83 = int_to_ptr.vmem [resolvable:$true] %s82
      %85 = dma.hbm_to_vmem [thread:$0]  %s8, 128, %s83, [#allocation9]
    $region37: #{tpu_custom_call.1} parent=1 // pred_fallthru
      _
    // Predicated region
    $region38: #{tpu_custom_call.1} parent=1 // pred_check
      _
    $region39: #{tpu_custom_call.1} parent=1 // pred_check_branch
      %87 = sbr.rel (0) target = $region41
    $region40: #{tpu_custom_call.1} parent=1 // pred_region
      _
    $region41: #{tpu_custom_call.1} parent=1 // pred_fallthru
      _
    // Predicated region
    $region42: #{tpu_custom_call.1} parent=1 // pred_check
      _
    $region43: #{tpu_custom_call.1} parent=1 // pred_check_branch
      %89 = sbr.rel (0) target = $region45
    $region44: #{tpu_custom_call.1} parent=1 // pred_region
      _
    $region45: #{tpu_custom_call.1} parent=1 // pred_fallthru
      _
    // Predicated region
    $region46: #{tpu_custom_call.1} parent=1 // pred_check
      _
    $region47: #{tpu_custom_call.1} parent=1 // pred_check_branch
      %91 = sbr.rel (0) target = $region49
    $region48: #{tpu_custom_call.1} parent=1 // pred_region
      %92 = dma.done [#allocation3], 256
    $region49: #{tpu_custom_call.1} parent=1 // pred_fallthru
      _
    // Predicated region
    $region50: #{tpu_custom_call.1} parent=1 // pred_check
      _
    $region51: #{tpu_custom_call.1} parent=1 // pred_check_branch
      %94 = sbr.rel (0) target = $region53
    $region52: #{tpu_custom_call.1} parent=1 // pred_region
      %95 = dma.done [#allocation6], 512
    $region53: #{tpu_custom_call.1} parent=1 // pred_fallthru
      _
    // Predicated region
    $region54: #{tpu_custom_call.1} parent=1 // pred_check
      _
    $region55: #{tpu_custom_call.1} parent=1 // pred_check_branch
      %97 = sbr.rel (0) target = $region57
    $region56: #{tpu_custom_call.1} parent=1 // pred_region
      %98 = dma.done [#allocation6], 256
    $region57: #{tpu_custom_call.1} parent=1 // pred_fallthru
      _
    // Predicated region
    $region58: #{tpu_custom_call.1} parent=1 // pred_check
      _
    $region59: #{tpu_custom_call.1} parent=1 // pred_check_branch
      %100 = sbr.rel (0) target = $region61
    $region60: #{tpu_custom_call.1} parent=1 // pred_region
      %101 = dma.done [#allocation9], 256
    $region61: #{tpu_custom_call.1} parent=1 // pred_fallthru
      _
    // Predicated region
    $region62: #{tpu_custom_call.1} parent=1 // pred_check
      _
    $region63: #{tpu_custom_call.1} parent=1 // pred_check_branch
      %103 = sbr.rel (0) target = $region65
    $region64: #{tpu_custom_call.1} parent=1 // pred_region
      %104 = dma.done [#allocation9], 128
    $region65: #{tpu_custom_call.1} parent=1 // pred_fallthru
      _
    %v105 = vld [vmem:[#allocation2] sm:$0xff]
    %v106 = vld [vmem:[#allocation2 + $0x8] sm:$0xff]
    %v107 = vld [vmem:[%s1] sm:$0x1]
    %v108 = vmul.f32 %v105, %v105
    %v109 = vmul.f32 %v106, %v106
    %vm110 = vcmask 261120
    %v111 = vsel %vm110, %v108, 0.0
    %112 = vadd.xlane.f32.xlu0 %v111
    %v113 = vpop.xlane.xlu0 %112
    %v114 = vsel %vm110, %v109, 0.0
    %115 = vadd.xlane.f32.xlu0 %v114
    %v116 = vpop.xlane.xlu0 %115
    %v117 = vrcp.pop 32.0
    %v118 = vmul.f32 %v113, %v117
    %v119 = vmul.f32 %v116, %v117
    %v120 = vadd.f32 %v118, 1e-08
    %v121 = vadd.f32 %v119, 1e-08
    %v122 = vrsqrt.pop %v120
    %v123 = vrsqrt.pop %v121
    %v124 = vmul.f32 %v105, %v122
    %v125 = vmul.f32 %v106, %v123
    %v127 = vlaneseq
    %v128 = vshrl.u32 %v127, 7
    %v129 = vsub.s32 0, %v128
    %v130 = vrot.slane %v107, %v129
    %v132 = vmul.f32 %v124, %v130
    %v133 = vmul.f32 %v125, %v130
    %v134 = vld [vmem:[%s3] sm:$0xff]
    %v135 = vld [vmem:[%s3 + $0x8] sm:$0xff]
    %v136 = vld [vmem:[%s3 + $0x10] sm:$0xff]
    %v137 = vld [vmem:[%s3 + $0x18] sm:$0xff]
    %v139 = vsel %vm110, %v132, 0
    %v142 = vsel %vm110, %v133, 0
    %144 = vmatprep.subr.mxu0 0.0
    %145 = vmatpush1.msra.mxu0 %v134
    %146 = vmatprep.subr.mxu0 0.0
    %147 = vmatpush1.msra.mxu0 %v135
    %148 = vmatprep.subr.mxu0 0.0
    %149 = vmatpush1.msra.mxu0 %v136
    %150 = vmatprep.subr.mxu0 0.0
    %151 = vmatpush1.msra.mxu0 %v137
    %152 = vmatprep.subr.mxu0 0.0
    %153 = vmatpush1.msra.mxu0 0.0
    %154 = vmatprep.subr.mxu0 0.0
    %155 = vmatpush1.msra.mxu0 0.0
    %156 = vmatprep.subr.mxu0 0.0
    %157 = vmatpush1.msra.mxu0 0.0
    %158 = vmatprep.subr.mxu0 0.0
    %159 = vmatpush1.msra.mxu0 0.0
    %160 = vmatprep.subr.mxu0 0.0
    %161 = vmatpush1.msra.mxu0 0.0
    %162 = vmatprep.subr.mxu0 0.0
    %163 = vmatpush1.msra.mxu0 0.0
    %164 = vmatprep.subr.mxu0 0.0
    %165 = vmatpush1.msra.mxu0 0.0
    %166 = vmatprep.subr.mxu0 0.0
    %167 = vmatpush1.msra.mxu0 0.0
    %168 = vmatprep.subr.mxu0 0.0
    %169 = vmatpush1.msra.mxu0 0.0
    %170 = vmatprep.subr.mxu0 0.0
    %171 = vmatpush1.msra.mxu0 0.0
    %172 = vmatprep.subr.mxu0 0.0
    %173 = vmatpush1.msra.mxu0 0.0
    %174 = vmatprep.subr.mxu0 0.0
    %175 = vmatpush1.msra.mxu0 0.0
    %176 = vmatprep.subr.mxu0 0.0
    %177 = vmatpush1.msra.mxu0 0.0
    %178 = vmatprep.subr.mxu0 0.0
    %179 = vmatpush1.msra.mxu0 0.0
    %180 = vmatprep.subr.mxu0 0.0
    %181 = vmatpush1.msra.mxu0 0.0
    %182 = vmatprep.subr.mxu0 0.0
    %183 = vmatpush1.msra.mxu0 0.0
    %184 = vmatprep.subr.mxu0 0.0
    %185 = vmatpush1.msra.mxu0 0.0
    %186 = vmatprep.subr.mxu0 0.0
    %187 = vmatpush1.msra.mxu0 0.0
    %188 = vmatprep.subr.mxu0 0.0
    %189 = vmatpush1.msra.mxu0 0.0
    %190 = vmatprep.subr.mxu0 0.0
    %191 = vmatpush1.msra.mxu0 0.0
    %192 = vmatprep.subr.mxu0 0.0
    %193 = vmatpush1.msra.mxu0 0.0
    %194 = vmatprep.subr.mxu0 0.0
    %195 = vmatpush1.msra.mxu0 0.0
    %196 = vmatprep.subr.mxu0 0.0
    %197 = vmatpush1.msra.mxu0 0.0
    %198 = vmatprep.subr.mxu0 0.0
    %199 = vmatpush1.msra.mxu0 0.0
    %200 = vmatprep.subr.mxu0 0.0
    %201 = vmatpush1.msra.mxu0 0.0
    %202 = vmatprep.subr.mxu0 0.0
    %203 = vmatpush1.msra.mxu0 0.0
    %204 = vmatprep.subr.mxu0 0.0
    %205 = vmatpush1.msra.mxu0 0.0
    %206 = vmatprep.subr.mxu0 0.0
    %207 = vmatpush1.msra.mxu0 0.0
    %208 = vmatprep.mubr.f32.mxu0 0.0
    %209 = vmatmul.mubr.f32.gmra.mrb[0].mxu0 %v139
    %v210 = vpop.f32.mrb[0].mxu0
    %v211 = vadd.f32 0.0, %v210
    %v212 = vpop.f32.mrb[0].mxu0
    %213 = vmatprep.mubr.f32.mxu0 0.0
    %214 = vmatmul.mubr.f32.gmra.mrb[0].mxu0 %v142
    %v215 = vpop.f32.mrb[0].mxu0
    %v216 = vadd.f32 0.0, %v215
    %v217 = vpop.f32.mrb[0].mxu0
    %218 = vdwg.mxu0
    %v219 = vld [vmem:[#allocation7] sm:$0xff]
    %v220 = vld [vmem:[#allocation7 + $0x8] sm:$0xff]
    %v221 = vld [vmem:[#allocation8] sm:$0xff]
    %v222 = vld [vmem:[#allocation8 + $0x8] sm:$0xff]
    %v223 = vmul.f32 %v211, %v219
    %v224 = vmul.f32 %v216, %v220
    %v225 = vld [vmem:[%s7] sm:$0xff]
    %v226 = vld [vmem:[%s7 + $0x8] sm:$0xff]
    %v227 = vld [vmem:[%s7 + $0x10] sm:$0xff]
    %v228 = vld [vmem:[%s7 + $0x18] sm:$0xff]
    %v229 = vld [vmem:[%s7 + $0x20] sm:$0xff]
    %v230 = vld [vmem:[%s7 + $0x28] sm:$0xff]
    %v231 = vld [vmem:[%s7 + $0x30] sm:$0xff]
    %v232 = vld [vmem:[%s7 + $0x38] sm:$0xff]
    %vm233 = vcmask 523264
    %v235 = vsel %vm233, %v211, 0
    %v238 = vsel %vm233, %v216, 0
    %240 = vmatprep.subr.mxu0 0.0
    %241 = vmatpush1.msra.mxu0 %v225
    %242 = vmatprep.subr.mxu0 0.0
    %243 = vmatpush1.msra.mxu0 %v226
    %244 = vmatprep.subr.mxu0 0.0
    %245 = vmatpush1.msra.mxu0 %v227
    %246 = vmatprep.subr.mxu0 0.0
    %247 = vmatpush1.msra.mxu0 %v228
    %248 = vmatprep.subr.mxu0 0.0
    %249 = vmatpush1.msra.mxu0 %v229
    %250 = vmatprep.subr.mxu0 0.0
    %251 = vmatpush1.msra.mxu0 %v230
    %252 = vmatprep.subr.mxu0 0.0
    %253 = vmatpush1.msra.mxu0 %v231
    %254 = vmatprep.subr.mxu0 0.0
    %255 = vmatpush1.msra.mxu0 %v232
    %256 = vmatprep.subr.mxu0 0.0
    %257 = vmatpush1.msra.mxu0 0.0
    %258 = vmatprep.subr.mxu0 0.0
    %259 = vmatpush1.msra.mxu0 0.0
    %260 = vmatprep.subr.mxu0 0.0
    %261 = vmatpush1.msra.mxu0 0.0
    %262 = vmatprep.subr.mxu0 0.0
    %263 = vmatpush1.msra.mxu0 0.0
    %264 = vmatprep.subr.mxu0 0.0
    %265 = vmatpush1.msra.mxu0 0.0
    %266 = vmatprep.subr.mxu0 0.0
    %267 = vmatpush1.msra.mxu0 0.0
    %268 = vmatprep.subr.mxu0 0.0
    %269 = vmatpush1.msra.mxu0 0.0
    %270 = vmatprep.subr.mxu0 0.0
    %271 = vmatpush1.msra.mxu0 0.0
    %272 = vmatprep.subr.mxu0 0.0
    %273 = vmatpush1.msra.mxu0 0.0
    %274 = vmatprep.subr.mxu0 0.0
    %275 = vmatpush1.msra.mxu0 0.0
    %276 = vmatprep.subr.mxu0 0.0
    %277 = vmatpush1.msra.mxu0 0.0
    %278 = vmatprep.subr.mxu0 0.0
    %279 = vmatpush1.msra.mxu0 0.0
    %280 = vmatprep.subr.mxu0 0.0
    %281 = vmatpush1.msra.mxu0 0.0
    %282 = vmatprep.subr.mxu0 0.0
    %283 = vmatpush1.msra.mxu0 0.0
    %284 = vmatprep.subr.mxu0 0.0
    %285 = vmatpush1.msra.mxu0 0.0
    %286 = vmatprep.subr.mxu0 0.0
    %287 = vmatpush1.msra.mxu0 0.0
    %288 = vmatprep.subr.mxu0 0.0
    %289 = vmatpush1.msra.mxu0 0.0
    %290 = vmatprep.subr.mxu0 0.0
    %291 = vmatpush1.msra.mxu0 0.0
    %292 = vmatprep.subr.mxu0 0.0
    %293 = vmatpush1.msra.mxu0 0.0
    %294 = vmatprep.subr.mxu0 0.0
    %295 = vmatpush1.msra.mxu0 0.0
    %296 = vmatprep.subr.mxu0 0.0
    %297 = vmatpush1.msra.mxu0 0.0
    %298 = vmatprep.subr.mxu0 0.0
    %299 = vmatpush1.msra.mxu0 0.0
    %300 = vmatprep.subr.mxu0 0.0
    %301 = vmatpush1.msra.mxu0 0.0
    %302 = vmatprep.subr.mxu0 0.0
    %303 = vmatpush1.msra.mxu0 0.0
    %304 = vmatprep.mubr.f32.mxu0 0.0
    %305 = vmatmul.mubr.f32.gmra.mrb[0].mxu0 %v235
    %v306 = vpop.f32.mrb[0].mxu0
    %v307 = vadd.f32 0.0, %v306
    %v308 = vpop.f32.mrb[0].mxu0
    %309 = vmatprep.mubr.f32.mxu0 0.0
    %310 = vmatmul.mubr.f32.gmra.mrb[0].mxu0 %v238
    %v311 = vpop.f32.mrb[0].mxu0
    %v312 = vadd.f32 0.0, %v311
    %v313 = vpop.f32.mrb[0].mxu0
    %314 = vdwg.mxu0
    %v315 = vmul.f32 %v307, %v221
    %v316 = vmul.f32 %v312, %v222
    %v317 = vadd.f32 %v223, %v315
    %v318 = vadd.f32 %v224, %v316
    %v319 = vld [vmem:[#allocation10] sm:$0xff]
    %321 = vrot.lane.b32.xlu0 %v317, 96
    %v322 = vpop.permute.xlu0 %321
    %vm323 = vcmask 31744
    %v324 = vsel %vm323, %v317, 0
    %v326 = vsel %vm323, %v322, 0
    %328 = vmatprep.subr.mxu0 0.0
    %329 = vmatpush1.xpose.msra.mxu0 %v326
    %330 = vmatprep.subr.mxu0 0.0
    %331 = vmatpush1.xpose.msra.mxu0 0.0
    %332 = vmatprep.subr.mxu0 0.0
    %333 = vmatpush1.xpose.msra.mxu0 0.0
    %334 = vmatprep.subr.mxu0 0.0
    %335 = vmatpush1.xpose.msra.mxu0 0.0
    %336 = vmatprep.subr.mxu0 0.0
    %337 = vmatpush1.xpose.msra.mxu0 0.0
    %338 = vmatprep.subr.mxu0 0.0
    %339 = vmatpush1.xpose.msra.mxu0 0.0
    %340 = vmatprep.subr.mxu0 0.0
    %341 = vmatpush1.xpose.msra.mxu0 0.0
    %342 = vmatprep.subr.mxu0 0.0
    %343 = vmatpush1.xpose.msra.mxu0 0.0
    %344 = vmatprep.subr.mxu0 0.0
    %345 = vmatpush1.xpose.msra.mxu0 0.0
    %346 = vmatprep.subr.mxu0 0.0
    %347 = vmatpush1.xpose.msra.mxu0 0.0
    %348 = vmatprep.subr.mxu0 0.0
    %349 = vmatpush1.xpose.msra.mxu0 0.0
    %350 = vmatprep.subr.mxu0 0.0
    %351 = vmatpush1.xpose.msra.mxu0 0.0
    %352 = vmatprep.subr.mxu0 0.0
    %353 = vmatpush1.xpose.msra.mxu0 0.0
    %354 = vmatprep.subr.mxu0 0.0
    %355 = vmatpush1.xpose.msra.mxu0 0.0
    %356 = vmatprep.subr.mxu0 0.0
    %357 = vmatpush1.xpose.msra.mxu0 0.0
    %358 = vmatprep.subr.mxu0 0.0
    %359 = vmatpush1.xpose.msra.mxu0 0.0
    %360 = vmatprep.subr.mxu0 0.0
    %361 = vmatpush1.xpose.msra.mxu0 0.0
    %362 = vmatprep.subr.mxu0 0.0
    %363 = vmatpush1.xpose.msra.mxu0 0.0
    %364 = vmatprep.subr.mxu0 0.0
    %365 = vmatpush1.xpose.msra.mxu0 0.0
    %366 = vmatprep.subr.mxu0 0.0
    %367 = vmatpush1.xpose.msra.mxu0 0.0
    %368 = vmatprep.subr.mxu0 0.0
    %369 = vmatpush1.xpose.msra.mxu0 0.0
    %370 = vmatprep.subr.mxu0 0.0
    %371 = vmatpush1.xpose.msra.mxu0 0.0
    %372 = vmatprep.subr.mxu0 0.0
    %373 = vmatpush1.xpose.msra.mxu0 0.0
    %374 = vmatprep.subr.mxu0 0.0
    %375 = vmatpush1.xpose.msra.mxu0 0.0
    %376 = vmatprep.subr.mxu0 0.0
    %377 = vmatpush1.xpose.msra.mxu0 0.0
    %378 = vmatprep.subr.mxu0 0.0
    %379 = vmatpush1.xpose.msra.mxu0 0.0
    %380 = vmatprep.subr.mxu0 0.0
    %381 = vmatpush1.xpose.msra.mxu0 0.0
    %382 = vmatprep.subr.mxu0 0.0
    %383 = vmatpush1.xpose.msra.mxu0 0.0
    %384 = vmatprep.subr.mxu0 0.0
    %385 = vmatpush1.xpose.msra.mxu0 0.0
    %386 = vmatprep.subr.mxu0 0.0
    %387 = vmatpush1.xpose.msra.mxu0 0.0
    %388 = vmatprep.subr.mxu0 0.0
    %389 = vmatpush1.xpose.msra.mxu0 0.0
    %390 = vmatprep.subr.mxu0 0.0
    %391 = vmatpush1.xpose.msra.mxu0 0.0
    %392 = vmatprep.mubr.f32.mxu0 0.0
    %393 = vmatmul.mubr.f32.gmra.mrb[0].mxu0 %v324
    %v394 = vpop.f32.mrb[0].mxu0
    %v395 = vadd.f32 %v319, %v394
    %v396 = vpop.f32.mrb[0].mxu0
    %397 = vdwg.mxu0
    %399 = vrot.lane.b32.xlu0 %v318, 96
    %v400 = vpop.permute.xlu0 %399
    %v401 = vsel %vm323, %v318, 0
    %v403 = vsel %vm323, %v400, 0
    %405 = vmatprep.subr.mxu0 0.0
    %406 = vmatpush1.xpose.msra.mxu0 %v403
    %407 = vmatprep.subr.mxu0 0.0
    %408 = vmatpush1.xpose.msra.mxu0 0.0
    %409 = vmatprep.subr.mxu0 0.0
    %410 = vmatpush1.xpose.msra.mxu0 0.0
    %411 = vmatprep.subr.mxu0 0.0
    %412 = vmatpush1.xpose.msra.mxu0 0.0
    %413 = vmatprep.subr.mxu0 0.0
    %414 = vmatpush1.xpose.msra.mxu0 0.0
    %415 = vmatprep.subr.mxu0 0.0
    %416 = vmatpush1.xpose.msra.mxu0 0.0
    %417 = vmatprep.subr.mxu0 0.0
    %418 = vmatpush1.xpose.msra.mxu0 0.0
    %419 = vmatprep.subr.mxu0 0.0
    %420 = vmatpush1.xpose.msra.mxu0 0.0
    %421 = vmatprep.subr.mxu0 0.0
    %422 = vmatpush1.xpose.msra.mxu0 0.0
    %423 = vmatprep.subr.mxu0 0.0
    %424 = vmatpush1.xpose.msra.mxu0 0.0
    %425 = vmatprep.subr.mxu0 0.0
    %426 = vmatpush1.xpose.msra.mxu0 0.0
    %427 = vmatprep.subr.mxu0 0.0
    %428 = vmatpush1.xpose.msra.mxu0 0.0
    %429 = vmatprep.subr.mxu0 0.0
    %430 = vmatpush1.xpose.msra.mxu0 0.0
    %431 = vmatprep.subr.mxu0 0.0
    %432 = vmatpush1.xpose.msra.mxu0 0.0
    %433 = vmatprep.subr.mxu0 0.0
    %434 = vmatpush1.xpose.msra.mxu0 0.0
    %435 = vmatprep.subr.mxu0 0.0
    %436 = vmatpush1.xpose.msra.mxu0 0.0
    %437 = vmatprep.subr.mxu0 0.0
    %438 = vmatpush1.xpose.msra.mxu0 0.0
    %439 = vmatprep.subr.mxu0 0.0
    %440 = vmatpush1.xpose.msra.mxu0 0.0
    %441 = vmatprep.subr.mxu0 0.0
    %442 = vmatpush1.xpose.msra.mxu0 0.0
    %443 = vmatprep.subr.mxu0 0.0
    %444 = vmatpush1.xpose.msra.mxu0 0.0
    %445 = vmatprep.subr.mxu0 0.0
    %446 = vmatpush1.xpose.msra.mxu0 0.0
    %447 = vmatprep.subr.mxu0 0.0
    %448 = vmatpush1.xpose.msra.mxu0 0.0
    %449 = vmatprep.subr.mxu0 0.0
    %450 = vmatpush1.xpose.msra.mxu0 0.0
    %451 = vmatprep.subr.mxu0 0.0
    %452 = vmatpush1.xpose.msra.mxu0 0.0
    %453 = vmatprep.subr.mxu0 0.0
    %454 = vmatpush1.xpose.msra.mxu0 0.0
    %455 = vmatprep.subr.mxu0 0.0
    %456 = vmatpush1.xpose.msra.mxu0 0.0
    %457 = vmatprep.subr.mxu0 0.0
    %458 = vmatpush1.xpose.msra.mxu0 0.0
    %459 = vmatprep.subr.mxu0 0.0
    %460 = vmatpush1.xpose.msra.mxu0 0.0
    %461 = vmatprep.subr.mxu0 0.0
    %462 = vmatpush1.xpose.msra.mxu0 0.0
    %463 = vmatprep.subr.mxu0 0.0
    %464 = vmatpush1.xpose.msra.mxu0 0.0
    %465 = vmatprep.subr.mxu0 0.0
    %466 = vmatpush1.xpose.msra.mxu0 0.0
    %467 = vmatprep.subr.mxu0 0.0
    %468 = vmatpush1.xpose.msra.mxu0 0.0
    %469 = vmatprep.mubr.f32.mxu0 0.0
    %470 = vmatmul.mubr.f32.gmra.mrb[0].mxu0 %v401
    %v471 = vpop.f32.mrb[0].mxu0
    %v472 = vadd.f32 %v319, %v471
    %v473 = vpop.f32.mrb[0].mxu0
    %474 = vdwg.mxu0
    %vm475 = vcmask 64512
    %v476 = vsel %vm475, %v395, -inf
    %477 = vmax.xlane.f32.xlu0 %v476
    %v478 = vpop.xlane.xlu0 %477
    %v479 = vsel %vm475, %v472, -inf
    %480 = vmax.xlane.f32.xlu0 %v479
    %v481 = vpop.xlane.xlu0 %480
    %v482 = vsub.f32 %v395, %v478
    %v483 = vsub.f32 %v472, %v481
    %v484 = vmul.f32 %v482, 1.442695
    %v485 = vpow.pop %v484
    %v486 = vmul.f32 %v483, 1.442695
    %v487 = vpow.pop %v486
    %v488 = vsel %vm475, %v485, 0.0
    %489 = vadd.xlane.f32.xlu0 %v488
    %v490 = vpop.xlane.xlu0 %489
    %v491 = vsel %vm475, %v487, 0.0
    %492 = vadd.xlane.f32.xlu0 %v491
    %v493 = vpop.xlane.xlu0 %492
    %v494 = vrcp.pop %v490
    %v495 = vmul.f32 %v485, %v494
    %v496 = vrcp.pop %v493
    %v497 = vmul.f32 %v487, %v496
    %498 = vrot.lane.b32.xlu0 %v211, 64
    %v499 = vpop.permute.xlu0 %498
    %v502 = vsel %vm475, %v495, 0
    %504 = vmatprep.subr.mxu0 0.0
    %505 = vmatpush1.msra.mxu0 %v499
    %506 = vmatprep.subr.mxu0 0.0
    %507 = vmatpush1.msra.mxu0 0.0
    %508 = vmatprep.subr.mxu0 0.0
    %509 = vmatpush1.msra.mxu0 0.0
    %510 = vmatprep.subr.mxu0 0.0
    %511 = vmatpush1.msra.mxu0 0.0
    %512 = vmatprep.subr.mxu0 0.0
    %513 = vmatpush1.msra.mxu0 0.0
    %514 = vmatprep.subr.mxu0 0.0
    %515 = vmatpush1.msra.mxu0 0.0
    %516 = vmatprep.subr.mxu0 0.0
    %517 = vmatpush1.msra.mxu0 0.0
    %518 = vmatprep.subr.mxu0 0.0
    %519 = vmatpush1.msra.mxu0 0.0
    %520 = vmatprep.subr.mxu0 0.0
    %521 = vmatpush1.msra.mxu0 0.0
    %522 = vmatprep.subr.mxu0 0.0
    %523 = vmatpush1.msra.mxu0 0.0
    %524 = vmatprep.subr.mxu0 0.0
    %525 = vmatpush1.msra.mxu0 0.0
    %526 = vmatprep.subr.mxu0 0.0
    %527 = vmatpush1.msra.mxu0 0.0
    %528 = vmatprep.subr.mxu0 0.0
    %529 = vmatpush1.msra.mxu0 0.0
    %530 = vmatprep.subr.mxu0 0.0
    %531 = vmatpush1.msra.mxu0 0.0
    %532 = vmatprep.subr.mxu0 0.0
    %533 = vmatpush1.msra.mxu0 0.0
    %534 = vmatprep.subr.mxu0 0.0
    %535 = vmatpush1.msra.mxu0 0.0
    %536 = vmatprep.subr.mxu0 0.0
    %537 = vmatpush1.msra.mxu0 0.0
    %538 = vmatprep.subr.mxu0 0.0
    %539 = vmatpush1.msra.mxu0 0.0
    %540 = vmatprep.subr.mxu0 0.0
    %541 = vmatpush1.msra.mxu0 0.0
    %542 = vmatprep.subr.mxu0 0.0
    %543 = vmatpush1.msra.mxu0 0.0
    %544 = vmatprep.subr.mxu0 0.0
    %545 = vmatpush1.msra.mxu0 0.0
    %546 = vmatprep.subr.mxu0 0.0
    %547 = vmatpush1.msra.mxu0 0.0
    %548 = vmatprep.subr.mxu0 0.0
    %549 = vmatpush1.msra.mxu0 0.0
    %550 = vmatprep.subr.mxu0 0.0
    %551 = vmatpush1.msra.mxu0 0.0
    %552 = vmatprep.subr.mxu0 0.0
    %553 = vmatpush1.msra.mxu0 0.0
    %554 = vmatprep.subr.mxu0 0.0
    %555 = vmatpush1.msra.mxu0 0.0
    %556 = vmatprep.subr.mxu0 0.0
    %557 = vmatpush1.msra.mxu0 0.0
    %558 = vmatprep.subr.mxu0 0.0
    %559 = vmatpush1.msra.mxu0 0.0
    %560 = vmatprep.subr.mxu0 0.0
    %561 = vmatpush1.msra.mxu0 0.0
    %562 = vmatprep.subr.mxu0 0.0
    %563 = vmatpush1.msra.mxu0 0.0
    %564 = vmatprep.subr.mxu0 0.0
    %565 = vmatpush1.msra.mxu0 0.0
    %566 = vmatprep.subr.mxu0 0.0
    %567 = vmatpush1.msra.mxu0 0.0
    %568 = vmatprep.mubr.f32.mxu0 0.0
    %569 = vmatmul.mubr.f32.gmra.mrb[0].mxu0 %v502
    %v570 = vpop.f32.mrb[0].mxu0
    %v571 = vadd.f32 0.0, %v570
    %v572 = vpop.f32.mrb[0].mxu0
    %573 = vdwg.mxu0
    %574 = vrot.lane.b32.xlu0 %v216, 64
    %v575 = vpop.permute.xlu0 %574
    %v578 = vsel %vm475, %v497, 0
    %580 = vmatprep.subr.mxu0 0.0
    %581 = vmatpush1.msra.mxu0 %v575
    %582 = vmatprep.subr.mxu0 0.0
    %583 = vmatpush1.msra.mxu0 0.0
    %584 = vmatprep.subr.mxu0 0.0
    %585 = vmatpush1.msra.mxu0 0.0
    %586 = vmatprep.subr.mxu0 0.0
    %587 = vmatpush1.msra.mxu0 0.0
    %588 = vmatprep.subr.mxu0 0.0
    %589 = vmatpush1.msra.mxu0 0.0
    %590 = vmatprep.subr.mxu0 0.0
    %591 = vmatpush1.msra.mxu0 0.0
    %592 = vmatprep.subr.mxu0 0.0
    %593 = vmatpush1.msra.mxu0 0.0
    %594 = vmatprep.subr.mxu0 0.0
    %595 = vmatpush1.msra.mxu0 0.0
    %596 = vmatprep.subr.mxu0 0.0
    %597 = vmatpush1.msra.mxu0 0.0
    %598 = vmatprep.subr.mxu0 0.0
    %599 = vmatpush1.msra.mxu0 0.0
    %600 = vmatprep.subr.mxu0 0.0
    %601 = vmatpush1.msra.mxu0 0.0
    %602 = vmatprep.subr.mxu0 0.0
    %603 = vmatpush1.msra.mxu0 0.0
    %604 = vmatprep.subr.mxu0 0.0
    %605 = vmatpush1.msra.mxu0 0.0
    %606 = vmatprep.subr.mxu0 0.0
    %607 = vmatpush1.msra.mxu0 0.0
    %608 = vmatprep.subr.mxu0 0.0
    %609 = vmatpush1.msra.mxu0 0.0
    %610 = vmatprep.subr.mxu0 0.0
    %611 = vmatpush1.msra.mxu0 0.0
    %612 = vmatprep.subr.mxu0 0.0
    %613 = vmatpush1.msra.mxu0 0.0
    %614 = vmatprep.subr.mxu0 0.0
    %615 = vmatpush1.msra.mxu0 0.0
    %616 = vmatprep.subr.mxu0 0.0
    %617 = vmatpush1.msra.mxu0 0.0
    %618 = vmatprep.subr.mxu0 0.0
    %619 = vmatpush1.msra.mxu0 0.0
    %620 = vmatprep.subr.mxu0 0.0
    %621 = vmatpush1.msra.mxu0 0.0
    %622 = vmatprep.subr.mxu0 0.0
    %623 = vmatpush1.msra.mxu0 0.0
    %624 = vmatprep.subr.mxu0 0.0
    %625 = vmatpush1.msra.mxu0 0.0
    %626 = vmatprep.subr.mxu0 0.0
    %627 = vmatpush1.msra.mxu0 0.0
    %628 = vmatprep.subr.mxu0 0.0
    %629 = vmatpush1.msra.mxu0 0.0
    %630 = vmatprep.subr.mxu0 0.0
    %631 = vmatpush1.msra.mxu0 0.0
    %632 = vmatprep.subr.mxu0 0.0
    %633 = vmatpush1.msra.mxu0 0.0
    %634 = vmatprep.subr.mxu0 0.0
    %635 = vmatpush1.msra.mxu0 0.0
    %636 = vmatprep.subr.mxu0 0.0
    %637 = vmatpush1.msra.mxu0 0.0
    %638 = vmatprep.subr.mxu0 0.0
    %639 = vmatpush1.msra.mxu0 0.0
    %640 = vmatprep.subr.mxu0 0.0
    %641 = vmatpush1.msra.mxu0 0.0
    %642 = vmatprep.subr.mxu0 0.0
    %643 = vmatpush1.msra.mxu0 0.0
    %644 = vmatprep.mubr.f32.mxu0 0.0
    %645 = vmatmul.mubr.f32.gmra.mrb[0].mxu0 %v578
    %v646 = vpop.f32.mrb[0].mxu0
    %v647 = vadd.f32 0.0, %v646
    %v648 = vpop.f32.mrb[0].mxu0
    %649 = vdwg.mxu0
    %650 = vrot.lane.b32.xlu0 %v317, 124
    %v651 = vpop.permute.xlu0 %650
    %652 = vrot.lane.b32.xlu0 %v317, 92
    %v653 = vpop.permute.xlu0 %652
    %v654 = vsel %vm323, %v651, 0
    %v656 = vsel %vm323, %v653, 0
    %658 = vmatprep.subr.mxu0 0.0
    %659 = vmatpush1.xpose.msra.mxu0 %v656
    %660 = vmatprep.subr.mxu0 0.0
    %661 = vmatpush1.xpose.msra.mxu0 0.0
    %662 = vmatprep.subr.mxu0 0.0
    %663 = vmatpush1.xpose.msra.mxu0 0.0
    %664 = vmatprep.subr.mxu0 0.0
    %665 = vmatpush1.xpose.msra.mxu0 0.0
    %666 = vmatprep.subr.mxu0 0.0
    %667 = vmatpush1.xpose.msra.mxu0 0.0
    %668 = vmatprep.subr.mxu0 0.0
    %669 = vmatpush1.xpose.msra.mxu0 0.0
    %670 = vmatprep.subr.mxu0 0.0
    %671 = vmatpush1.xpose.msra.mxu0 0.0
    %672 = vmatprep.subr.mxu0 0.0
    %673 = vmatpush1.xpose.msra.mxu0 0.0
    %674 = vmatprep.subr.mxu0 0.0
    %675 = vmatpush1.xpose.msra.mxu0 0.0
    %676 = vmatprep.subr.mxu0 0.0
    %677 = vmatpush1.xpose.msra.mxu0 0.0
    %678 = vmatprep.subr.mxu0 0.0
    %679 = vmatpush1.xpose.msra.mxu0 0.0
    %680 = vmatprep.subr.mxu0 0.0
    %681 = vmatpush1.xpose.msra.mxu0 0.0
    %682 = vmatprep.subr.mxu0 0.0
    %683 = vmatpush1.xpose.msra.mxu0 0.0
    %684 = vmatprep.subr.mxu0 0.0
    %685 = vmatpush1.xpose.msra.mxu0 0.0
    %686 = vmatprep.subr.mxu0 0.0
    %687 = vmatpush1.xpose.msra.mxu0 0.0
    %688 = vmatprep.subr.mxu0 0.0
    %689 = vmatpush1.xpose.msra.mxu0 0.0
    %690 = vmatprep.subr.mxu0 0.0
    %691 = vmatpush1.xpose.msra.mxu0 0.0
    %692 = vmatprep.subr.mxu0 0.0
    %693 = vmatpush1.xpose.msra.mxu0 0.0
    %694 = vmatprep.subr.mxu0 0.0
    %695 = vmatpush1.xpose.msra.mxu0 0.0
    %696 = vmatprep.subr.mxu0 0.0
    %697 = vmatpush1.xpose.msra.mxu0 0.0
    %698 = vmatprep.subr.mxu0 0.0
    %699 = vmatpush1.xpose.msra.mxu0 0.0
    %700 = vmatprep.subr.mxu0 0.0
    %701 = vmatpush1.xpose.msra.mxu0 0.0
    %702 = vmatprep.subr.mxu0 0.0
    %703 = vmatpush1.xpose.msra.mxu0 0.0
    %704 = vmatprep.subr.mxu0 0.0
    %705 = vmatpush1.xpose.msra.mxu0 0.0
    %706 = vmatprep.subr.mxu0 0.0
    %707 = vmatpush1.xpose.msra.mxu0 0.0
    %708 = vmatprep.subr.mxu0 0.0
    %709 = vmatpush1.xpose.msra.mxu0 0.0
    %710 = vmatprep.subr.mxu0 0.0
    %711 = vmatpush1.xpose.msra.mxu0 0.0
    %712 = vmatprep.subr.mxu0 0.0
    %713 = vmatpush1.xpose.msra.mxu0 0.0
    %714 = vmatprep.subr.mxu0 0.0
    %715 = vmatpush1.xpose.msra.mxu0 0.0
    %716 = vmatprep.subr.mxu0 0.0
    %717 = vmatpush1.xpose.msra.mxu0 0.0
    %718 = vmatprep.subr.mxu0 0.0
    %719 = vmatpush1.xpose.msra.mxu0 0.0
    %720 = vmatprep.subr.mxu0 0.0
    %721 = vmatpush1.xpose.msra.mxu0 0.0
    %722 = vmatprep.mubr.f32.mxu0 0.0
    %723 = vmatmul.mubr.f32.gmra.mrb[0].mxu0 %v654
    %v724 = vpop.f32.mrb[0].mxu0
    %v725 = vadd.f32 %v319, %v724
    %v726 = vpop.f32.mrb[0].mxu0
    %727 = vdwg.mxu0
    %728 = vrot.lane.b32.xlu0 %v318, 124
    %v729 = vpop.permute.xlu0 %728
    %730 = vrot.lane.b32.xlu0 %v318, 92
    %v731 = vpop.permute.xlu0 %730
    %v732 = vsel %vm323, %v729, 0
    %v734 = vsel %vm323, %v731, 0
    %736 = vmatprep.subr.mxu0 0.0
    %737 = vmatpush1.xpose.msra.mxu0 %v734
    %738 = vmatprep.subr.mxu0 0.0
    %739 = vmatpush1.xpose.msra.mxu0 0.0
    %740 = vmatprep.subr.mxu0 0.0
    %741 = vmatpush1.xpose.msra.mxu0 0.0
    %742 = vmatprep.subr.mxu0 0.0
    %743 = vmatpush1.xpose.msra.mxu0 0.0
    %744 = vmatprep.subr.mxu0 0.0
    %745 = vmatpush1.xpose.msra.mxu0 0.0
    %746 = vmatprep.subr.mxu0 0.0
    %747 = vmatpush1.xpose.msra.mxu0 0.0
    %748 = vmatprep.subr.mxu0 0.0
    %749 = vmatpush1.xpose.msra.mxu0 0.0
    %750 = vmatprep.subr.mxu0 0.0
    %751 = vmatpush1.xpose.msra.mxu0 0.0
    %752 = vmatprep.subr.mxu0 0.0
    %753 = vmatpush1.xpose.msra.mxu0 0.0
    %754 = vmatprep.subr.mxu0 0.0
    %755 = vmatpush1.xpose.msra.mxu0 0.0
    %756 = vmatprep.subr.mxu0 0.0
    %757 = vmatpush1.xpose.msra.mxu0 0.0
    %758 = vmatprep.subr.mxu0 0.0
    %759 = vmatpush1.xpose.msra.mxu0 0.0
    %760 = vmatprep.subr.mxu0 0.0
    %761 = vmatpush1.xpose.msra.mxu0 0.0
    %762 = vmatprep.subr.mxu0 0.0
    %763 = vmatpush1.xpose.msra.mxu0 0.0
    %764 = vmatprep.subr.mxu0 0.0
    %765 = vmatpush1.xpose.msra.mxu0 0.0
    %766 = vmatprep.subr.mxu0 0.0
    %767 = vmatpush1.xpose.msra.mxu0 0.0
    %768 = vmatprep.subr.mxu0 0.0
    %769 = vmatpush1.xpose.msra.mxu0 0.0
    %770 = vmatprep.subr.mxu0 0.0
    %771 = vmatpush1.xpose.msra.mxu0 0.0
    %772 = vmatprep.subr.mxu0 0.0
    %773 = vmatpush1.xpose.msra.mxu0 0.0
    %774 = vmatprep.subr.mxu0 0.0
    %775 = vmatpush1.xpose.msra.mxu0 0.0
    %776 = vmatprep.subr.mxu0 0.0
    %777 = vmatpush1.xpose.msra.mxu0 0.0
    %778 = vmatprep.subr.mxu0 0.0
    %779 = vmatpush1.xpose.msra.mxu0 0.0
    %780 = vmatprep.subr.mxu0 0.0
    %781 = vmatpush1.xpose.msra.mxu0 0.0
    %782 = vmatprep.subr.mxu0 0.0
    %783 = vmatpush1.xpose.msra.mxu0 0.0
    %784 = vmatprep.subr.mxu0 0.0
    %785 = vmatpush1.xpose.msra.mxu0 0.0
    %786 = vmatprep.subr.mxu0 0.0
    %787 = vmatpush1.xpose.msra.mxu0 0.0
    %788 = vmatprep.subr.mxu0 0.0
    %789 = vmatpush1.xpose.msra.mxu0 0.0
    %790 = vmatprep.subr.mxu0 0.0
    %791 = vmatpush1.xpose.msra.mxu0 0.0
    %792 = vmatprep.subr.mxu0 0.0
    %793 = vmatpush1.xpose.msra.mxu0 0.0
    %794 = vmatprep.subr.mxu0 0.0
    %795 = vmatpush1.xpose.msra.mxu0 0.0
    %796 = vmatprep.subr.mxu0 0.0
    %797 = vmatpush1.xpose.msra.mxu0 0.0
    %798 = vmatprep.subr.mxu0 0.0
    %799 = vmatpush1.xpose.msra.mxu0 0.0
    %800 = vmatprep.mubr.f32.mxu0 0.0
    %801 = vmatmul.mubr.f32.gmra.mrb[0].mxu0 %v732
    %v802 = vpop.f32.mrb[0].mxu0
    %v803 = vadd.f32 %v319, %v802
    %v804 = vpop.f32.mrb[0].mxu0
    %805 = vdwg.mxu0
    %v806 = vsel %vm475, %v725, -inf
    %807 = vmax.xlane.f32.xlu0 %v806
    %v808 = vpop.xlane.xlu0 %807
    %v809 = vsel %vm475, %v803, -inf
    %810 = vmax.xlane.f32.xlu0 %v809
    %v811 = vpop.xlane.xlu0 %810
    %v812 = vsub.f32 %v725, %v808
    %v813 = vsub.f32 %v803, %v811
    %v814 = vmul.f32 %v812, 1.442695
    %v815 = vpow.pop %v814
    %v816 = vmul.f32 %v813, 1.442695
    %v817 = vpow.pop %v816
    %v818 = vsel %vm475, %v815, 0.0
    %819 = vadd.xlane.f32.xlu0 %v818
    %v820 = vpop.xlane.xlu0 %819
    %v821 = vsel %vm475, %v817, 0.0
    %822 = vadd.xlane.f32.xlu0 %v821
    %v823 = vpop.xlane.xlu0 %822
    %v824 = vrcp.pop %v820
    %v825 = vmul.f32 %v815, %v824
    %v826 = vrcp.pop %v823
    %v827 = vmul.f32 %v817, %v826
    %828 = vrot.lane.b32.xlu0 %v211, 60
    %v829 = vpop.permute.xlu0 %828
    %v832 = vsel %vm475, %v825, 0
    %834 = vmatprep.subr.mxu0 0.0
    %835 = vmatpush1.msra.mxu0 %v829
    %836 = vmatprep.subr.mxu0 0.0
    %837 = vmatpush1.msra.mxu0 0.0
    %838 = vmatprep.subr.mxu0 0.0
    %839 = vmatpush1.msra.mxu0 0.0
    %840 = vmatprep.subr.mxu0 0.0
    %841 = vmatpush1.msra.mxu0 0.0
    %842 = vmatprep.subr.mxu0 0.0
    %843 = vmatpush1.msra.mxu0 0.0
    %844 = vmatprep.subr.mxu0 0.0
    %845 = vmatpush1.msra.mxu0 0.0
    %846 = vmatprep.subr.mxu0 0.0
    %847 = vmatpush1.msra.mxu0 0.0
    %848 = vmatprep.subr.mxu0 0.0
    %849 = vmatpush1.msra.mxu0 0.0
    %850 = vmatprep.subr.mxu0 0.0
    %851 = vmatpush1.msra.mxu0 0.0
    %852 = vmatprep.subr.mxu0 0.0
    %853 = vmatpush1.msra.mxu0 0.0
    %854 = vmatprep.subr.mxu0 0.0
    %855 = vmatpush1.msra.mxu0 0.0
    %856 = vmatprep.subr.mxu0 0.0
    %857 = vmatpush1.msra.mxu0 0.0
    %858 = vmatprep.subr.mxu0 0.0
    %859 = vmatpush1.msra.mxu0 0.0
    %860 = vmatprep.subr.mxu0 0.0
    %861 = vmatpush1.msra.mxu0 0.0
    %862 = vmatprep.subr.mxu0 0.0
    %863 = vmatpush1.msra.mxu0 0.0
    %864 = vmatprep.subr.mxu0 0.0
    %865 = vmatpush1.msra.mxu0 0.0
    %866 = vmatprep.subr.mxu0 0.0
    %867 = vmatpush1.msra.mxu0 0.0
    %868 = vmatprep.subr.mxu0 0.0
    %869 = vmatpush1.msra.mxu0 0.0
    %870 = vmatprep.subr.mxu0 0.0
    %871 = vmatpush1.msra.mxu0 0.0
    %872 = vmatprep.subr.mxu0 0.0
    %873 = vmatpush1.msra.mxu0 0.0
    %874 = vmatprep.subr.mxu0 0.0
    %875 = vmatpush1.msra.mxu0 0.0
    %876 = vmatprep.subr.mxu0 0.0
    %877 = vmatpush1.msra.mxu0 0.0
    %878 = vmatprep.subr.mxu0 0.0
    %879 = vmatpush1.msra.mxu0 0.0
    %880 = vmatprep.subr.mxu0 0.0
    %881 = vmatpush1.msra.mxu0 0.0
    %882 = vmatprep.subr.mxu0 0.0
    %883 = vmatpush1.msra.mxu0 0.0
    %884 = vmatprep.subr.mxu0 0.0
    %885 = vmatpush1.msra.mxu0 0.0
    %886 = vmatprep.subr.mxu0 0.0
    %887 = vmatpush1.msra.mxu0 0.0
    %888 = vmatprep.subr.mxu0 0.0
    %889 = vmatpush1.msra.mxu0 0.0
    %890 = vmatprep.subr.mxu0 0.0
    %891 = vmatpush1.msra.mxu0 0.0
    %892 = vmatprep.subr.mxu0 0.0
    %893 = vmatpush1.msra.mxu0 0.0
    %894 = vmatprep.subr.mxu0 0.0
    %895 = vmatpush1.msra.mxu0 0.0
    %896 = vmatprep.subr.mxu0 0.0
    %897 = vmatpush1.msra.mxu0 0.0
    %898 = vmatprep.mubr.f32.mxu0 0.0
    %899 = vmatmul.mubr.f32.gmra.mrb[0].mxu0 %v832
    %v900 = vpop.f32.mrb[0].mxu0
    %v901 = vadd.f32 0.0, %v900
    %v902 = vpop.f32.mrb[0].mxu0
    %903 = vdwg.mxu0
    %904 = vrot.lane.b32.xlu0 %v216, 60
    %v905 = vpop.permute.xlu0 %904
    %v908 = vsel %vm475, %v827, 0
    %910 = vmatprep.subr.mxu0 0.0
    %911 = vmatpush1.msra.mxu0 %v905
    %912 = vmatprep.subr.mxu0 0.0
    %913 = vmatpush1.msra.mxu0 0.0
    %914 = vmatprep.subr.mxu0 0.0
    %915 = vmatpush1.msra.mxu0 0.0
    %916 = vmatprep.subr.mxu0 0.0
    %917 = vmatpush1.msra.mxu0 0.0
    %918 = vmatprep.subr.mxu0 0.0
    %919 = vmatpush1.msra.mxu0 0.0
    %920 = vmatprep.subr.mxu0 0.0
    %921 = vmatpush1.msra.mxu0 0.0
    %922 = vmatprep.subr.mxu0 0.0
    %923 = vmatpush1.msra.mxu0 0.0
    %924 = vmatprep.subr.mxu0 0.0
    %925 = vmatpush1.msra.mxu0 0.0
    %926 = vmatprep.subr.mxu0 0.0
    %927 = vmatpush1.msra.mxu0 0.0
    %928 = vmatprep.subr.mxu0 0.0
    %929 = vmatpush1.msra.mxu0 0.0
    %930 = vmatprep.subr.mxu0 0.0
    %931 = vmatpush1.msra.mxu0 0.0
    %932 = vmatprep.subr.mxu0 0.0
    %933 = vmatpush1.msra.mxu0 0.0
    %934 = vmatprep.subr.mxu0 0.0
    %935 = vmatpush1.msra.mxu0 0.0
    %936 = vmatprep.subr.mxu0 0.0
    %937 = vmatpush1.msra.mxu0 0.0
    %938 = vmatprep.subr.mxu0 0.0
    %939 = vmatpush1.msra.mxu0 0.0
    %940 = vmatprep.subr.mxu0 0.0
    %941 = vmatpush1.msra.mxu0 0.0
    %942 = vmatprep.subr.mxu0 0.0
    %943 = vmatpush1.msra.mxu0 0.0
    %944 = vmatprep.subr.mxu0 0.0
    %945 = vmatpush1.msra.mxu0 0.0
    %946 = vmatprep.subr.mxu0 0.0
    %947 = vmatpush1.msra.mxu0 0.0
    %948 = vmatprep.subr.mxu0 0.0
    %949 = vmatpush1.msra.mxu0 0.0
    %950 = vmatprep.subr.mxu0 0.0
    %951 = vmatpush1.msra.mxu0 0.0
    %952 = vmatprep.subr.mxu0 0.0
    %953 = vmatpush1.msra.mxu0 0.0
    %954 = vmatprep.subr.mxu0 0.0
    %955 = vmatpush1.msra.mxu0 0.0
    %956 = vmatprep.subr.mxu0 0.0
    %957 = vmatpush1.msra.mxu0 0.0
    %958 = vmatprep.subr.mxu0 0.0
    %959 = vmatpush1.msra.mxu0 0.0
    %960 = vmatprep.subr.mxu0 0.0
    %961 = vmatpush1.msra.mxu0 0.0
    %962 = vmatprep.subr.mxu0 0.0
    %963 = vmatpush1.msra.mxu0 0.0
    %964 = vmatprep.subr.mxu0 0.0
    %965 = vmatpush1.msra.mxu0 0.0
    %966 = vmatprep.subr.mxu0 0.0
    %967 = vmatpush1.msra.mxu0 0.0
    %968 = vmatprep.subr.mxu0 0.0
    %969 = vmatpush1.msra.mxu0 0.0
    %970 = vmatprep.subr.mxu0 0.0
    %971 = vmatpush1.msra.mxu0 0.0
    %972 = vmatprep.subr.mxu0 0.0
    %973 = vmatpush1.msra.mxu0 0.0
    %974 = vmatprep.mubr.f32.mxu0 0.0
    %975 = vmatmul.mubr.f32.gmra.mrb[0].mxu0 %v908
    %v976 = vpop.f32.mrb[0].mxu0
    %v977 = vadd.f32 0.0, %v976
    %v978 = vpop.f32.mrb[0].mxu0
    %979 = vdwg.mxu0
    %980 = vrot.lane.b32.xlu0 %v317, 120
    %v981 = vpop.permute.xlu0 %980
    %982 = vrot.lane.b32.xlu0 %v317, 88
    %v983 = vpop.permute.xlu0 %982
    %v984 = vsel %vm323, %v981, 0
    %v986 = vsel %vm323, %v983, 0
    %988 = vmatprep.subr.mxu0 0.0
    %989 = vmatpush1.xpose.msra.mxu0 %v986
    %990 = vmatprep.subr.mxu0 0.0
    %991 = vmatpush1.xpose.msra.mxu0 0.0
    %992 = vmatprep.subr.mxu0 0.0
    %993 = vmatpush1.xpose.msra.mxu0 0.0
    %994 = vmatprep.subr.mxu0 0.0
    %995 = vmatpush1.xpose.msra.mxu0 0.0
    %996 = vmatprep.subr.mxu0 0.0
    %997 = vmatpush1.xpose.msra.mxu0 0.0
    %998 = vmatprep.subr.mxu0 0.0
    %999 = vmatpush1.xpose.msra.mxu0 0.0
    %1000 = vmatprep.subr.mxu0 0.0
    %1001 = vmatpush1.xpose.msra.mxu0 0.0
    %1002 = vmatprep.subr.mxu0 0.0
    %1003 = vmatpush1.xpose.msra.mxu0 0.0
    %1004 = vmatprep.subr.mxu0 0.0
    %1005 = vmatpush1.xpose.msra.mxu0 0.0
    %1006 = vmatprep.subr.mxu0 0.0
    %1007 = vmatpush1.xpose.msra.mxu0 0.0
    %1008 = vmatprep.subr.mxu0 0.0
    %1009 = vmatpush1.xpose.msra.mxu0 0.0
    %1010 = vmatprep.subr.mxu0 0.0
    %1011 = vmatpush1.xpose.msra.mxu0 0.0
    %1012 = vmatprep.subr.mxu0 0.0
    %1013 = vmatpush1.xpose.msra.mxu0 0.0
    %1014 = vmatprep.subr.mxu0 0.0
    %1015 = vmatpush1.xpose.msra.mxu0 0.0
    %1016 = vmatprep.subr.mxu0 0.0
    %1017 = vmatpush1.xpose.msra.mxu0 0.0
    %1018 = vmatprep.subr.mxu0 0.0
    %1019 = vmatpush1.xpose.msra.mxu0 0.0
    %1020 = vmatprep.subr.mxu0 0.0
    %1021 = vmatpush1.xpose.msra.mxu0 0.0
    %1022 = vmatprep.subr.mxu0 0.0
    %1023 = vmatpush1.xpose.msra.mxu0 0.0
    %1024 = vmatprep.subr.mxu0 0.0
    %1025 = vmatpush1.xpose.msra.mxu0 0.0
    %1026 = vmatprep.subr.mxu0 0.0
    %1027 = vmatpush1.xpose.msra.mxu0 0.0
    %1028 = vmatprep.subr.mxu0 0.0
    %1029 = vmatpush1.xpose.msra.mxu0 0.0
    %1030 = vmatprep.subr.mxu0 0.0
    %1031 = vmatpush1.xpose.msra.mxu0 0.0
    %1032 = vmatprep.subr.mxu0 0.0
    %1033 = vmatpush1.xpose.msra.mxu0 0.0
    %1034 = vmatprep.subr.mxu0 0.0
    %1035 = vmatpush1.xpose.msra.mxu0 0.0
    %1036 = vmatprep.subr.mxu0 0.0
    %1037 = vmatpush1.xpose.msra.mxu0 0.0
    %1038 = vmatprep.subr.mxu0 0.0
    %1039 = vmatpush1.xpose.msra.mxu0 0.0
    %1040 = vmatprep.subr.mxu0 0.0
    %1041 = vmatpush1.xpose.msra.mxu0 0.0
    %1042 = vmatprep.subr.mxu0 0.0
    %1043 = vmatpush1.xpose.msra.mxu0 0.0
    %1044 = vmatprep.subr.mxu0 0.0
    %1045 = vmatpush1.xpose.msra.mxu0 0.0
    %1046 = vmatprep.subr.mxu0 0.0
    %1047 = vmatpush1.xpose.msra.mxu0 0.0
    %1048 = vmatprep.subr.mxu0 0.0
    %1049 = vmatpush1.xpose.msra.mxu0 0.0
    %1050 = vmatprep.subr.mxu0 0.0
    %1051 = vmatpush1.xpose.msra.mxu0 0.0
    %1052 = vmatprep.mubr.f32.mxu0 0.0
    %1053 = vmatmul.mubr.f32.gmra.mrb[0].mxu0 %v984
    %v1054 = vpop.f32.mrb[0].mxu0
    %v1055 = vadd.f32 %v319, %v1054
    %v1056 = vpop.f32.mrb[0].mxu0
    %1057 = vdwg.mxu0
    %1058 = vrot.lane.b32.xlu0 %v318, 120
    %v1059 = vpop.permute.xlu0 %1058
    %1060 = vrot.lane.b32.xlu0 %v318, 88
    %v1061 = vpop.permute.xlu0 %1060
    %v1062 = vsel %vm323, %v1059, 0
    %v1064 = vsel %vm323, %v1061, 0
    %1066 = vmatprep.subr.mxu0 0.0
    %1067 = vmatpush1.xpose.msra.mxu0 %v1064
    %1068 = vmatprep.subr.mxu0 0.0
    %1069 = vmatpush1.xpose.msra.mxu0 0.0
    %1070 = vmatprep.subr.mxu0 0.0
    %1071 = vmatpush1.xpose.msra.mxu0 0.0
    %1072 = vmatprep.subr.mxu0 0.0
    %1073 = vmatpush1.xpose.msra.mxu0 0.0
    %1074 = vmatprep.subr.mxu0 0.0
    %1075 = vmatpush1.xpose.msra.mxu0 0.0
    %1076 = vmatprep.subr.mxu0 0.0
    %1077 = vmatpush1.xpose.msra.mxu0 0.0
    %1078 = vmatprep.subr.mxu0 0.0
    %1079 = vmatpush1.xpose.msra.mxu0 0.0
    %1080 = vmatprep.subr.mxu0 0.0
    %1081 = vmatpush1.xpose.msra.mxu0 0.0
    %1082 = vmatprep.subr.mxu0 0.0
    %1083 = vmatpush1.xpose.msra.mxu0 0.0
    %1084 = vmatprep.subr.mxu0 0.0
    %1085 = vmatpush1.xpose.msra.mxu0 0.0
    %1086 = vmatprep.subr.mxu0 0.0
    %1087 = vmatpush1.xpose.msra.mxu0 0.0
    %1088 = vmatprep.subr.mxu0 0.0
    %1089 = vmatpush1.xpose.msra.mxu0 0.0
    %1090 = vmatprep.subr.mxu0 0.0
    %1091 = vmatpush1.xpose.msra.mxu0 0.0
    %1092 = vmatprep.subr.mxu0 0.0
    %1093 = vmatpush1.xpose.msra.mxu0 0.0
    %1094 = vmatprep.subr.mxu0 0.0
    %1095 = vmatpush1.xpose.msra.mxu0 0.0
    %1096 = vmatprep.subr.mxu0 0.0
    %1097 = vmatpush1.xpose.msra.mxu0 0.0
    %1098 = vmatprep.subr.mxu0 0.0
    %1099 = vmatpush1.xpose.msra.mxu0 0.0
    %1100 = vmatprep.subr.mxu0 0.0
    %1101 = vmatpush1.xpose.msra.mxu0 0.0
    %1102 = vmatprep.subr.mxu0 0.0
    %1103 = vmatpush1.xpose.msra.mxu0 0.0
    %1104 = vmatprep.subr.mxu0 0.0
    %1105 = vmatpush1.xpose.msra.mxu0 0.0
    %1106 = vmatprep.subr.mxu0 0.0
    %1107 = vmatpush1.xpose.msra.mxu0 0.0
    %1108 = vmatprep.subr.mxu0 0.0
    %1109 = vmatpush1.xpose.msra.mxu0 0.0
    %1110 = vmatprep.subr.mxu0 0.0
    %1111 = vmatpush1.xpose.msra.mxu0 0.0
    %1112 = vmatprep.subr.mxu0 0.0
    %1113 = vmatpush1.xpose.msra.mxu0 0.0
    %1114 = vmatprep.subr.mxu0 0.0
    %1115 = vmatpush1.xpose.msra.mxu0 0.0
    %1116 = vmatprep.subr.mxu0 0.0
    %1117 = vmatpush1.xpose.msra.mxu0 0.0
    %1118 = vmatprep.subr.mxu0 0.0
    %1119 = vmatpush1.xpose.msra.mxu0 0.0
    %1120 = vmatprep.subr.mxu0 0.0
    %1121 = vmatpush1.xpose.msra.mxu0 0.0
    %1122 = vmatprep.subr.mxu0 0.0
    %1123 = vmatpush1.xpose.msra.mxu0 0.0
    %1124 = vmatprep.subr.mxu0 0.0
    %1125 = vmatpush1.xpose.msra.mxu0 0.0
    %1126 = vmatprep.subr.mxu0 0.0
    %1127 = vmatpush1.xpose.msra.mxu0 0.0
    %1128 = vmatprep.subr.mxu0 0.0
    %1129 = vmatpush1.xpose.msra.mxu0 0.0
    %1130 = vmatprep.mubr.f32.mxu0 0.0
    %1131 = vmatmul.mubr.f32.gmra.mrb[0].mxu0 %v1062
    %v1132 = vpop.f32.mrb[0].mxu0
    %v1133 = vadd.f32 %v319, %v1132
    %v1134 = vpop.f32.mrb[0].mxu0
    %1135 = vdwg.mxu0
    %v1136 = vsel %vm475, %v1055, -inf
    %1137 = vmax.xlane.f32.xlu0 %v1136
    %v1138 = vpop.xlane.xlu0 %1137
    %v1139 = vsel %vm475, %v1133, -inf
    %1140 = vmax.xlane.f32.xlu0 %v1139
    %v1141 = vpop.xlane.xlu0 %1140
    %v1142 = vsub.f32 %v1055, %v1138
    %v1143 = vsub.f32 %v1133, %v1141
    %v1144 = vmul.f32 %v1142, 1.442695
    %v1145 = vpow.pop %v1144
    %v1146 = vmul.f32 %v1143, 1.442695
    %v1147 = vpow.pop %v1146
    %v1148 = vsel %vm475, %v1145, 0.0
    %1149 = vadd.xlane.f32.xlu0 %v1148
    %v1150 = vpop.xlane.xlu0 %1149
    %v1151 = vsel %vm475, %v1147, 0.0
    %1152 = vadd.xlane.f32.xlu0 %v1151
    %v1153 = vpop.xlane.xlu0 %1152
    %v1154 = vrcp.pop %v1150
    %v1155 = vmul.f32 %v1145, %v1154
    %v1156 = vrcp.pop %v1153
    %v1157 = vmul.f32 %v1147, %v1156
    %1158 = vrot.lane.b32.xlu0 %v211, 56
    %v1159 = vpop.permute.xlu0 %1158
    %v1162 = vsel %vm475, %v1155, 0
    %1164 = vmatprep.subr.mxu0 0.0
    %1165 = vmatpush1.msra.mxu0 %v1159
    %1166 = vmatprep.subr.mxu0 0.0
    %1167 = vmatpush1.msra.mxu0 0.0
    %1168 = vmatprep.subr.mxu0 0.0
    %1169 = vmatpush1.msra.mxu0 0.0
    %1170 = vmatprep.subr.mxu0 0.0
    %1171 = vmatpush1.msra.mxu0 0.0
    %1172 = vmatprep.subr.mxu0 0.0
    %1173 = vmatpush1.msra.mxu0 0.0
    %1174 = vmatprep.subr.mxu0 0.0
    %1175 = vmatpush1.msra.mxu0 0.0
    %1176 = vmatprep.subr.mxu0 0.0
    %1177 = vmatpush1.msra.mxu0 0.0
    %1178 = vmatprep.subr.mxu0 0.0
    %1179 = vmatpush1.msra.mxu0 0.0
    %1180 = vmatprep.subr.mxu0 0.0
    %1181 = vmatpush1.msra.mxu0 0.0
    %1182 = vmatprep.subr.mxu0 0.0
    %1183 = vmatpush1.msra.mxu0 0.0
    %1184 = vmatprep.subr.mxu0 0.0
    %1185 = vmatpush1.msra.mxu0 0.0
    %1186 = vmatprep.subr.mxu0 0.0
    %1187 = vmatpush1.msra.mxu0 0.0
    %1188 = vmatprep.subr.mxu0 0.0
    %1189 = vmatpush1.msra.mxu0 0.0
    %1190 = vmatprep.subr.mxu0 0.0
    %1191 = vmatpush1.msra.mxu0 0.0
    %1192 = vmatprep.subr.mxu0 0.0
    %1193 = vmatpush1.msra.mxu0 0.0
    %1194 = vmatprep.subr.mxu0 0.0
    %1195 = vmatpush1.msra.mxu0 0.0
    %1196 = vmatprep.subr.mxu0 0.0
    %1197 = vmatpush1.msra.mxu0 0.0
    %1198 = vmatprep.subr.mxu0 0.0
    %1199 = vmatpush1.msra.mxu0 0.0
    %1200 = vmatprep.subr.mxu0 0.0
    %1201 = vmatpush1.msra.mxu0 0.0
    %1202 = vmatprep.subr.mxu0 0.0
    %1203 = vmatpush1.msra.mxu0 0.0
    %1204 = vmatprep.subr.mxu0 0.0
    %1205 = vmatpush1.msra.mxu0 0.0
    %1206 = vmatprep.subr.mxu0 0.0
    %1207 = vmatpush1.msra.mxu0 0.0
    %1208 = vmatprep.subr.mxu0 0.0
    %1209 = vmatpush1.msra.mxu0 0.0
    %1210 = vmatprep.subr.mxu0 0.0
    %1211 = vmatpush1.msra.mxu0 0.0
    %1212 = vmatprep.subr.mxu0 0.0
    %1213 = vmatpush1.msra.mxu0 0.0
    %1214 = vmatprep.subr.mxu0 0.0
    %1215 = vmatpush1.msra.mxu0 0.0
    %1216 = vmatprep.subr.mxu0 0.0
    %1217 = vmatpush1.msra.mxu0 0.0
    %1218 = vmatprep.subr.mxu0 0.0
    %1219 = vmatpush1.msra.mxu0 0.0
    %1220 = vmatprep.subr.mxu0 0.0
    %1221 = vmatpush1.msra.mxu0 0.0
    %1222 = vmatprep.subr.mxu0 0.0
    %1223 = vmatpush1.msra.mxu0 0.0
    %1224 = vmatprep.subr.mxu0 0.0
    %1225 = vmatpush1.msra.mxu0 0.0
    %1226 = vmatprep.subr.mxu0 0.0
    %1227 = vmatpush1.msra.mxu0 0.0
    %1228 = vmatprep.mubr.f32.mxu0 0.0
    %1229 = vmatmul.mubr.f32.gmra.mrb[0].mxu0 %v1162
    %v1230 = vpop.f32.mrb[0].mxu0
    %v1231 = vadd.f32 0.0, %v1230
    %v1232 = vpop.f32.mrb[0].mxu0
    %1233 = vdwg.mxu0
    %1234 = vrot.lane.b32.xlu0 %v216, 56
    %v1235 = vpop.permute.xlu0 %1234
    %v1238 = vsel %vm475, %v1157, 0
    %1240 = vmatprep.subr.mxu0 0.0
    %1241 = vmatpush1.msra.mxu0 %v1235
    %1242 = vmatprep.subr.mxu0 0.0
    %1243 = vmatpush1.msra.mxu0 0.0
    %1244 = vmatprep.subr.mxu0 0.0
    %1245 = vmatpush1.msra.mxu0 0.0
    %1246 = vmatprep.subr.mxu0 0.0
    %1247 = vmatpush1.msra.mxu0 0.0
    %1248 = vmatprep.subr.mxu0 0.0
    %1249 = vmatpush1.msra.mxu0 0.0
    %1250 = vmatprep.subr.mxu0 0.0
    %1251 = vmatpush1.msra.mxu0 0.0
    %1252 = vmatprep.subr.mxu0 0.0
    %1253 = vmatpush1.msra.mxu0 0.0
    %1254 = vmatprep.subr.mxu0 0.0
    %1255 = vmatpush1.msra.mxu0 0.0
    %1256 = vmatprep.subr.mxu0 0.0
    %1257 = vmatpush1.msra.mxu0 0.0
    %1258 = vmatprep.subr.mxu0 0.0
    %1259 = vmatpush1.msra.mxu0 0.0
    %1260 = vmatprep.subr.mxu0 0.0
    %1261 = vmatpush1.msra.mxu0 0.0
    %1262 = vmatprep.subr.mxu0 0.0
    %1263 = vmatpush1.msra.mxu0 0.0
    %1264 = vmatprep.subr.mxu0 0.0
    %1265 = vmatpush1.msra.mxu0 0.0
    %1266 = vmatprep.subr.mxu0 0.0
    %1267 = vmatpush1.msra.mxu0 0.0
    %1268 = vmatprep.subr.mxu0 0.0
    %1269 = vmatpush1.msra.mxu0 0.0
    %1270 = vmatprep.subr.mxu0 0.0
    %1271 = vmatpush1.msra.mxu0 0.0
    %1272 = vmatprep.subr.mxu0 0.0
    %1273 = vmatpush1.msra.mxu0 0.0
    %1274 = vmatprep.subr.mxu0 0.0
    %1275 = vmatpush1.msra.mxu0 0.0
    %1276 = vmatprep.subr.mxu0 0.0
    %1277 = vmatpush1.msra.mxu0 0.0
    %1278 = vmatprep.subr.mxu0 0.0
    %1279 = vmatpush1.msra.mxu0 0.0
    %1280 = vmatprep.subr.mxu0 0.0
    %1281 = vmatpush1.msra.mxu0 0.0
    %1282 = vmatprep.subr.mxu0 0.0
    %1283 = vmatpush1.msra.mxu0 0.0
    %1284 = vmatprep.subr.mxu0 0.0
    %1285 = vmatpush1.msra.mxu0 0.0
    %1286 = vmatprep.subr.mxu0 0.0
    %1287 = vmatpush1.msra.mxu0 0.0
    %1288 = vmatprep.subr.mxu0 0.0
    %1289 = vmatpush1.msra.mxu0 0.0
    %1290 = vmatprep.subr.mxu0 0.0
    %1291 = vmatpush1.msra.mxu0 0.0
    %1292 = vmatprep.subr.mxu0 0.0
    %1293 = vmatpush1.msra.mxu0 0.0
    %1294 = vmatprep.subr.mxu0 0.0
    %1295 = vmatpush1.msra.mxu0 0.0
    %1296 = vmatprep.subr.mxu0 0.0
    %1297 = vmatpush1.msra.mxu0 0.0
    %1298 = vmatprep.subr.mxu0 0.0
    %1299 = vmatpush1.msra.mxu0 0.0
    %1300 = vmatprep.subr.mxu0 0.0
    %1301 = vmatpush1.msra.mxu0 0.0
    %1302 = vmatprep.subr.mxu0 0.0
    %1303 = vmatpush1.msra.mxu0 0.0
    %1304 = vmatprep.mubr.f32.mxu0 0.0
    %1305 = vmatmul.mubr.f32.gmra.mrb[0].mxu0 %v1238
    %v1306 = vpop.f32.mrb[0].mxu0
    %v1307 = vadd.f32 0.0, %v1306
    %v1308 = vpop.f32.mrb[0].mxu0
    %1309 = vdwg.mxu0
    %1310 = vrot.lane.b32.xlu0 %v317, 116
    %v1311 = vpop.permute.xlu0 %1310
    %1312 = vrot.lane.b32.xlu0 %v317, 84
    %v1313 = vpop.permute.xlu0 %1312
    %v1314 = vsel %vm323, %v1311, 0
    %v1316 = vsel %vm323, %v1313, 0
    %1318 = vmatprep.subr.mxu0 0.0
    %1319 = vmatpush1.xpose.msra.mxu0 %v1316
    %1320 = vmatprep.subr.mxu0 0.0
    %1321 = vmatpush1.xpose.msra.mxu0 0.0
    %1322 = vmatprep.subr.mxu0 0.0
    %1323 = vmatpush1.xpose.msra.mxu0 0.0
    %1324 = vmatprep.subr.mxu0 0.0
    %1325 = vmatpush1.xpose.msra.mxu0 0.0
    %1326 = vmatprep.subr.mxu0 0.0
    %1327 = vmatpush1.xpose.msra.mxu0 0.0
    %1328 = vmatprep.subr.mxu0 0.0
    %1329 = vmatpush1.xpose.msra.mxu0 0.0
    %1330 = vmatprep.subr.mxu0 0.0
    %1331 = vmatpush1.xpose.msra.mxu0 0.0
    %1332 = vmatprep.subr.mxu0 0.0
    %1333 = vmatpush1.xpose.msra.mxu0 0.0
    %1334 = vmatprep.subr.mxu0 0.0
    %1335 = vmatpush1.xpose.msra.mxu0 0.0
    %1336 = vmatprep.subr.mxu0 0.0
    %1337 = vmatpush1.xpose.msra.mxu0 0.0
    %1338 = vmatprep.subr.mxu0 0.0
    %1339 = vmatpush1.xpose.msra.mxu0 0.0
    %1340 = vmatprep.subr.mxu0 0.0
    %1341 = vmatpush1.xpose.msra.mxu0 0.0
    %1342 = vmatprep.subr.mxu0 0.0
    %1343 = vmatpush1.xpose.msra.mxu0 0.0
    %1344 = vmatprep.subr.mxu0 0.0
    %1345 = vmatpush1.xpose.msra.mxu0 0.0
    %1346 = vmatprep.subr.mxu0 0.0
    %1347 = vmatpush1.xpose.msra.mxu0 0.0
    %1348 = vmatprep.subr.mxu0 0.0
    %1349 = vmatpush1.xpose.msra.mxu0 0.0
    %1350 = vmatprep.subr.mxu0 0.0
    %1351 = vmatpush1.xpose.msra.mxu0 0.0
    %1352 = vmatprep.subr.mxu0 0.0
    %1353 = vmatpush1.xpose.msra.mxu0 0.0
    %1354 = vmatprep.subr.mxu0 0.0
    %1355 = vmatpush1.xpose.msra.mxu0 0.0
    %1356 = vmatprep.subr.mxu0 0.0
    %1357 = vmatpush1.xpose.msra.mxu0 0.0
    %1358 = vmatprep.subr.mxu0 0.0
    %1359 = vmatpush1.xpose.msra.mxu0 0.0
    %1360 = vmatprep.subr.mxu0 0.0
    %1361 = vmatpush1.xpose.msra.mxu0 0.0
    %1362 = vmatprep.subr.mxu0 0.0
    %1363 = vmatpush1.xpose.msra.mxu0 0.0
    %1364 = vmatprep.subr.mxu0 0.0
    %1365 = vmatpush1.xpose.msra.mxu0 0.0
    %1366 = vmatprep.subr.mxu0 0.0
    %1367 = vmatpush1.xpose.msra.mxu0 0.0
    %1368 = vmatprep.subr.mxu0 0.0
    %1369 = vmatpush1.xpose.msra.mxu0 0.0
    %1370 = vmatprep.subr.mxu0 0.0
    %1371 = vmatpush1.xpose.msra.mxu0 0.0
    %1372 = vmatprep.subr.mxu0 0.0
    %1373 = vmatpush1.xpose.msra.mxu0 0.0
    %1374 = vmatprep.subr.mxu0 0.0
    %1375 = vmatpush1.xpose.msra.mxu0 0.0
    %1376 = vmatprep.subr.mxu0 0.0
    %1377 = vmatpush1.xpose.msra.mxu0 0.0
    %1378 = vmatprep.subr.mxu0 0.0
    %1379 = vmatpush1.xpose.msra.mxu0 0.0
    %1380 = vmatprep.subr.mxu0 0.0
    %1381 = vmatpush1.xpose.msra.mxu0 0.0
    %1382 = vmatprep.mubr.f32.mxu0 0.0
    %1383 = vmatmul.mubr.f32.gmra.mrb[0].mxu0 %v1314
    %v1384 = vpop.f32.mrb[0].mxu0
    %v1385 = vadd.f32 %v319, %v1384
    %v1386 = vpop.f32.mrb[0].mxu0
    %1387 = vdwg.mxu0
    %1388 = vrot.lane.b32.xlu0 %v318, 116
    %v1389 = vpop.permute.xlu0 %1388
    %1390 = vrot.lane.b32.xlu0 %v318, 84
    %v1391 = vpop.permute.xlu0 %1390
    %v1392 = vsel %vm323, %v1389, 0
    %v1394 = vsel %vm323, %v1391, 0
    %1396 = vmatprep.subr.mxu0 0.0
    %1397 = vmatpush1.xpose.msra.mxu0 %v1394
    %1398 = vmatprep.subr.mxu0 0.0
    %1399 = vmatpush1.xpose.msra.mxu0 0.0
    %1400 = vmatprep.subr.mxu0 0.0
    %1401 = vmatpush1.xpose.msra.mxu0 0.0
    %1402 = vmatprep.subr.mxu0 0.0
    %1403 = vmatpush1.xpose.msra.mxu0 0.0
    %1404 = vmatprep.subr.mxu0 0.0
    %1405 = vmatpush1.xpose.msra.mxu0 0.0
    %1406 = vmatprep.subr.mxu0 0.0
    %1407 = vmatpush1.xpose.msra.mxu0 0.0
    %1408 = vmatprep.subr.mxu0 0.0
    %1409 = vmatpush1.xpose.msra.mxu0 0.0
    %1410 = vmatprep.subr.mxu0 0.0
    %1411 = vmatpush1.xpose.msra.mxu0 0.0
    %1412 = vmatprep.subr.mxu0 0.0
    %1413 = vmatpush1.xpose.msra.mxu0 0.0
    %1414 = vmatprep.subr.mxu0 0.0
    %1415 = vmatpush1.xpose.msra.mxu0 0.0
    %1416 = vmatprep.subr.mxu0 0.0
    %1417 = vmatpush1.xpose.msra.mxu0 0.0
    %1418 = vmatprep.subr.mxu0 0.0
    %1419 = vmatpush1.xpose.msra.mxu0 0.0
    %1420 = vmatprep.subr.mxu0 0.0
    %1421 = vmatpush1.xpose.msra.mxu0 0.0
    %1422 = vmatprep.subr.mxu0 0.0
    %1423 = vmatpush1.xpose.msra.mxu0 0.0
    %1424 = vmatprep.subr.mxu0 0.0
    %1425 = vmatpush1.xpose.msra.mxu0 0.0
    %1426 = vmatprep.subr.mxu0 0.0
    %1427 = vmatpush1.xpose.msra.mxu0 0.0
    %1428 = vmatprep.subr.mxu0 0.0
    %1429 = vmatpush1.xpose.msra.mxu0 0.0
    %1430 = vmatprep.subr.mxu0 0.0
    %1431 = vmatpush1.xpose.msra.mxu0 0.0
    %1432 = vmatprep.subr.mxu0 0.0
    %1433 = vmatpush1.xpose.msra.mxu0 0.0
    %1434 = vmatprep.subr.mxu0 0.0
    %1435 = vmatpush1.xpose.msra.mxu0 0.0
    %1436 = vmatprep.subr.mxu0 0.0
    %1437 = vmatpush1.xpose.msra.mxu0 0.0
    %1438 = vmatprep.subr.mxu0 0.0
    %1439 = vmatpush1.xpose.msra.mxu0 0.0
    %1440 = vmatprep.subr.mxu0 0.0
    %1441 = vmatpush1.xpose.msra.mxu0 0.0
    %1442 = vmatprep.subr.mxu0 0.0
    %1443 = vmatpush1.xpose.msra.mxu0 0.0
    %1444 = vmatprep.subr.mxu0 0.0
    %1445 = vmatpush1.xpose.msra.mxu0 0.0
    %1446 = vmatprep.subr.mxu0 0.0
    %1447 = vmatpush1.xpose.msra.mxu0 0.0
    %1448 = vmatprep.subr.mxu0 0.0
    %1449 = vmatpush1.xpose.msra.mxu0 0.0
    %1450 = vmatprep.subr.mxu0 0.0
    %1451 = vmatpush1.xpose.msra.mxu0 0.0
    %1452 = vmatprep.subr.mxu0 0.0
    %1453 = vmatpush1.xpose.msra.mxu0 0.0
    %1454 = vmatprep.subr.mxu0 0.0
    %1455 = vmatpush1.xpose.msra.mxu0 0.0
    %1456 = vmatprep.subr.mxu0 0.0
    %1457 = vmatpush1.xpose.msra.mxu0 0.0
    %1458 = vmatprep.subr.mxu0 0.0
    %1459 = vmatpush1.xpose.msra.mxu0 0.0
    %1460 = vmatprep.mubr.f32.mxu0 0.0
    %1461 = vmatmul.mubr.f32.gmra.mrb[0].mxu0 %v1392
    %v1462 = vpop.f32.mrb[0].mxu0
    %v1463 = vadd.f32 %v319, %v1462
    %v1464 = vpop.f32.mrb[0].mxu0
    %1465 = vdwg.mxu0
    %v1466 = vsel %vm475, %v1385, -inf
    %1467 = vmax.xlane.f32.xlu0 %v1466
    %v1468 = vpop.xlane.xlu0 %1467
    %v1469 = vsel %vm475, %v1463, -inf
    %1470 = vmax.xlane.f32.xlu0 %v1469
    %v1471 = vpop.xlane.xlu0 %1470
    %v1472 = vsub.f32 %v1385, %v1468
    %v1473 = vsub.f32 %v1463, %v1471
    %v1474 = vmul.f32 %v1472, 1.442695
    %v1475 = vpow.pop %v1474
    %v1476 = vmul.f32 %v1473, 1.442695
    %v1477 = vpow.pop %v1476
    %v1478 = vsel %vm475, %v1475, 0.0
    %1479 = vadd.xlane.f32.xlu0 %v1478
    %v1480 = vpop.xlane.xlu0 %1479
    %v1481 = vsel %vm475, %v1477, 0.0
    %1482 = vadd.xlane.f32.xlu0 %v1481
    %v1483 = vpop.xlane.xlu0 %1482
    %v1484 = vrcp.pop %v1480
    %v1485 = vmul.f32 %v1475, %v1484
    %v1486 = vrcp.pop %v1483
    %v1487 = vmul.f32 %v1477, %v1486
    %1488 = vrot.lane.b32.xlu0 %v211, 52
    %v1489 = vpop.permute.xlu0 %1488
    %v1492 = vsel %vm475, %v1485, 0
    %1494 = vmatprep.subr.mxu0 0.0
    %1495 = vmatpush1.msra.mxu0 %v1489
    %1496 = vmatprep.subr.mxu0 0.0
    %1497 = vmatpush1.msra.mxu0 0.0
    %1498 = vmatprep.subr.mxu0 0.0
    %1499 = vmatpush1.msra.mxu0 0.0
    %1500 = vmatprep.subr.mxu0 0.0
    %1501 = vmatpush1.msra.mxu0 0.0
    %1502 = vmatprep.subr.mxu0 0.0
    %1503 = vmatpush1.msra.mxu0 0.0
    %1504 = vmatprep.subr.mxu0 0.0
    %1505 = vmatpush1.msra.mxu0 0.0
    %1506 = vmatprep.subr.mxu0 0.0
    %1507 = vmatpush1.msra.mxu0 0.0
    %1508 = vmatprep.subr.mxu0 0.0
    %1509 = vmatpush1.msra.mxu0 0.0
    %1510 = vmatprep.subr.mxu0 0.0
    %1511 = vmatpush1.msra.mxu0 0.0
    %1512 = vmatprep.subr.mxu0 0.0
    %1513 = vmatpush1.msra.mxu0 0.0
    %1514 = vmatprep.subr.mxu0 0.0
    %1515 = vmatpush1.msra.mxu0 0.0
    %1516 = vmatprep.subr.mxu0 0.0
    %1517 = vmatpush1.msra.mxu0 0.0
    %1518 = vmatprep.subr.mxu0 0.0
    %1519 = vmatpush1.msra.mxu0 0.0
    %1520 = vmatprep.subr.mxu0 0.0
    %1521 = vmatpush1.msra.mxu0 0.0
    %1522 = vmatprep.subr.mxu0 0.0
    %1523 = vmatpush1.msra.mxu0 0.0
    %1524 = vmatprep.subr.mxu0 0.0
    %1525 = vmatpush1.msra.mxu0 0.0
    %1526 = vmatprep.subr.mxu0 0.0
    %1527 = vmatpush1.msra.mxu0 0.0
    %1528 = vmatprep.subr.mxu0 0.0
    %1529 = vmatpush1.msra.mxu0 0.0
    %1530 = vmatprep.subr.mxu0 0.0
    %1531 = vmatpush1.msra.mxu0 0.0
    %1532 = vmatprep.subr.mxu0 0.0
    %1533 = vmatpush1.msra.mxu0 0.0
    %1534 = vmatprep.subr.mxu0 0.0
    %1535 = vmatpush1.msra.mxu0 0.0
    %1536 = vmatprep.subr.mxu0 0.0
    %1537 = vmatpush1.msra.mxu0 0.0
    %1538 = vmatprep.subr.mxu0 0.0
    %1539 = vmatpush1.msra.mxu0 0.0
    %1540 = vmatprep.subr.mxu0 0.0
    %1541 = vmatpush1.msra.mxu0 0.0
    %1542 = vmatprep.subr.mxu0 0.0
    %1543 = vmatpush1.msra.mxu0 0.0
    %1544 = vmatprep.subr.mxu0 0.0
    %1545 = vmatpush1.msra.mxu0 0.0
    %1546 = vmatprep.subr.mxu0 0.0
    %1547 = vmatpush1.msra.mxu0 0.0
    %1548 = vmatprep.subr.mxu0 0.0
    %1549 = vmatpush1.msra.mxu0 0.0
    %1550 = vmatprep.subr.mxu0 0.0
    %1551 = vmatpush1.msra.mxu0 0.0
    %1552 = vmatprep.subr.mxu0 0.0
    %1553 = vmatpush1.msra.mxu0 0.0
    %1554 = vmatprep.subr.mxu0 0.0
    %1555 = vmatpush1.msra.mxu0 0.0
    %1556 = vmatprep.subr.mxu0 0.0
    %1557 = vmatpush1.msra.mxu0 0.0
    %1558 = vmatprep.mubr.f32.mxu0 0.0
    %1559 = vmatmul.mubr.f32.gmra.mrb[0].mxu0 %v1492
    %v1560 = vpop.f32.mrb[0].mxu0
    %v1561 = vadd.f32 0.0, %v1560
    %v1562 = vpop.f32.mrb[0].mxu0
    %1563 = vdwg.mxu0
    %1564 = vrot.lane.b32.xlu0 %v216, 52
    %v1565 = vpop.permute.xlu0 %1564
    %v1568 = vsel %vm475, %v1487, 0
    %1570 = vmatprep.subr.mxu0 0.0
    %1571 = vmatpush1.msra.mxu0 %v1565
    %1572 = vmatprep.subr.mxu0 0.0
    %1573 = vmatpush1.msra.mxu0 0.0
    %1574 = vmatprep.subr.mxu0 0.0
    %1575 = vmatpush1.msra.mxu0 0.0
    %1576 = vmatprep.subr.mxu0 0.0
    %1577 = vmatpush1.msra.mxu0 0.0
    %1578 = vmatprep.subr.mxu0 0.0
    %1579 = vmatpush1.msra.mxu0 0.0
    %1580 = vmatprep.subr.mxu0 0.0
    %1581 = vmatpush1.msra.mxu0 0.0
    %1582 = vmatprep.subr.mxu0 0.0
    %1583 = vmatpush1.msra.mxu0 0.0
    %1584 = vmatprep.subr.mxu0 0.0
    %1585 = vmatpush1.msra.mxu0 0.0
    %1586 = vmatprep.subr.mxu0 0.0
    %1587 = vmatpush1.msra.mxu0 0.0
    %1588 = vmatprep.subr.mxu0 0.0
    %1589 = vmatpush1.msra.mxu0 0.0
    %1590 = vmatprep.subr.mxu0 0.0
    %1591 = vmatpush1.msra.mxu0 0.0
    %1592 = vmatprep.subr.mxu0 0.0
    %1593 = vmatpush1.msra.mxu0 0.0
    %1594 = vmatprep.subr.mxu0 0.0
    %1595 = vmatpush1.msra.mxu0 0.0
    %1596 = vmatprep.subr.mxu0 0.0
    %1597 = vmatpush1.msra.mxu0 0.0
    %1598 = vmatprep.subr.mxu0 0.0
    %1599 = vmatpush1.msra.mxu0 0.0
    %1600 = vmatprep.subr.mxu0 0.0
    %1601 = vmatpush1.msra.mxu0 0.0
    %1602 = vmatprep.subr.mxu0 0.0
    %1603 = vmatpush1.msra.mxu0 0.0
    %1604 = vmatprep.subr.mxu0 0.0
    %1605 = vmatpush1.msra.mxu0 0.0
    %1606 = vmatprep.subr.mxu0 0.0
    %1607 = vmatpush1.msra.mxu0 0.0
    %1608 = vmatprep.subr.mxu0 0.0
    %1609 = vmatpush1.msra.mxu0 0.0
    %1610 = vmatprep.subr.mxu0 0.0
    %1611 = vmatpush1.msra.mxu0 0.0
    %1612 = vmatprep.subr.mxu0 0.0
    %1613 = vmatpush1.msra.mxu0 0.0
    %1614 = vmatprep.subr.mxu0 0.0
    %1615 = vmatpush1.msra.mxu0 0.0
    %1616 = vmatprep.subr.mxu0 0.0
    %1617 = vmatpush1.msra.mxu0 0.0
    %1618 = vmatprep.subr.mxu0 0.0
    %1619 = vmatpush1.msra.mxu0 0.0
    %1620 = vmatprep.subr.mxu0 0.0
    %1621 = vmatpush1.msra.mxu0 0.0
    %1622 = vmatprep.subr.mxu0 0.0
    %1623 = vmatpush1.msra.mxu0 0.0
    %1624 = vmatprep.subr.mxu0 0.0
    %1625 = vmatpush1.msra.mxu0 0.0
    %1626 = vmatprep.subr.mxu0 0.0
    %1627 = vmatpush1.msra.mxu0 0.0
    %1628 = vmatprep.subr.mxu0 0.0
    %1629 = vmatpush1.msra.mxu0 0.0
    %1630 = vmatprep.subr.mxu0 0.0
    %1631 = vmatpush1.msra.mxu0 0.0
    %1632 = vmatprep.subr.mxu0 0.0
    %1633 = vmatpush1.msra.mxu0 0.0
    %1634 = vmatprep.mubr.f32.mxu0 0.0
    %1635 = vmatmul.mubr.f32.gmra.mrb[0].mxu0 %v1568
    %v1636 = vpop.f32.mrb[0].mxu0
    %v1637 = vadd.f32 0.0, %v1636
    %v1638 = vpop.f32.mrb[0].mxu0
    %1639 = vdwg.mxu0
    %1640 = vrot.lane.b32.xlu0 %v317, 112
    %v1641 = vpop.permute.xlu0 %1640
    %1642 = vrot.lane.b32.xlu0 %v317, 80
    %v1643 = vpop.permute.xlu0 %1642
    %v1644 = vsel %vm323, %v1641, 0
    %v1646 = vsel %vm323, %v1643, 0
    %1648 = vmatprep.subr.mxu0 0.0
    %1649 = vmatpush1.xpose.msra.mxu0 %v1646
    %1650 = vmatprep.subr.mxu0 0.0
    %1651 = vmatpush1.xpose.msra.mxu0 0.0
    %1652 = vmatprep.subr.mxu0 0.0
    %1653 = vmatpush1.xpose.msra.mxu0 0.0
    %1654 = vmatprep.subr.mxu0 0.0
    %1655 = vmatpush1.xpose.msra.mxu0 0.0
    %1656 = vmatprep.subr.mxu0 0.0
    %1657 = vmatpush1.xpose.msra.mxu0 0.0
    %1658 = vmatprep.subr.mxu0 0.0
    %1659 = vmatpush1.xpose.msra.mxu0 0.0
    %1660 = vmatprep.subr.mxu0 0.0
    %1661 = vmatpush1.xpose.msra.mxu0 0.0
    %1662 = vmatprep.subr.mxu0 0.0
    %1663 = vmatpush1.xpose.msra.mxu0 0.0
    %1664 = vmatprep.subr.mxu0 0.0
    %1665 = vmatpush1.xpose.msra.mxu0 0.0
    %1666 = vmatprep.subr.mxu0 0.0
    %1667 = vmatpush1.xpose.msra.mxu0 0.0
    %1668 = vmatprep.subr.mxu0 0.0
    %1669 = vmatpush1.xpose.msra.mxu0 0.0
    %1670 = vmatprep.subr.mxu0 0.0
    %1671 = vmatpush1.xpose.msra.mxu0 0.0
    %1672 = vmatprep.subr.mxu0 0.0
    %1673 = vmatpush1.xpose.msra.mxu0 0.0
    %1674 = vmatprep.subr.mxu0 0.0
    %1675 = vmatpush1.xpose.msra.mxu0 0.0
    %1676 = vmatprep.subr.mxu0 0.0
    %1677 = vmatpush1.xpose.msra.mxu0 0.0
    %1678 = vmatprep.subr.mxu0 0.0
    %1679 = vmatpush1.xpose.msra.mxu0 0.0
    %1680 = vmatprep.subr.mxu0 0.0
    %1681 = vmatpush1.xpose.msra.mxu0 0.0
    %1682 = vmatprep.subr.mxu0 0.0
    %1683 = vmatpush1.xpose.msra.mxu0 0.0
    %1684 = vmatprep.subr.mxu0 0.0
    %1685 = vmatpush1.xpose.msra.mxu0 0.0
    %1686 = vmatprep.subr.mxu0 0.0
    %1687 = vmatpush1.xpose.msra.mxu0 0.0
    %1688 = vmatprep.subr.mxu0 0.0
    %1689 = vmatpush1.xpose.msra.mxu0 0.0
    %1690 = vmatprep.subr.mxu0 0.0
    %1691 = vmatpush1.xpose.msra.mxu0 0.0
    %1692 = vmatprep.subr.mxu0 0.0
    %1693 = vmatpush1.xpose.msra.mxu0 0.0
    %1694 = vmatprep.subr.mxu0 0.0
    %1695 = vmatpush1.xpose.msra.mxu0 0.0
    %1696 = vmatprep.subr.mxu0 0.0
    %1697 = vmatpush1.xpose.msra.mxu0 0.0
    %1698 = vmatprep.subr.mxu0 0.0
    %1699 = vmatpush1.xpose.msra.mxu0 0.0
    %1700 = vmatprep.subr.mxu0 0.0
    %1701 = vmatpush1.xpose.msra.mxu0 0.0
    %1702 = vmatprep.subr.mxu0 0.0
    %1703 = vmatpush1.xpose.msra.mxu0 0.0
    %1704 = vmatprep.subr.mxu0 0.0
    %1705 = vmatpush1.xpose.msra.mxu0 0.0
    %1706 = vmatprep.subr.mxu0 0.0
    %1707 = vmatpush1.xpose.msra.mxu0 0.0
    %1708 = vmatprep.subr.mxu0 0.0
    %1709 = vmatpush1.xpose.msra.mxu0 0.0
    %1710 = vmatprep.subr.mxu0 0.0
    %1711 = vmatpush1.xpose.msra.mxu0 0.0
    %1712 = vmatprep.mubr.f32.mxu0 0.0
    %1713 = vmatmul.mubr.f32.gmra.mrb[0].mxu0 %v1644
    %v1714 = vpop.f32.mrb[0].mxu0
    %v1715 = vadd.f32 %v319, %v1714
    %v1716 = vpop.f32.mrb[0].mxu0
    %1717 = vdwg.mxu0
    %1718 = vrot.lane.b32.xlu0 %v318, 112
    %v1719 = vpop.permute.xlu0 %1718
    %1720 = vrot.lane.b32.xlu0 %v318, 80
    %v1721 = vpop.permute.xlu0 %1720
    %v1722 = vsel %vm323, %v1719, 0
    %v1724 = vsel %vm323, %v1721, 0
    %1726 = vmatprep.subr.mxu0 0.0
    %1727 = vmatpush1.xpose.msra.mxu0 %v1724
    %1728 = vmatprep.subr.mxu0 0.0
    %1729 = vmatpush1.xpose.msra.mxu0 0.0
    %1730 = vmatprep.subr.mxu0 0.0
    %1731 = vmatpush1.xpose.msra.mxu0 0.0
    %1732 = vmatprep.subr.mxu0 0.0
    %1733 = vmatpush1.xpose.msra.mxu0 0.0
    %1734 = vmatprep.subr.mxu0 0.0
    %1735 = vmatpush1.xpose.msra.mxu0 0.0
    %1736 = vmatprep.subr.mxu0 0.0
    %1737 = vmatpush1.xpose.msra.mxu0 0.0
    %1738 = vmatprep.subr.mxu0 0.0
    %1739 = vmatpush1.xpose.msra.mxu0 0.0
    %1740 = vmatprep.subr.mxu0 0.0
    %1741 = vmatpush1.xpose.msra.mxu0 0.0
    %1742 = vmatprep.subr.mxu0 0.0
    %1743 = vmatpush1.xpose.msra.mxu0 0.0
    %1744 = vmatprep.subr.mxu0 0.0
    %1745 = vmatpush1.xpose.msra.mxu0 0.0
    %1746 = vmatprep.subr.mxu0 0.0
    %1747 = vmatpush1.xpose.msra.mxu0 0.0
    %1748 = vmatprep.subr.mxu0 0.0
    %1749 = vmatpush1.xpose.msra.mxu0 0.0
    %1750 = vmatprep.subr.mxu0 0.0
    %1751 = vmatpush1.xpose.msra.mxu0 0.0
    %1752 = vmatprep.subr.mxu0 0.0
    %1753 = vmatpush1.xpose.msra.mxu0 0.0
    %1754 = vmatprep.subr.mxu0 0.0
    %1755 = vmatpush1.xpose.msra.mxu0 0.0
    %1756 = vmatprep.subr.mxu0 0.0
    %1757 = vmatpush1.xpose.msra.mxu0 0.0
    %1758 = vmatprep.subr.mxu0 0.0
    %1759 = vmatpush1.xpose.msra.mxu0 0.0
    %1760 = vmatprep.subr.mxu0 0.0
    %1761 = vmatpush1.xpose.msra.mxu0 0.0
    %1762 = vmatprep.subr.mxu0 0.0
    %1763 = vmatpush1.xpose.msra.mxu0 0.0
    %1764 = vmatprep.subr.mxu0 0.0
    %1765 = vmatpush1.xpose.msra.mxu0 0.0
    %1766 = vmatprep.subr.mxu0 0.0
    %1767 = vmatpush1.xpose.msra.mxu0 0.0
    %1768 = vmatprep.subr.mxu0 0.0
    %1769 = vmatpush1.xpose.msra.mxu0 0.0
    %1770 = vmatprep.subr.mxu0 0.0
    %1771 = vmatpush1.xpose.msra.mxu0 0.0
    %1772 = vmatprep.subr.mxu0 0.0
    %1773 = vmatpush1.xpose.msra.mxu0 0.0
    %1774 = vmatprep.subr.mxu0 0.0
    %1775 = vmatpush1.xpose.msra.mxu0 0.0
    %1776 = vmatprep.subr.mxu0 0.0
    %1777 = vmatpush1.xpose.msra.mxu0 0.0
    %1778 = vmatprep.subr.mxu0 0.0
    %1779 = vmatpush1.xpose.msra.mxu0 0.0
    %1780 = vmatprep.subr.mxu0 0.0
    %1781 = vmatpush1.xpose.msra.mxu0 0.0
    %1782 = vmatprep.subr.mxu0 0.0
    %1783 = vmatpush1.xpose.msra.mxu0 0.0
    %1784 = vmatprep.subr.mxu0 0.0
    %1785 = vmatpush1.xpose.msra.mxu0 0.0
    %1786 = vmatprep.subr.mxu0 0.0
    %1787 = vmatpush1.xpose.msra.mxu0 0.0
    %1788 = vmatprep.subr.mxu0 0.0
    %1789 = vmatpush1.xpose.msra.mxu0 0.0
    %1790 = vmatprep.mubr.f32.mxu0 0.0
    %1791 = vmatmul.mubr.f32.gmra.mrb[0].mxu0 %v1722
    %v1792 = vpop.f32.mrb[0].mxu0
    %v1793 = vadd.f32 %v319, %v1792
    %v1794 = vpop.f32.mrb[0].mxu0
    %1795 = vdwg.mxu0
    %v1796 = vsel %vm475, %v1715, -inf
    %1797 = vmax.xlane.f32.xlu0 %v1796
    %v1798 = vpop.xlane.xlu0 %1797
    %v1799 = vsel %vm475, %v1793, -inf
    %1800 = vmax.xlane.f32.xlu0 %v1799
    %v1801 = vpop.xlane.xlu0 %1800
    %v1802 = vsub.f32 %v1715, %v1798
    %v1803 = vsub.f32 %v1793, %v1801
    %v1804 = vmul.f32 %v1802, 1.442695
    %v1805 = vpow.pop %v1804
    %v1806 = vmul.f32 %v1803, 1.442695
    %v1807 = vpow.pop %v1806
    %v1808 = vsel %vm475, %v1805, 0.0
    %1809 = vadd.xlane.f32.xlu0 %v1808
    %v1810 = vpop.xlane.xlu0 %1809
    %v1811 = vsel %vm475, %v1807, 0.0
    %1812 = vadd.xlane.f32.xlu0 %v1811
    %v1813 = vpop.xlane.xlu0 %1812
    %v1814 = vrcp.pop %v1810
    %v1815 = vmul.f32 %v1805, %v1814
    %v1816 = vrcp.pop %v1813
    %v1817 = vmul.f32 %v1807, %v1816
    %1818 = vrot.lane.b32.xlu0 %v211, 48
    %v1819 = vpop.permute.xlu0 %1818
    %v1822 = vsel %vm475, %v1815, 0
    %1824 = vmatprep.subr.mxu0 0.0
    %1825 = vmatpush1.msra.mxu0 %v1819
    %1826 = vmatprep.subr.mxu0 0.0
    %1827 = vmatpush1.msra.mxu0 0.0
    %1828 = vmatprep.subr.mxu0 0.0
    %1829 = vmatpush1.msra.mxu0 0.0
    %1830 = vmatprep.subr.mxu0 0.0
    %1831 = vmatpush1.msra.mxu0 0.0
    %1832 = vmatprep.subr.mxu0 0.0
    %1833 = vmatpush1.msra.mxu0 0.0
    %1834 = vmatprep.subr.mxu0 0.0
    %1835 = vmatpush1.msra.mxu0 0.0
    %1836 = vmatprep.subr.mxu0 0.0
    %1837 = vmatpush1.msra.mxu0 0.0
    %1838 = vmatprep.subr.mxu0 0.0
    %1839 = vmatpush1.msra.mxu0 0.0
    %1840 = vmatprep.subr.mxu0 0.0
    %1841 = vmatpush1.msra.mxu0 0.0
    %1842 = vmatprep.subr.mxu0 0.0
    %1843 = vmatpush1.msra.mxu0 0.0
    %1844 = vmatprep.subr.mxu0 0.0
    %1845 = vmatpush1.msra.mxu0 0.0
    %1846 = vmatprep.subr.mxu0 0.0
    %1847 = vmatpush1.msra.mxu0 0.0
    %1848 = vmatprep.subr.mxu0 0.0
    %1849 = vmatpush1.msra.mxu0 0.0
    %1850 = vmatprep.subr.mxu0 0.0
    %1851 = vmatpush1.msra.mxu0 0.0
    %1852 = vmatprep.subr.mxu0 0.0
    %1853 = vmatpush1.msra.mxu0 0.0
    %1854 = vmatprep.subr.mxu0 0.0
    %1855 = vmatpush1.msra.mxu0 0.0
    %1856 = vmatprep.subr.mxu0 0.0
    %1857 = vmatpush1.msra.mxu0 0.0
    %1858 = vmatprep.subr.mxu0 0.0
    %1859 = vmatpush1.msra.mxu0 0.0
    %1860 = vmatprep.subr.mxu0 0.0
    %1861 = vmatpush1.msra.mxu0 0.0
    %1862 = vmatprep.subr.mxu0 0.0
    %1863 = vmatpush1.msra.mxu0 0.0
    %1864 = vmatprep.subr.mxu0 0.0
    %1865 = vmatpush1.msra.mxu0 0.0
    %1866 = vmatprep.subr.mxu0 0.0
    %1867 = vmatpush1.msra.mxu0 0.0
    %1868 = vmatprep.subr.mxu0 0.0
    %1869 = vmatpush1.msra.mxu0 0.0
    %1870 = vmatprep.subr.mxu0 0.0
    %1871 = vmatpush1.msra.mxu0 0.0
    %1872 = vmatprep.subr.mxu0 0.0
    %1873 = vmatpush1.msra.mxu0 0.0
    %1874 = vmatprep.subr.mxu0 0.0
    %1875 = vmatpush1.msra.mxu0 0.0
    %1876 = vmatprep.subr.mxu0 0.0
    %1877 = vmatpush1.msra.mxu0 0.0
    %1878 = vmatprep.subr.mxu0 0.0
    %1879 = vmatpush1.msra.mxu0 0.0
    %1880 = vmatprep.subr.mxu0 0.0
    %1881 = vmatpush1.msra.mxu0 0.0
    %1882 = vmatprep.subr.mxu0 0.0
    %1883 = vmatpush1.msra.mxu0 0.0
    %1884 = vmatprep.subr.mxu0 0.0
    %1885 = vmatpush1.msra.mxu0 0.0
    %1886 = vmatprep.subr.mxu0 0.0
    %1887 = vmatpush1.msra.mxu0 0.0
    %1888 = vmatprep.mubr.f32.mxu0 0.0
    %1889 = vmatmul.mubr.f32.gmra.mrb[0].mxu0 %v1822
    %v1890 = vpop.f32.mrb[0].mxu0
    %v1891 = vadd.f32 0.0, %v1890
    %v1892 = vpop.f32.mrb[0].mxu0
    %1893 = vdwg.mxu0
    %1894 = vrot.lane.b32.xlu0 %v216, 48
    %v1895 = vpop.permute.xlu0 %1894
    %v1898 = vsel %vm475, %v1817, 0
    %1900 = vmatprep.subr.mxu0 0.0
    %1901 = vmatpush1.msra.mxu0 %v1895
    %1902 = vmatprep.subr.mxu0 0.0
    %1903 = vmatpush1.msra.mxu0 0.0
    %1904 = vmatprep.subr.mxu0 0.0
    %1905 = vmatpush1.msra.mxu0 0.0
    %1906 = vmatprep.subr.mxu0 0.0
    %1907 = vmatpush1.msra.mxu0 0.0
    %1908 = vmatprep.subr.mxu0 0.0
    %1909 = vmatpush1.msra.mxu0 0.0
    %1910 = vmatprep.subr.mxu0 0.0
    %1911 = vmatpush1.msra.mxu0 0.0
    %1912 = vmatprep.subr.mxu0 0.0
    %1913 = vmatpush1.msra.mxu0 0.0
    %1914 = vmatprep.subr.mxu0 0.0
    %1915 = vmatpush1.msra.mxu0 0.0
    %1916 = vmatprep.subr.mxu0 0.0
    %1917 = vmatpush1.msra.mxu0 0.0
    %1918 = vmatprep.subr.mxu0 0.0
    %1919 = vmatpush1.msra.mxu0 0.0
    %1920 = vmatprep.subr.mxu0 0.0
    %1921 = vmatpush1.msra.mxu0 0.0
    %1922 = vmatprep.subr.mxu0 0.0
    %1923 = vmatpush1.msra.mxu0 0.0
    %1924 = vmatprep.subr.mxu0 0.0
    %1925 = vmatpush1.msra.mxu0 0.0
    %1926 = vmatprep.subr.mxu0 0.0
    %1927 = vmatpush1.msra.mxu0 0.0
    %1928 = vmatprep.subr.mxu0 0.0
    %1929 = vmatpush1.msra.mxu0 0.0
    %1930 = vmatprep.subr.mxu0 0.0
    %1931 = vmatpush1.msra.mxu0 0.0
    %1932 = vmatprep.subr.mxu0 0.0
    %1933 = vmatpush1.msra.mxu0 0.0
    %1934 = vmatprep.subr.mxu0 0.0
    %1935 = vmatpush1.msra.mxu0 0.0
    %1936 = vmatprep.subr.mxu0 0.0
    %1937 = vmatpush1.msra.mxu0 0.0
    %1938 = vmatprep.subr.mxu0 0.0
    %1939 = vmatpush1.msra.mxu0 0.0
    %1940 = vmatprep.subr.mxu0 0.0
    %1941 = vmatpush1.msra.mxu0 0.0
    %1942 = vmatprep.subr.mxu0 0.0
    %1943 = vmatpush1.msra.mxu0 0.0
    %1944 = vmatprep.subr.mxu0 0.0
    %1945 = vmatpush1.msra.mxu0 0.0
    %1946 = vmatprep.subr.mxu0 0.0
    %1947 = vmatpush1.msra.mxu0 0.0
    %1948 = vmatprep.subr.mxu0 0.0
    %1949 = vmatpush1.msra.mxu0 0.0
    %1950 = vmatprep.subr.mxu0 0.0
    %1951 = vmatpush1.msra.mxu0 0.0
    %1952 = vmatprep.subr.mxu0 0.0
    %1953 = vmatpush1.msra.mxu0 0.0
    %1954 = vmatprep.subr.mxu0 0.0
    %1955 = vmatpush1.msra.mxu0 0.0
    %1956 = vmatprep.subr.mxu0 0.0
    %1957 = vmatpush1.msra.mxu0 0.0
    %1958 = vmatprep.subr.mxu0 0.0
    %1959 = vmatpush1.msra.mxu0 0.0
    %1960 = vmatprep.subr.mxu0 0.0
    %1961 = vmatpush1.msra.mxu0 0.0
    %1962 = vmatprep.subr.mxu0 0.0
    %1963 = vmatpush1.msra.mxu0 0.0
    %1964 = vmatprep.mubr.f32.mxu0 0.0
    %1965 = vmatmul.mubr.f32.gmra.mrb[0].mxu0 %v1898
    %v1966 = vpop.f32.mrb[0].mxu0
    %v1967 = vadd.f32 0.0, %v1966
    %v1968 = vpop.f32.mrb[0].mxu0
    %1969 = vdwg.mxu0
    %1970 = vrot.lane.b32.xlu0 %v317, 108
    %v1971 = vpop.permute.xlu0 %1970
    %1972 = vrot.lane.b32.xlu0 %v317, 76
    %v1973 = vpop.permute.xlu0 %1972
    %v1974 = vsel %vm323, %v1971, 0
    %v1976 = vsel %vm323, %v1973, 0
    %1978 = vmatprep.subr.mxu0 0.0
    %1979 = vmatpush1.xpose.msra.mxu0 %v1976
    %1980 = vmatprep.subr.mxu0 0.0
    %1981 = vmatpush1.xpose.msra.mxu0 0.0
    %1982 = vmatprep.subr.mxu0 0.0
    %1983 = vmatpush1.xpose.msra.mxu0 0.0
    %1984 = vmatprep.subr.mxu0 0.0
    %1985 = vmatpush1.xpose.msra.mxu0 0.0
    %1986 = vmatprep.subr.mxu0 0.0
    %1987 = vmatpush1.xpose.msra.mxu0 0.0
    %1988 = vmatprep.subr.mxu0 0.0
    %1989 = vmatpush1.xpose.msra.mxu0 0.0
    %1990 = vmatprep.subr.mxu0 0.0
    %1991 = vmatpush1.xpose.msra.mxu0 0.0
    %1992 = vmatprep.subr.mxu0 0.0
    %1993 = vmatpush1.xpose.msra.mxu0 0.0
    %1994 = vmatprep.subr.mxu0 0.0
    %1995 = vmatpush1.xpose.msra.mxu0 0.0
    %1996 = vmatprep.subr.mxu0 0.0
    %1997 = vmatpush1.xpose.msra.mxu0 0.0
    %1998 = vmatprep.subr.mxu0 0.0
    %1999 = vmatpush1.xpose.msra.mxu0 0.0
    %2000 = vmatprep.subr.mxu0 0.0
    %2001 = vmatpush1.xpose.msra.mxu0 0.0
    %2002 = vmatprep.subr.mxu0 0.0
    %2003 = vmatpush1.xpose.msra.mxu0 0.0
    %2004 = vmatprep.subr.mxu0 0.0
    %2005 = vmatpush1.xpose.msra.mxu0 0.0
    %2006 = vmatprep.subr.mxu0 0.0
    %2007 = vmatpush1.xpose.msra.mxu0 0.0
    %2008 = vmatprep.subr.mxu0 0.0
    %2009 = vmatpush1.xpose.msra.mxu0 0.0
    %2010 = vmatprep.subr.mxu0 0.0
    %2011 = vmatpush1.xpose.msra.mxu0 0.0
    %2012 = vmatprep.subr.mxu0 0.0
    %2013 = vmatpush1.xpose.msra.mxu0 0.0
    %2014 = vmatprep.subr.mxu0 0.0
    %2015 = vmatpush1.xpose.msra.mxu0 0.0
    %2016 = vmatprep.subr.mxu0 0.0
    %2017 = vmatpush1.xpose.msra.mxu0 0.0
    %2018 = vmatprep.subr.mxu0 0.0
    %2019 = vmatpush1.xpose.msra.mxu0 0.0
    %2020 = vmatprep.subr.mxu0 0.0
    %2021 = vmatpush1.xpose.msra.mxu0 0.0
    %2022 = vmatprep.subr.mxu0 0.0
    %2023 = vmatpush1.xpose.msra.mxu0 0.0
    %2024 = vmatprep.subr.mxu0 0.0
    %2025 = vmatpush1.xpose.msra.mxu0 0.0
    %2026 = vmatprep.subr.mxu0 0.0
    %2027 = vmatpush1.xpose.msra.mxu0 0.0
    %2028 = vmatprep.subr.mxu0 0.0
    %2029 = vmatpush1.xpose.msra.mxu0 0.0
    %2030 = vmatprep.subr.mxu0 0.0
    %2031 = vmatpush1.xpose.msra.mxu0 0.0
    %2032 = vmatprep.subr.mxu0 0.0
    %2033 = vmatpush1.xpose.msra.mxu0 0.0
    %2034 = vmatprep.subr.mxu0 0.0
    %2035 = vmatpush1.xpose.msra.mxu0 0.0
    %2036 = vmatprep.subr.mxu0 0.0
    %2037 = vmatpush1.xpose.msra.mxu0 0.0
    %2038 = vmatprep.subr.mxu0 0.0
    %2039 = vmatpush1.xpose.msra.mxu0 0.0
    %2040 = vmatprep.subr.mxu0 0.0
    %2041 = vmatpush1.xpose.msra.mxu0 0.0
    %2042 = vmatprep.mubr.f32.mxu0 0.0
    %2043 = vmatmul.mubr.f32.gmra.mrb[0].mxu0 %v1974
    %v2044 = vpop.f32.mrb[0].mxu0
    %v2045 = vadd.f32 %v319, %v2044
    %v2046 = vpop.f32.mrb[0].mxu0
    %2047 = vdwg.mxu0
    %2048 = vrot.lane.b32.xlu0 %v318, 108
    %v2049 = vpop.permute.xlu0 %2048
    %2050 = vrot.lane.b32.xlu0 %v318, 76
    %v2051 = vpop.permute.xlu0 %2050
    %v2052 = vsel %vm323, %v2049, 0
    %v2054 = vsel %vm323, %v2051, 0
    %2056 = vmatprep.subr.mxu0 0.0
    %2057 = vmatpush1.xpose.msra.mxu0 %v2054
    %2058 = vmatprep.subr.mxu0 0.0
    %2059 = vmatpush1.xpose.msra.mxu0 0.0
    %2060 = vmatprep.subr.mxu0 0.0
    %2061 = vmatpush1.xpose.msra.mxu0 0.0
    %2062 = vmatprep.subr.mxu0 0.0
    %2063 = vmatpush1.xpose.msra.mxu0 0.0
    %2064 = vmatprep.subr.mxu0 0.0
    %2065 = vmatpush1.xpose.msra.mxu0 0.0
    %2066 = vmatprep.subr.mxu0 0.0
    %2067 = vmatpush1.xpose.msra.mxu0 0.0
    %2068 = vmatprep.subr.mxu0 0.0
    %2069 = vmatpush1.xpose.msra.mxu0 0.0
    %2070 = vmatprep.subr.mxu0 0.0
    %2071 = vmatpush1.xpose.msra.mxu0 0.0
    %2072 = vmatprep.subr.mxu0 0.0
    %2073 = vmatpush1.xpose.msra.mxu0 0.0
    %2074 = vmatprep.subr.mxu0 0.0
    %2075 = vmatpush1.xpose.msra.mxu0 0.0
    %2076 = vmatprep.subr.mxu0 0.0
    %2077 = vmatpush1.xpose.msra.mxu0 0.0
    %2078 = vmatprep.subr.mxu0 0.0
    %2079 = vmatpush1.xpose.msra.mxu0 0.0
    %2080 = vmatprep.subr.mxu0 0.0
    %2081 = vmatpush1.xpose.msra.mxu0 0.0
    %2082 = vmatprep.subr.mxu0 0.0
    %2083 = vmatpush1.xpose.msra.mxu0 0.0
    %2084 = vmatprep.subr.mxu0 0.0
    %2085 = vmatpush1.xpose.msra.mxu0 0.0
    %2086 = vmatprep.subr.mxu0 0.0
    %2087 = vmatpush1.xpose.msra.mxu0 0.0
    %2088 = vmatprep.subr.mxu0 0.0
    %2089 = vmatpush1.xpose.msra.mxu0 0.0
    %2090 = vmatprep.subr.mxu0 0.0
    %2091 = vmatpush1.xpose.msra.mxu0 0.0
    %2092 = vmatprep.subr.mxu0 0.0
    %2093 = vmatpush1.xpose.msra.mxu0 0.0
    %2094 = vmatprep.subr.mxu0 0.0
    %2095 = vmatpush1.xpose.msra.mxu0 0.0
    %2096 = vmatprep.subr.mxu0 0.0
    %2097 = vmatpush1.xpose.msra.mxu0 0.0
    %2098 = vmatprep.subr.mxu0 0.0
    %2099 = vmatpush1.xpose.msra.mxu0 0.0
    %2100 = vmatprep.subr.mxu0 0.0
    %2101 = vmatpush1.xpose.msra.mxu0 0.0
    %2102 = vmatprep.subr.mxu0 0.0
    %2103 = vmatpush1.xpose.msra.mxu0 0.0
    %2104 = vmatprep.subr.mxu0 0.0
    %2105 = vmatpush1.xpose.msra.mxu0 0.0
    %2106 = vmatprep.subr.mxu0 0.0
    %2107 = vmatpush1.xpose.msra.mxu0 0.0
    %2108 = vmatprep.subr.mxu0 0.0
    %2109 = vmatpush1.xpose.msra.mxu0 0.0
    %2110 = vmatprep.subr.mxu0 0.0
    %2111 = vmatpush1.xpose.msra.mxu0 0.0
    %2112 = vmatprep.subr.mxu0 0.0
    %2113 = vmatpush1.xpose.msra.mxu0 0.0
    %2114 = vmatprep.subr.mxu0 0.0
    %2115 = vmatpush1.xpose.msra.mxu0 0.0
    %2116 = vmatprep.subr.mxu0 0.0
    %2117 = vmatpush1.xpose.msra.mxu0 0.0
    %2118 = vmatprep.subr.mxu0 0.0
    %2119 = vmatpush1.xpose.msra.mxu0 0.0
    %2120 = vmatprep.mubr.f32.mxu0 0.0
    %2121 = vmatmul.mubr.f32.gmra.mrb[0].mxu0 %v2052
    %v2122 = vpop.f32.mrb[0].mxu0
    %v2123 = vadd.f32 %v319, %v2122
    %v2124 = vpop.f32.mrb[0].mxu0
    %2125 = vdwg.mxu0
    %v2126 = vsel %vm475, %v2045, -inf
    %2127 = vmax.xlane.f32.xlu0 %v2126
    %v2128 = vpop.xlane.xlu0 %2127
    %v2129 = vsel %vm475, %v2123, -inf
    %2130 = vmax.xlane.f32.xlu0 %v2129
    %v2131 = vpop.xlane.xlu0 %2130
    %v2132 = vsub.f32 %v2045, %v2128
    %v2133 = vsub.f32 %v2123, %v2131
    %v2134 = vmul.f32 %v2132, 1.442695
    %v2135 = vpow.pop %v2134
    %v2136 = vmul.f32 %v2133, 1.442695
    %v2137 = vpow.pop %v2136
    %v2138 = vsel %vm475, %v2135, 0.0
    %2139 = vadd.xlane.f32.xlu0 %v2138
    %v2140 = vpop.xlane.xlu0 %2139
    %v2141 = vsel %vm475, %v2137, 0.0
    %2142 = vadd.xlane.f32.xlu0 %v2141
    %v2143 = vpop.xlane.xlu0 %2142
    %v2144 = vrcp.pop %v2140
    %v2145 = vmul.f32 %v2135, %v2144
    %v2146 = vrcp.pop %v2143
    %v2147 = vmul.f32 %v2137, %v2146
    %2148 = vrot.lane.b32.xlu0 %v211, 44
    %v2149 = vpop.permute.xlu0 %2148
    %v2152 = vsel %vm475, %v2145, 0
    %2154 = vmatprep.subr.mxu0 0.0
    %2155 = vmatpush1.msra.mxu0 %v2149
    %2156 = vmatprep.subr.mxu0 0.0
    %2157 = vmatpush1.msra.mxu0 0.0
    %2158 = vmatprep.subr.mxu0 0.0
    %2159 = vmatpush1.msra.mxu0 0.0
    %2160 = vmatprep.subr.mxu0 0.0
    %2161 = vmatpush1.msra.mxu0 0.0
    %2162 = vmatprep.subr.mxu0 0.0
    %2163 = vmatpush1.msra.mxu0 0.0
    %2164 = vmatprep.subr.mxu0 0.0
    %2165 = vmatpush1.msra.mxu0 0.0
    %2166 = vmatprep.subr.mxu0 0.0
    %2167 = vmatpush1.msra.mxu0 0.0
    %2168 = vmatprep.subr.mxu0 0.0
    %2169 = vmatpush1.msra.mxu0 0.0
    %2170 = vmatprep.subr.mxu0 0.0
    %2171 = vmatpush1.msra.mxu0 0.0
    %2172 = vmatprep.subr.mxu0 0.0
    %2173 = vmatpush1.msra.mxu0 0.0
    %2174 = vmatprep.subr.mxu0 0.0
    %2175 = vmatpush1.msra.mxu0 0.0
    %2176 = vmatprep.subr.mxu0 0.0
    %2177 = vmatpush1.msra.mxu0 0.0
    %2178 = vmatprep.subr.mxu0 0.0
    %2179 = vmatpush1.msra.mxu0 0.0
    %2180 = vmatprep.subr.mxu0 0.0
    %2181 = vmatpush1.msra.mxu0 0.0
    %2182 = vmatprep.subr.mxu0 0.0
    %2183 = vmatpush1.msra.mxu0 0.0
    %2184 = vmatprep.subr.mxu0 0.0
    %2185 = vmatpush1.msra.mxu0 0.0
    %2186 = vmatprep.subr.mxu0 0.0
    %2187 = vmatpush1.msra.mxu0 0.0
    %2188 = vmatprep.subr.mxu0 0.0
    %2189 = vmatpush1.msra.mxu0 0.0
    %2190 = vmatprep.subr.mxu0 0.0
    %2191 = vmatpush1.msra.mxu0 0.0
    %2192 = vmatprep.subr.mxu0 0.0
    %2193 = vmatpush1.msra.mxu0 0.0
    %2194 = vmatprep.subr.mxu0 0.0
    %2195 = vmatpush1.msra.mxu0 0.0
    %2196 = vmatprep.subr.mxu0 0.0
    %2197 = vmatpush1.msra.mxu0 0.0
    %2198 = vmatprep.subr.mxu0 0.0
    %2199 = vmatpush1.msra.mxu0 0.0
    %2200 = vmatprep.subr.mxu0 0.0
    %2201 = vmatpush1.msra.mxu0 0.0
    %2202 = vmatprep.subr.mxu0 0.0
    %2203 = vmatpush1.msra.mxu0 0.0
    %2204 = vmatprep.subr.mxu0 0.0
    %2205 = vmatpush1.msra.mxu0 0.0
    %2206 = vmatprep.subr.mxu0 0.0
    %2207 = vmatpush1.msra.mxu0 0.0
    %2208 = vmatprep.subr.mxu0 0.0
    %2209 = vmatpush1.msra.mxu0 0.0
    %2210 = vmatprep.subr.mxu0 0.0
    %2211 = vmatpush1.msra.mxu0 0.0
    %2212 = vmatprep.subr.mxu0 0.0
    %2213 = vmatpush1.msra.mxu0 0.0
    %2214 = vmatprep.subr.mxu0 0.0
    %2215 = vmatpush1.msra.mxu0 0.0
    %2216 = vmatprep.subr.mxu0 0.0
    %2217 = vmatpush1.msra.mxu0 0.0
    %2218 = vmatprep.mubr.f32.mxu0 0.0
    %2219 = vmatmul.mubr.f32.gmra.mrb[0].mxu0 %v2152
    %v2220 = vpop.f32.mrb[0].mxu0
    %v2221 = vadd.f32 0.0, %v2220
    %v2222 = vpop.f32.mrb[0].mxu0
    %2223 = vdwg.mxu0
    %2224 = vrot.lane.b32.xlu0 %v216, 44
    %v2225 = vpop.permute.xlu0 %2224
    %v2228 = vsel %vm475, %v2147, 0
    %2230 = vmatprep.subr.mxu0 0.0
    %2231 = vmatpush1.msra.mxu0 %v2225
    %2232 = vmatprep.subr.mxu0 0.0
    %2233 = vmatpush1.msra.mxu0 0.0
    %2234 = vmatprep.subr.mxu0 0.0
    %2235 = vmatpush1.msra.mxu0 0.0
    %2236 = vmatprep.subr.mxu0 0.0
    %2237 = vmatpush1.msra.mxu0 0.0
    %2238 = vmatprep.subr.mxu0 0.0
    %2239 = vmatpush1.msra.mxu0 0.0
    %2240 = vmatprep.subr.mxu0 0.0
    %2241 = vmatpush1.msra.mxu0 0.0
    %2242 = vmatprep.subr.mxu0 0.0
    %2243 = vmatpush1.msra.mxu0 0.0
    %2244 = vmatprep.subr.mxu0 0.0
    %2245 = vmatpush1.msra.mxu0 0.0
    %2246 = vmatprep.subr.mxu0 0.0
    %2247 = vmatpush1.msra.mxu0 0.0
    %2248 = vmatprep.subr.mxu0 0.0
    %2249 = vmatpush1.msra.mxu0 0.0
    %2250 = vmatprep.subr.mxu0 0.0
    %2251 = vmatpush1.msra.mxu0 0.0
    %2252 = vmatprep.subr.mxu0 0.0
    %2253 = vmatpush1.msra.mxu0 0.0
    %2254 = vmatprep.subr.mxu0 0.0
    %2255 = vmatpush1.msra.mxu0 0.0
    %2256 = vmatprep.subr.mxu0 0.0
    %2257 = vmatpush1.msra.mxu0 0.0
    %2258 = vmatprep.subr.mxu0 0.0
    %2259 = vmatpush1.msra.mxu0 0.0
    %2260 = vmatprep.subr.mxu0 0.0
    %2261 = vmatpush1.msra.mxu0 0.0
    %2262 = vmatprep.subr.mxu0 0.0
    %2263 = vmatpush1.msra.mxu0 0.0
    %2264 = vmatprep.subr.mxu0 0.0
    %2265 = vmatpush1.msra.mxu0 0.0
    %2266 = vmatprep.subr.mxu0 0.0
    %2267 = vmatpush1.msra.mxu0 0.0
    %2268 = vmatprep.subr.mxu0 0.0
    %2269 = vmatpush1.msra.mxu0 0.0
    %2270 = vmatprep.subr.mxu0 0.0
    %2271 = vmatpush1.msra.mxu0 0.0
    %2272 = vmatprep.subr.mxu0 0.0
    %2273 = vmatpush1.msra.mxu0 0.0
    %2274 = vmatprep.subr.mxu0 0.0
    %2275 = vmatpush1.msra.mxu0 0.0
    %2276 = vmatprep.subr.mxu0 0.0
    %2277 = vmatpush1.msra.mxu0 0.0
    %2278 = vmatprep.subr.mxu0 0.0
    %2279 = vmatpush1.msra.mxu0 0.0
    %2280 = vmatprep.subr.mxu0 0.0
    %2281 = vmatpush1.msra.mxu0 0.0
    %2282 = vmatprep.subr.mxu0 0.0
    %2283 = vmatpush1.msra.mxu0 0.0
    %2284 = vmatprep.subr.mxu0 0.0
    %2285 = vmatpush1.msra.mxu0 0.0
    %2286 = vmatprep.subr.mxu0 0.0
    %2287 = vmatpush1.msra.mxu0 0.0
    %2288 = vmatprep.subr.mxu0 0.0
    %2289 = vmatpush1.msra.mxu0 0.0
    %2290 = vmatprep.subr.mxu0 0.0
    %2291 = vmatpush1.msra.mxu0 0.0
    %2292 = vmatprep.subr.mxu0 0.0
    %2293 = vmatpush1.msra.mxu0 0.0
    %2294 = vmatprep.mubr.f32.mxu0 0.0
    %2295 = vmatmul.mubr.f32.gmra.mrb[0].mxu0 %v2228
    %v2296 = vpop.f32.mrb[0].mxu0
    %v2297 = vadd.f32 0.0, %v2296
    %v2298 = vpop.f32.mrb[0].mxu0
    %2299 = vdwg.mxu0
    %2300 = vrot.lane.b32.xlu0 %v317, 104
    %v2301 = vpop.permute.xlu0 %2300
    %2302 = vrot.lane.b32.xlu0 %v317, 72
    %v2303 = vpop.permute.xlu0 %2302
    %v2304 = vsel %vm323, %v2301, 0
    %v2306 = vsel %vm323, %v2303, 0
    %2308 = vmatprep.subr.mxu0 0.0
    %2309 = vmatpush1.xpose.msra.mxu0 %v2306
    %2310 = vmatprep.subr.mxu0 0.0
    %2311 = vmatpush1.xpose.msra.mxu0 0.0
    %2312 = vmatprep.subr.mxu0 0.0
    %2313 = vmatpush1.xpose.msra.mxu0 0.0
    %2314 = vmatprep.subr.mxu0 0.0
    %2315 = vmatpush1.xpose.msra.mxu0 0.0
    %2316 = vmatprep.subr.mxu0 0.0
    %2317 = vmatpush1.xpose.msra.mxu0 0.0
    %2318 = vmatprep.subr.mxu0 0.0
    %2319 = vmatpush1.xpose.msra.mxu0 0.0
    %2320 = vmatprep.subr.mxu0 0.0
    %2321 = vmatpush1.xpose.msra.mxu0 0.0
    %2322 = vmatprep.subr.mxu0 0.0
    %2323 = vmatpush1.xpose.msra.mxu0 0.0
    %2324 = vmatprep.subr.mxu0 0.0
    %2325 = vmatpush1.xpose.msra.mxu0 0.0
    %2326 = vmatprep.subr.mxu0 0.0
    %2327 = vmatpush1.xpose.msra.mxu0 0.0
    %2328 = vmatprep.subr.mxu0 0.0
    %2329 = vmatpush1.xpose.msra.mxu0 0.0
    %2330 = vmatprep.subr.mxu0 0.0
    %2331 = vmatpush1.xpose.msra.mxu0 0.0
    %2332 = vmatprep.subr.mxu0 0.0
    %2333 = vmatpush1.xpose.msra.mxu0 0.0
    %2334 = vmatprep.subr.mxu0 0.0
    %2335 = vmatpush1.xpose.msra.mxu0 0.0
    %2336 = vmatprep.subr.mxu0 0.0
    %2337 = vmatpush1.xpose.msra.mxu0 0.0
    %2338 = vmatprep.subr.mxu0 0.0
    %2339 = vmatpush1.xpose.msra.mxu0 0.0
    %2340 = vmatprep.subr.mxu0 0.0
    %2341 = vmatpush1.xpose.msra.mxu0 0.0
    %2342 = vmatprep.subr.mxu0 0.0
    %2343 = vmatpush1.xpose.msra.mxu0 0.0
    %2344 = vmatprep.subr.mxu0 0.0
    %2345 = vmatpush1.xpose.msra.mxu0 0.0
    %2346 = vmatprep.subr.mxu0 0.0
    %2347 = vmatpush1.xpose.msra.mxu0 0.0
    %2348 = vmatprep.subr.mxu0 0.0
    %2349 = vmatpush1.xpose.msra.mxu0 0.0
    %2350 = vmatprep.subr.mxu0 0.0
    %2351 = vmatpush1.xpose.msra.mxu0 0.0
    %2352 = vmatprep.subr.mxu0 0.0
    %2353 = vmatpush1.xpose.msra.mxu0 0.0
    %2354 = vmatprep.subr.mxu0 0.0
    %2355 = vmatpush1.xpose.msra.mxu0 0.0
    %2356 = vmatprep.subr.mxu0 0.0
    %2357 = vmatpush1.xpose.msra.mxu0 0.0
    %2358 = vmatprep.subr.mxu0 0.0
    %2359 = vmatpush1.xpose.msra.mxu0 0.0
    %2360 = vmatprep.subr.mxu0 0.0
    %2361 = vmatpush1.xpose.msra.mxu0 0.0
    %2362 = vmatprep.subr.mxu0 0.0
    %2363 = vmatpush1.xpose.msra.mxu0 0.0
    %2364 = vmatprep.subr.mxu0 0.0
    %2365 = vmatpush1.xpose.msra.mxu0 0.0
    %2366 = vmatprep.subr.mxu0 0.0
    %2367 = vmatpush1.xpose.msra.mxu0 0.0
    %2368 = vmatprep.subr.mxu0 0.0
    %2369 = vmatpush1.xpose.msra.mxu0 0.0
    %2370 = vmatprep.subr.mxu0 0.0
    %2371 = vmatpush1.xpose.msra.mxu0 0.0
    %2372 = vmatprep.mubr.f32.mxu0 0.0
    %2373 = vmatmul.mubr.f32.gmra.mrb[0].mxu0 %v2304
    %v2374 = vpop.f32.mrb[0].mxu0
    %v2375 = vadd.f32 %v319, %v2374
    %v2376 = vpop.f32.mrb[0].mxu0
    %2377 = vdwg.mxu0
    %2378 = vrot.lane.b32.xlu0 %v318, 104
    %v2379 = vpop.permute.xlu0 %2378
    %2380 = vrot.lane.b32.xlu0 %v318, 72
    %v2381 = vpop.permute.xlu0 %2380
    %v2382 = vsel %vm323, %v2379, 0
    %v2384 = vsel %vm323, %v2381, 0
    %2386 = vmatprep.subr.mxu0 0.0
    %2387 = vmatpush1.xpose.msra.mxu0 %v2384
    %2388 = vmatprep.subr.mxu0 0.0
    %2389 = vmatpush1.xpose.msra.mxu0 0.0
    %2390 = vmatprep.subr.mxu0 0.0
    %2391 = vmatpush1.xpose.msra.mxu0 0.0
    %2392 = vmatprep.subr.mxu0 0.0
    %2393 = vmatpush1.xpose.msra.mxu0 0.0
    %2394 = vmatprep.subr.mxu0 0.0
    %2395 = vmatpush1.xpose.msra.mxu0 0.0
    %2396 = vmatprep.subr.mxu0 0.0
    %2397 = vmatpush1.xpose.msra.mxu0 0.0
    %2398 = vmatprep.subr.mxu0 0.0
    %2399 = vmatpush1.xpose.msra.mxu0 0.0
    %2400 = vmatprep.subr.mxu0 0.0
    %2401 = vmatpush1.xpose.msra.mxu0 0.0
    %2402 = vmatprep.subr.mxu0 0.0
    %2403 = vmatpush1.xpose.msra.mxu0 0.0
    %2404 = vmatprep.subr.mxu0 0.0
    %2405 = vmatpush1.xpose.msra.mxu0 0.0
    %2406 = vmatprep.subr.mxu0 0.0
    %2407 = vmatpush1.xpose.msra.mxu0 0.0
    %2408 = vmatprep.subr.mxu0 0.0
    %2409 = vmatpush1.xpose.msra.mxu0 0.0
    %2410 = vmatprep.subr.mxu0 0.0
    %2411 = vmatpush1.xpose.msra.mxu0 0.0
    %2412 = vmatprep.subr.mxu0 0.0
    %2413 = vmatpush1.xpose.msra.mxu0 0.0
    %2414 = vmatprep.subr.mxu0 0.0
    %2415 = vmatpush1.xpose.msra.mxu0 0.0
    %2416 = vmatprep.subr.mxu0 0.0
    %2417 = vmatpush1.xpose.msra.mxu0 0.0
    %2418 = vmatprep.subr.mxu0 0.0
    %2419 = vmatpush1.xpose.msra.mxu0 0.0
    %2420 = vmatprep.subr.mxu0 0.0
    %2421 = vmatpush1.xpose.msra.mxu0 0.0
    %2422 = vmatprep.subr.mxu0 0.0
    %2423 = vmatpush1.xpose.msra.mxu0 0.0
    %2424 = vmatprep.subr.mxu0 0.0
    %2425 = vmatpush1.xpose.msra.mxu0 0.0
    %2426 = vmatprep.subr.mxu0 0.0
    %2427 = vmatpush1.xpose.msra.mxu0 0.0
    %2428 = vmatprep.subr.mxu0 0.0
    %2429 = vmatpush1.xpose.msra.mxu0 0.0
    %2430 = vmatprep.subr.mxu0 0.0
    %2431 = vmatpush1.xpose.msra.mxu0 0.0
    %2432 = vmatprep.subr.mxu0 0.0
    %2433 = vmatpush1.xpose.msra.mxu0 0.0
    %2434 = vmatprep.subr.mxu0 0.0
    %2435 = vmatpush1.xpose.msra.mxu0 0.0
    %2436 = vmatprep.subr.mxu0 0.0
    %2437 = vmatpush1.xpose.msra.mxu0 0.0
    %2438 = vmatprep.subr.mxu0 0.0
    %2439 = vmatpush1.xpose.msra.mxu0 0.0
    %2440 = vmatprep.subr.mxu0 0.0
    %2441 = vmatpush1.xpose.msra.mxu0 0.0
    %2442 = vmatprep.subr.mxu0 0.0
    %2443 = vmatpush1.xpose.msra.mxu0 0.0
    %2444 = vmatprep.subr.mxu0 0.0
    %2445 = vmatpush1.xpose.msra.mxu0 0.0
    %2446 = vmatprep.subr.mxu0 0.0
    %2447 = vmatpush1.xpose.msra.mxu0 0.0
    %2448 = vmatprep.subr.mxu0 0.0
    %2449 = vmatpush1.xpose.msra.mxu0 0.0
    %2450 = vmatprep.mubr.f32.mxu0 0.0
    %2451 = vmatmul.mubr.f32.gmra.mrb[0].mxu0 %v2382
    %v2452 = vpop.f32.mrb[0].mxu0
    %v2453 = vadd.f32 %v319, %v2452
    %v2454 = vpop.f32.mrb[0].mxu0
    %2455 = vdwg.mxu0
    %v2456 = vsel %vm475, %v2375, -inf
    %2457 = vmax.xlane.f32.xlu0 %v2456
    %v2458 = vpop.xlane.xlu0 %2457
    %v2459 = vsel %vm475, %v2453, -inf
    %2460 = vmax.xlane.f32.xlu0 %v2459
    %v2461 = vpop.xlane.xlu0 %2460
    %v2462 = vsub.f32 %v2375, %v2458
    %v2463 = vsub.f32 %v2453, %v2461
    %v2464 = vmul.f32 %v2462, 1.442695
    %v2465 = vpow.pop %v2464
    %v2466 = vmul.f32 %v2463, 1.442695
    %v2467 = vpow.pop %v2466
    %v2468 = vsel %vm475, %v2465, 0.0
    %2469 = vadd.xlane.f32.xlu0 %v2468
    %v2470 = vpop.xlane.xlu0 %2469
    %v2471 = vsel %vm475, %v2467, 0.0
    %2472 = vadd.xlane.f32.xlu0 %v2471
    %v2473 = vpop.xlane.xlu0 %2472
    %v2474 = vrcp.pop %v2470
    %v2475 = vmul.f32 %v2465, %v2474
    %v2476 = vrcp.pop %v2473
    %v2477 = vmul.f32 %v2467, %v2476
    %2478 = vrot.lane.b32.xlu0 %v211, 40
    %v2479 = vpop.permute.xlu0 %2478
    %v2482 = vsel %vm475, %v2475, 0
    %2484 = vmatprep.subr.mxu0 0.0
    %2485 = vmatpush1.msra.mxu0 %v2479
    %2486 = vmatprep.subr.mxu0 0.0
    %2487 = vmatpush1.msra.mxu0 0.0
    %2488 = vmatprep.subr.mxu0 0.0
    %2489 = vmatpush1.msra.mxu0 0.0
    %2490 = vmatprep.subr.mxu0 0.0
    %2491 = vmatpush1.msra.mxu0 0.0
    %2492 = vmatprep.subr.mxu0 0.0
    %2493 = vmatpush1.msra.mxu0 0.0
    %2494 = vmatprep.subr.mxu0 0.0
    %2495 = vmatpush1.msra.mxu0 0.0
    %2496 = vmatprep.subr.mxu0 0.0
    %2497 = vmatpush1.msra.mxu0 0.0
    %2498 = vmatprep.subr.mxu0 0.0
    %2499 = vmatpush1.msra.mxu0 0.0
    %2500 = vmatprep.subr.mxu0 0.0
    %2501 = vmatpush1.msra.mxu0 0.0
    %2502 = vmatprep.subr.mxu0 0.0
    %2503 = vmatpush1.msra.mxu0 0.0
    %2504 = vmatprep.subr.mxu0 0.0
    %2505 = vmatpush1.msra.mxu0 0.0
    %2506 = vmatprep.subr.mxu0 0.0
    %2507 = vmatpush1.msra.mxu0 0.0
    %2508 = vmatprep.subr.mxu0 0.0
    %2509 = vmatpush1.msra.mxu0 0.0
    %2510 = vmatprep.subr.mxu0 0.0
    %2511 = vmatpush1.msra.mxu0 0.0
    %2512 = vmatprep.subr.mxu0 0.0
    %2513 = vmatpush1.msra.mxu0 0.0
    %2514 = vmatprep.subr.mxu0 0.0
    %2515 = vmatpush1.msra.mxu0 0.0
    %2516 = vmatprep.subr.mxu0 0.0
    %2517 = vmatpush1.msra.mxu0 0.0
    %2518 = vmatprep.subr.mxu0 0.0
    %2519 = vmatpush1.msra.mxu0 0.0
    %2520 = vmatprep.subr.mxu0 0.0
    %2521 = vmatpush1.msra.mxu0 0.0
    %2522 = vmatprep.subr.mxu0 0.0
    %2523 = vmatpush1.msra.mxu0 0.0
    %2524 = vmatprep.subr.mxu0 0.0
    %2525 = vmatpush1.msra.mxu0 0.0
    %2526 = vmatprep.subr.mxu0 0.0
    %2527 = vmatpush1.msra.mxu0 0.0
    %2528 = vmatprep.subr.mxu0 0.0
    %2529 = vmatpush1.msra.mxu0 0.0
    %2530 = vmatprep.subr.mxu0 0.0
    %2531 = vmatpush1.msra.mxu0 0.0
    %2532 = vmatprep.subr.mxu0 0.0
    %2533 = vmatpush1.msra.mxu0 0.0
    %2534 = vmatprep.subr.mxu0 0.0
    %2535 = vmatpush1.msra.mxu0 0.0
    %2536 = vmatprep.subr.mxu0 0.0
    %2537 = vmatpush1.msra.mxu0 0.0
    %2538 = vmatprep.subr.mxu0 0.0
    %2539 = vmatpush1.msra.mxu0 0.0
    %2540 = vmatprep.subr.mxu0 0.0
    %2541 = vmatpush1.msra.mxu0 0.0
    %2542 = vmatprep.subr.mxu0 0.0
    %2543 = vmatpush1.msra.mxu0 0.0
    %2544 = vmatprep.subr.mxu0 0.0
    %2545 = vmatpush1.msra.mxu0 0.0
    %2546 = vmatprep.subr.mxu0 0.0
    %2547 = vmatpush1.msra.mxu0 0.0
    %2548 = vmatprep.mubr.f32.mxu0 0.0
    %2549 = vmatmul.mubr.f32.gmra.mrb[0].mxu0 %v2482
    %v2550 = vpop.f32.mrb[0].mxu0
    %v2551 = vadd.f32 0.0, %v2550
    %v2552 = vpop.f32.mrb[0].mxu0
    %2553 = vdwg.mxu0
    %2554 = vrot.lane.b32.xlu0 %v216, 40
    %v2555 = vpop.permute.xlu0 %2554
    %v2558 = vsel %vm475, %v2477, 0
    %2560 = vmatprep.subr.mxu0 0.0
    %2561 = vmatpush1.msra.mxu0 %v2555
    %2562 = vmatprep.subr.mxu0 0.0
    %2563 = vmatpush1.msra.mxu0 0.0
    %2564 = vmatprep.subr.mxu0 0.0
    %2565 = vmatpush1.msra.mxu0 0.0
    %2566 = vmatprep.subr.mxu0 0.0
    %2567 = vmatpush1.msra.mxu0 0.0
    %2568 = vmatprep.subr.mxu0 0.0
    %2569 = vmatpush1.msra.mxu0 0.0
    %2570 = vmatprep.subr.mxu0 0.0
    %2571 = vmatpush1.msra.mxu0 0.0
    %2572 = vmatprep.subr.mxu0 0.0
    %2573 = vmatpush1.msra.mxu0 0.0
    %2574 = vmatprep.subr.mxu0 0.0
    %2575 = vmatpush1.msra.mxu0 0.0
    %2576 = vmatprep.subr.mxu0 0.0
    %2577 = vmatpush1.msra.mxu0 0.0
    %2578 = vmatprep.subr.mxu0 0.0
    %2579 = vmatpush1.msra.mxu0 0.0
    %2580 = vmatprep.subr.mxu0 0.0
    %2581 = vmatpush1.msra.mxu0 0.0
    %2582 = vmatprep.subr.mxu0 0.0
    %2583 = vmatpush1.msra.mxu0 0.0
    %2584 = vmatprep.subr.mxu0 0.0
    %2585 = vmatpush1.msra.mxu0 0.0
    %2586 = vmatprep.subr.mxu0 0.0
    %2587 = vmatpush1.msra.mxu0 0.0
    %2588 = vmatprep.subr.mxu0 0.0
    %2589 = vmatpush1.msra.mxu0 0.0
    %2590 = vmatprep.subr.mxu0 0.0
    %2591 = vmatpush1.msra.mxu0 0.0
    %2592 = vmatprep.subr.mxu0 0.0
    %2593 = vmatpush1.msra.mxu0 0.0
    %2594 = vmatprep.subr.mxu0 0.0
    %2595 = vmatpush1.msra.mxu0 0.0
    %2596 = vmatprep.subr.mxu0 0.0
    %2597 = vmatpush1.msra.mxu0 0.0
    %2598 = vmatprep.subr.mxu0 0.0
    %2599 = vmatpush1.msra.mxu0 0.0
    %2600 = vmatprep.subr.mxu0 0.0
    %2601 = vmatpush1.msra.mxu0 0.0
    %2602 = vmatprep.subr.mxu0 0.0
    %2603 = vmatpush1.msra.mxu0 0.0
    %2604 = vmatprep.subr.mxu0 0.0
    %2605 = vmatpush1.msra.mxu0 0.0
    %2606 = vmatprep.subr.mxu0 0.0
    %2607 = vmatpush1.msra.mxu0 0.0
    %2608 = vmatprep.subr.mxu0 0.0
    %2609 = vmatpush1.msra.mxu0 0.0
    %2610 = vmatprep.subr.mxu0 0.0
    %2611 = vmatpush1.msra.mxu0 0.0
    %2612 = vmatprep.subr.mxu0 0.0
    %2613 = vmatpush1.msra.mxu0 0.0
    %2614 = vmatprep.subr.mxu0 0.0
    %2615 = vmatpush1.msra.mxu0 0.0
    %2616 = vmatprep.subr.mxu0 0.0
    %2617 = vmatpush1.msra.mxu0 0.0
    %2618 = vmatprep.subr.mxu0 0.0
    %2619 = vmatpush1.msra.mxu0 0.0
    %2620 = vmatprep.subr.mxu0 0.0
    %2621 = vmatpush1.msra.mxu0 0.0
    %2622 = vmatprep.subr.mxu0 0.0
    %2623 = vmatpush1.msra.mxu0 0.0
    %2624 = vmatprep.mubr.f32.mxu0 0.0
    %2625 = vmatmul.mubr.f32.gmra.mrb[0].mxu0 %v2558
    %v2626 = vpop.f32.mrb[0].mxu0
    %v2627 = vadd.f32 0.0, %v2626
    %v2628 = vpop.f32.mrb[0].mxu0
    %2629 = vdwg.mxu0
    %2630 = vrot.lane.b32.xlu0 %v317, 100
    %v2631 = vpop.permute.xlu0 %2630
    %2632 = vrot.lane.b32.xlu0 %v317, 68
    %v2633 = vpop.permute.xlu0 %2632
    %v2634 = vsel %vm323, %v2631, 0
    %v2636 = vsel %vm323, %v2633, 0
    %2638 = vmatprep.subr.mxu0 0.0
    %2639 = vmatpush1.xpose.msra.mxu0 %v2636
    %2640 = vmatprep.subr.mxu0 0.0
    %2641 = vmatpush1.xpose.msra.mxu0 0.0
    %2642 = vmatprep.subr.mxu0 0.0
    %2643 = vmatpush1.xpose.msra.mxu0 0.0
    %2644 = vmatprep.subr.mxu0 0.0
    %2645 = vmatpush1.xpose.msra.mxu0 0.0
    %2646 = vmatprep.subr.mxu0 0.0
    %2647 = vmatpush1.xpose.msra.mxu0 0.0
    %2648 = vmatprep.subr.mxu0 0.0
    %2649 = vmatpush1.xpose.msra.mxu0 0.0
    %2650 = vmatprep.subr.mxu0 0.0
    %2651 = vmatpush1.xpose.msra.mxu0 0.0
    %2652 = vmatprep.subr.mxu0 0.0
    %2653 = vmatpush1.xpose.msra.mxu0 0.0
    %2654 = vmatprep.subr.mxu0 0.0
    %2655 = vmatpush1.xpose.msra.mxu0 0.0
    %2656 = vmatprep.subr.mxu0 0.0
    %2657 = vmatpush1.xpose.msra.mxu0 0.0
    %2658 = vmatprep.subr.mxu0 0.0
    %2659 = vmatpush1.xpose.msra.mxu0 0.0
    %2660 = vmatprep.subr.mxu0 0.0
    %2661 = vmatpush1.xpose.msra.mxu0 0.0
    %2662 = vmatprep.subr.mxu0 0.0
    %2663 = vmatpush1.xpose.msra.mxu0 0.0
    %2664 = vmatprep.subr.mxu0 0.0
    %2665 = vmatpush1.xpose.msra.mxu0 0.0
    %2666 = vmatprep.subr.mxu0 0.0
    %2667 = vmatpush1.xpose.msra.mxu0 0.0
    %2668 = vmatprep.subr.mxu0 0.0
    %2669 = vmatpush1.xpose.msra.mxu0 0.0
    %2670 = vmatprep.subr.mxu0 0.0
    %2671 = vmatpush1.xpose.msra.mxu0 0.0
    %2672 = vmatprep.subr.mxu0 0.0
    %2673 = vmatpush1.xpose.msra.mxu0 0.0
    %2674 = vmatprep.subr.mxu0 0.0
    %2675 = vmatpush1.xpose.msra.mxu0 0.0
    %2676 = vmatprep.subr.mxu0 0.0
    %2677 = vmatpush1.xpose.msra.mxu0 0.0
    %2678 = vmatprep.subr.mxu0 0.0
    %2679 = vmatpush1.xpose.msra.mxu0 0.0
    %2680 = vmatprep.subr.mxu0 0.0
    %2681 = vmatpush1.xpose.msra.mxu0 0.0
    %2682 = vmatprep.subr.mxu0 0.0
    %2683 = vmatpush1.xpose.msra.mxu0 0.0
    %2684 = vmatprep.subr.mxu0 0.0
    %2685 = vmatpush1.xpose.msra.mxu0 0.0
    %2686 = vmatprep.subr.mxu0 0.0
    %2687 = vmatpush1.xpose.msra.mxu0 0.0
    %2688 = vmatprep.subr.mxu0 0.0
    %2689 = vmatpush1.xpose.msra.mxu0 0.0
    %2690 = vmatprep.subr.mxu0 0.0
    %2691 = vmatpush1.xpose.msra.mxu0 0.0
    %2692 = vmatprep.subr.mxu0 0.0
    %2693 = vmatpush1.xpose.msra.mxu0 0.0
    %2694 = vmatprep.subr.mxu0 0.0
    %2695 = vmatpush1.xpose.msra.mxu0 0.0
    %2696 = vmatprep.subr.mxu0 0.0
    %2697 = vmatpush1.xpose.msra.mxu0 0.0
    %2698 = vmatprep.subr.mxu0 0.0
    %2699 = vmatpush1.xpose.msra.mxu0 0.0
    %2700 = vmatprep.subr.mxu0 0.0
    %2701 = vmatpush1.xpose.msra.mxu0 0.0
    %2702 = vmatprep.mubr.f32.mxu0 0.0
    %2703 = vmatmul.mubr.f32.gmra.mrb[0].mxu0 %v2634
    %v2704 = vpop.f32.mrb[0].mxu0
    %v2705 = vadd.f32 %v319, %v2704
    %v2706 = vpop.f32.mrb[0].mxu0
    %2707 = vdwg.mxu0
    %2708 = vrot.lane.b32.xlu0 %v318, 100
    %v2709 = vpop.permute.xlu0 %2708
    %2710 = vrot.lane.b32.xlu0 %v318, 68
    %v2711 = vpop.permute.xlu0 %2710
    %v2712 = vsel %vm323, %v2709, 0
    %v2714 = vsel %vm323, %v2711, 0
    %2716 = vmatprep.subr.mxu0 0.0
    %2717 = vmatpush1.xpose.msra.mxu0 %v2714
    %2718 = vmatprep.subr.mxu0 0.0
    %2719 = vmatpush1.xpose.msra.mxu0 0.0
    %2720 = vmatprep.subr.mxu0 0.0
    %2721 = vmatpush1.xpose.msra.mxu0 0.0
    %2722 = vmatprep.subr.mxu0 0.0
    %2723 = vmatpush1.xpose.msra.mxu0 0.0
    %2724 = vmatprep.subr.mxu0 0.0
    %2725 = vmatpush1.xpose.msra.mxu0 0.0
    %2726 = vmatprep.subr.mxu0 0.0
    %2727 = vmatpush1.xpose.msra.mxu0 0.0
    %2728 = vmatprep.subr.mxu0 0.0
    %2729 = vmatpush1.xpose.msra.mxu0 0.0
    %2730 = vmatprep.subr.mxu0 0.0
    %2731 = vmatpush1.xpose.msra.mxu0 0.0
    %2732 = vmatprep.subr.mxu0 0.0
    %2733 = vmatpush1.xpose.msra.mxu0 0.0
    %2734 = vmatprep.subr.mxu0 0.0
    %2735 = vmatpush1.xpose.msra.mxu0 0.0
    %2736 = vmatprep.subr.mxu0 0.0
    %2737 = vmatpush1.xpose.msra.mxu0 0.0
    %2738 = vmatprep.subr.mxu0 0.0
    %2739 = vmatpush1.xpose.msra.mxu0 0.0
    %2740 = vmatprep.subr.mxu0 0.0
    %2741 = vmatpush1.xpose.msra.mxu0 0.0
    %2742 = vmatprep.subr.mxu0 0.0
    %2743 = vmatpush1.xpose.msra.mxu0 0.0
    %2744 = vmatprep.subr.mxu0 0.0
    %2745 = vmatpush1.xpose.msra.mxu0 0.0
    %2746 = vmatprep.subr.mxu0 0.0
    %2747 = vmatpush1.xpose.msra.mxu0 0.0
    %2748 = vmatprep.subr.mxu0 0.0
    %2749 = vmatpush1.xpose.msra.mxu0 0.0
    %2750 = vmatprep.subr.mxu0 0.0
    %2751 = vmatpush1.xpose.msra.mxu0 0.0
    %2752 = vmatprep.subr.mxu0 0.0
    %2753 = vmatpush1.xpose.msra.mxu0 0.0
    %2754 = vmatprep.subr.mxu0 0.0
    %2755 = vmatpush1.xpose.msra.mxu0 0.0
    %2756 = vmatprep.subr.mxu0 0.0
    %2757 = vmatpush1.xpose.msra.mxu0 0.0
    %2758 = vmatprep.subr.mxu0 0.0
    %2759 = vmatpush1.xpose.msra.mxu0 0.0
    %2760 = vmatprep.subr.mxu0 0.0
    %2761 = vmatpush1.xpose.msra.mxu0 0.0
    %2762 = vmatprep.subr.mxu0 0.0
    %2763 = vmatpush1.xpose.msra.mxu0 0.0
    %2764 = vmatprep.subr.mxu0 0.0
    %2765 = vmatpush1.xpose.msra.mxu0 0.0
    %2766 = vmatprep.subr.mxu0 0.0
    %2767 = vmatpush1.xpose.msra.mxu0 0.0
    %2768 = vmatprep.subr.mxu0 0.0
    %2769 = vmatpush1.xpose.msra.mxu0 0.0
    %2770 = vmatprep.subr.mxu0 0.0
    %2771 = vmatpush1.xpose.msra.mxu0 0.0
    %2772 = vmatprep.subr.mxu0 0.0
    %2773 = vmatpush1.xpose.msra.mxu0 0.0
    %2774 = vmatprep.subr.mxu0 0.0
    %2775 = vmatpush1.xpose.msra.mxu0 0.0
    %2776 = vmatprep.subr.mxu0 0.0
    %2777 = vmatpush1.xpose.msra.mxu0 0.0
    %2778 = vmatprep.subr.mxu0 0.0
    %2779 = vmatpush1.xpose.msra.mxu0 0.0
    %2780 = vmatprep.mubr.f32.mxu0 0.0
    %2781 = vmatmul.mubr.f32.gmra.mrb[0].mxu0 %v2712
    %v2782 = vpop.f32.mrb[0].mxu0
    %v2783 = vadd.f32 %v319, %v2782
    %v2784 = vpop.f32.mrb[0].mxu0
    %2785 = vdwg.mxu0
    %v2786 = vsel %vm475, %v2705, -inf
    %2787 = vmax.xlane.f32.xlu0 %v2786
    %v2788 = vpop.xlane.xlu0 %2787
    %v2789 = vsel %vm475, %v2783, -inf
    %2790 = vmax.xlane.f32.xlu0 %v2789
    %v2791 = vpop.xlane.xlu0 %2790
    %v2792 = vsub.f32 %v2705, %v2788
    %v2793 = vsub.f32 %v2783, %v2791
    %v2794 = vmul.f32 %v2792, 1.442695
    %v2795 = vpow.pop %v2794
    %v2796 = vmul.f32 %v2793, 1.442695
    %v2797 = vpow.pop %v2796
    %v2798 = vsel %vm475, %v2795, 0.0
    %2799 = vadd.xlane.f32.xlu0 %v2798
    %v2800 = vpop.xlane.xlu0 %2799
    %v2801 = vsel %vm475, %v2797, 0.0
    %2802 = vadd.xlane.f32.xlu0 %v2801
    %v2803 = vpop.xlane.xlu0 %2802
    %v2804 = vrcp.pop %v2800
    %v2805 = vmul.f32 %v2795, %v2804
    %v2806 = vrcp.pop %v2803
    %v2807 = vmul.f32 %v2797, %v2806
    %2808 = vrot.lane.b32.xlu0 %v211, 36
    %v2809 = vpop.permute.xlu0 %2808
    %v2812 = vsel %vm475, %v2805, 0
    %2814 = vmatprep.subr.mxu0 0.0
    %2815 = vmatpush1.msra.mxu0 %v2809
    %2816 = vmatprep.subr.mxu0 0.0
    %2817 = vmatpush1.msra.mxu0 0.0
    %2818 = vmatprep.subr.mxu0 0.0
    %2819 = vmatpush1.msra.mxu0 0.0
    %2820 = vmatprep.subr.mxu0 0.0
    %2821 = vmatpush1.msra.mxu0 0.0
    %2822 = vmatprep.subr.mxu0 0.0
    %2823 = vmatpush1.msra.mxu0 0.0
    %2824 = vmatprep.subr.mxu0 0.0
    %2825 = vmatpush1.msra.mxu0 0.0
    %2826 = vmatprep.subr.mxu0 0.0
    %2827 = vmatpush1.msra.mxu0 0.0
    %2828 = vmatprep.subr.mxu0 0.0
    %2829 = vmatpush1.msra.mxu0 0.0
    %2830 = vmatprep.subr.mxu0 0.0
    %2831 = vmatpush1.msra.mxu0 0.0
    %2832 = vmatprep.subr.mxu0 0.0
    %2833 = vmatpush1.msra.mxu0 0.0
    %2834 = vmatprep.subr.mxu0 0.0
    %2835 = vmatpush1.msra.mxu0 0.0
    %2836 = vmatprep.subr.mxu0 0.0
    %2837 = vmatpush1.msra.mxu0 0.0
    %2838 = vmatprep.subr.mxu0 0.0
    %2839 = vmatpush1.msra.mxu0 0.0
    %2840 = vmatprep.subr.mxu0 0.0
    %2841 = vmatpush1.msra.mxu0 0.0
    %2842 = vmatprep.subr.mxu0 0.0
    %2843 = vmatpush1.msra.mxu0 0.0
    %2844 = vmatprep.subr.mxu0 0.0
    %2845 = vmatpush1.msra.mxu0 0.0
    %2846 = vmatprep.subr.mxu0 0.0
    %2847 = vmatpush1.msra.mxu0 0.0
    %2848 = vmatprep.subr.mxu0 0.0
    %2849 = vmatpush1.msra.mxu0 0.0
    %2850 = vmatprep.subr.mxu0 0.0
    %2851 = vmatpush1.msra.mxu0 0.0
    %2852 = vmatprep.subr.mxu0 0.0
    %2853 = vmatpush1.msra.mxu0 0.0
    %2854 = vmatprep.subr.mxu0 0.0
    %2855 = vmatpush1.msra.mxu0 0.0
    %2856 = vmatprep.subr.mxu0 0.0
    %2857 = vmatpush1.msra.mxu0 0.0
    %2858 = vmatprep.subr.mxu0 0.0
    %2859 = vmatpush1.msra.mxu0 0.0
    %2860 = vmatprep.subr.mxu0 0.0
    %2861 = vmatpush1.msra.mxu0 0.0
    %2862 = vmatprep.subr.mxu0 0.0
    %2863 = vmatpush1.msra.mxu0 0.0
    %2864 = vmatprep.subr.mxu0 0.0
    %2865 = vmatpush1.msra.mxu0 0.0
    %2866 = vmatprep.subr.mxu0 0.0
    %2867 = vmatpush1.msra.mxu0 0.0
    %2868 = vmatprep.subr.mxu0 0.0
    %2869 = vmatpush1.msra.mxu0 0.0
    %2870 = vmatprep.subr.mxu0 0.0
    %2871 = vmatpush1.msra.mxu0 0.0
    %2872 = vmatprep.subr.mxu0 0.0
    %2873 = vmatpush1.msra.mxu0 0.0
    %2874 = vmatprep.subr.mxu0 0.0
    %2875 = vmatpush1.msra.mxu0 0.0
    %2876 = vmatprep.subr.mxu0 0.0
    %2877 = vmatpush1.msra.mxu0 0.0
    %2878 = vmatprep.mubr.f32.mxu0 0.0
    %2879 = vmatmul.mubr.f32.gmra.mrb[0].mxu0 %v2812
    %v2880 = vpop.f32.mrb[0].mxu0
    %v2881 = vadd.f32 0.0, %v2880
    %v2882 = vpop.f32.mrb[0].mxu0
    %2883 = vdwg.mxu0
    %2884 = vrot.lane.b32.xlu0 %v216, 36
    %v2885 = vpop.permute.xlu0 %2884
    %v2888 = vsel %vm475, %v2807, 0
    %2890 = vmatprep.subr.mxu0 0.0
    %2891 = vmatpush1.msra.mxu0 %v2885
    %2892 = vmatprep.subr.mxu0 0.0
    %2893 = vmatpush1.msra.mxu0 0.0
    %2894 = vmatprep.subr.mxu0 0.0
    %2895 = vmatpush1.msra.mxu0 0.0
    %2896 = vmatprep.subr.mxu0 0.0
    %2897 = vmatpush1.msra.mxu0 0.0
    %2898 = vmatprep.subr.mxu0 0.0
    %2899 = vmatpush1.msra.mxu0 0.0
    %2900 = vmatprep.subr.mxu0 0.0
    %2901 = vmatpush1.msra.mxu0 0.0
    %2902 = vmatprep.subr.mxu0 0.0
    %2903 = vmatpush1.msra.mxu0 0.0
    %2904 = vmatprep.subr.mxu0 0.0
    %2905 = vmatpush1.msra.mxu0 0.0
    %2906 = vmatprep.subr.mxu0 0.0
    %2907 = vmatpush1.msra.mxu0 0.0
    %2908 = vmatprep.subr.mxu0 0.0
    %2909 = vmatpush1.msra.mxu0 0.0
    %2910 = vmatprep.subr.mxu0 0.0
    %2911 = vmatpush1.msra.mxu0 0.0
    %2912 = vmatprep.subr.mxu0 0.0
    %2913 = vmatpush1.msra.mxu0 0.0
    %2914 = vmatprep.subr.mxu0 0.0
    %2915 = vmatpush1.msra.mxu0 0.0
    %2916 = vmatprep.subr.mxu0 0.0
    %2917 = vmatpush1.msra.mxu0 0.0
    %2918 = vmatprep.subr.mxu0 0.0
    %2919 = vmatpush1.msra.mxu0 0.0
    %2920 = vmatprep.subr.mxu0 0.0
    %2921 = vmatpush1.msra.mxu0 0.0
    %2922 = vmatprep.subr.mxu0 0.0
    %2923 = vmatpush1.msra.mxu0 0.0
    %2924 = vmatprep.subr.mxu0 0.0
    %2925 = vmatpush1.msra.mxu0 0.0
    %2926 = vmatprep.subr.mxu0 0.0
    %2927 = vmatpush1.msra.mxu0 0.0
    %2928 = vmatprep.subr.mxu0 0.0
    %2929 = vmatpush1.msra.mxu0 0.0
    %2930 = vmatprep.subr.mxu0 0.0
    %2931 = vmatpush1.msra.mxu0 0.0
    %2932 = vmatprep.subr.mxu0 0.0
    %2933 = vmatpush1.msra.mxu0 0.0
    %2934 = vmatprep.subr.mxu0 0.0
    %2935 = vmatpush1.msra.mxu0 0.0
    %2936 = vmatprep.subr.mxu0 0.0
    %2937 = vmatpush1.msra.mxu0 0.0
    %2938 = vmatprep.subr.mxu0 0.0
    %2939 = vmatpush1.msra.mxu0 0.0
    %2940 = vmatprep.subr.mxu0 0.0
    %2941 = vmatpush1.msra.mxu0 0.0
    %2942 = vmatprep.subr.mxu0 0.0
    %2943 = vmatpush1.msra.mxu0 0.0
    %2944 = vmatprep.subr.mxu0 0.0
    %2945 = vmatpush1.msra.mxu0 0.0
    %2946 = vmatprep.subr.mxu0 0.0
    %2947 = vmatpush1.msra.mxu0 0.0
    %2948 = vmatprep.subr.mxu0 0.0
    %2949 = vmatpush1.msra.mxu0 0.0
    %2950 = vmatprep.subr.mxu0 0.0
    %2951 = vmatpush1.msra.mxu0 0.0
    %2952 = vmatprep.subr.mxu0 0.0
    %2953 = vmatpush1.msra.mxu0 0.0
    %2954 = vmatprep.mubr.f32.mxu0 0.0
    %2955 = vmatmul.mubr.f32.gmra.mrb[0].mxu0 %v2888
    %v2956 = vpop.f32.mrb[0].mxu0
    %v2957 = vadd.f32 0.0, %v2956
    %v2958 = vpop.f32.mrb[0].mxu0
    %2959 = vdwg.mxu0
    %2962 = vrot.lane.b32.xlu0 %v901, 4
    %v2963 = vpop.permute.xlu0 %2962
    %2964 = vrot.lane.b32.xlu0 %v977, 4
    %v2965 = vpop.permute.xlu0 %2964
    %2970 = vrot.lane.b32.xlu0 %v1231, 8
    %v2971 = vpop.permute.xlu0 %2970
    %2972 = vrot.lane.b32.xlu0 %v1307, 8
    %v2973 = vpop.permute.xlu0 %2972
    %2978 = vrot.lane.b32.xlu0 %v1561, 12
    %v2979 = vpop.permute.xlu0 %2978
    %2980 = vrot.lane.b32.xlu0 %v1637, 12
    %v2981 = vpop.permute.xlu0 %2980
    %2986 = vrot.lane.b32.xlu0 %v1891, 16
    %v2987 = vpop.permute.xlu0 %2986
    %2988 = vrot.lane.b32.xlu0 %v1967, 16
    %v2989 = vpop.permute.xlu0 %2988
    %2994 = vrot.lane.b32.xlu0 %v2221, 20
    %v2995 = vpop.permute.xlu0 %2994
    %2996 = vrot.lane.b32.xlu0 %v2297, 20
    %v2997 = vpop.permute.xlu0 %2996
    %3002 = vrot.lane.b32.xlu0 %v2551, 24
    %v3003 = vpop.permute.xlu0 %3002
    %3004 = vrot.lane.b32.xlu0 %v2627, 24
    %v3005 = vpop.permute.xlu0 %3004
    %3010 = vrot.lane.b32.xlu0 %v2881, 28
    %v3011 = vpop.permute.xlu0 %3010
    %3012 = vrot.lane.b32.xlu0 %v2957, 28
    %v3013 = vpop.permute.xlu0 %3012
    %v3016 = vsel %vm323, %v571, %v2963
    %v3017 = vsel %vm323, %v647, %v2965
    %v3018 = vsel %vm475, %v3016, %v2971
    %v3019 = vsel %vm475, %v3017, %v2973
    %vm3020 = vcmask 97280
    %v3021 = vsel %vm3020, %v3018, %v2979
    %v3022 = vsel %vm3020, %v3019, %v2981
    %vm3023 = vcmask 130048
    %v3024 = vsel %vm3023, %v3021, %v2987
    %v3025 = vsel %vm3023, %v3022, %v2989
    %vm3026 = vcmask 162816
    %v3027 = vsel %vm3026, %v3024, %v2995
    %v3028 = vsel %vm3026, %v3025, %v2997
    %vm3029 = vcmask 195584
    %v3030 = vsel %vm3029, %v3027, %v3003
    %v3031 = vsel %vm3029, %v3028, %v3005
    %vm3032 = vcmask 228352
    %v3033 = vsel %vm3032, %v3030, %v3011
    %v3034 = vsel %vm3032, %v3031, %v3013
    %v3035 = vld [vmem:[#allocation5] sm:$0xff]
    %v3036 = vld [vmem:[#allocation5 + $0x8] sm:$0xff]
    %v3037 = vld [vmem:[#allocation5 + $0x10] sm:$0xff]
    %v3038 = vld [vmem:[#allocation5 + $0x18] sm:$0xff]
    %v3040 = vsel %vm110, %v3033, 0
    %v3043 = vsel %vm110, %v3034, 0
    %3045 = vmatprep.subr.mxu0 0.0
    %3046 = vmatpush1.msra.mxu0 %v3035
    %3047 = vmatprep.subr.mxu0 0.0
    %3048 = vmatpush1.msra.mxu0 %v3036
    %3049 = vmatprep.subr.mxu0 0.0
    %3050 = vmatpush1.msra.mxu0 %v3037
    %3051 = vmatprep.subr.mxu0 0.0
    %3052 = vmatpush1.msra.mxu0 %v3038
    %3053 = vmatprep.subr.mxu0 0.0
    %3054 = vmatpush1.msra.mxu0 0.0
    %3055 = vmatprep.subr.mxu0 0.0
    %3056 = vmatpush1.msra.mxu0 0.0
    %3057 = vmatprep.subr.mxu0 0.0
    %3058 = vmatpush1.msra.mxu0 0.0
    %3059 = vmatprep.subr.mxu0 0.0
    %3060 = vmatpush1.msra.mxu0 0.0
    %3061 = vmatprep.subr.mxu0 0.0
    %3062 = vmatpush1.msra.mxu0 0.0
    %3063 = vmatprep.subr.mxu0 0.0
    %3064 = vmatpush1.msra.mxu0 0.0
    %3065 = vmatprep.subr.mxu0 0.0
    %3066 = vmatpush1.msra.mxu0 0.0
    %3067 = vmatprep.subr.mxu0 0.0
    %3068 = vmatpush1.msra.mxu0 0.0
    %3069 = vmatprep.subr.mxu0 0.0
    %3070 = vmatpush1.msra.mxu0 0.0
    %3071 = vmatprep.subr.mxu0 0.0
    %3072 = vmatpush1.msra.mxu0 0.0
    %3073 = vmatprep.subr.mxu0 0.0
    %3074 = vmatpush1.msra.mxu0 0.0
    %3075 = vmatprep.subr.mxu0 0.0
    %3076 = vmatpush1.msra.mxu0 0.0
    %3077 = vmatprep.subr.mxu0 0.0
    %3078 = vmatpush1.msra.mxu0 0.0
    %3079 = vmatprep.subr.mxu0 0.0
    %3080 = vmatpush1.msra.mxu0 0.0
    %3081 = vmatprep.subr.mxu0 0.0
    %3082 = vmatpush1.msra.mxu0 0.0
    %3083 = vmatprep.subr.mxu0 0.0
    %3084 = vmatpush1.msra.mxu0 0.0
    %3085 = vmatprep.subr.mxu0 0.0
    %3086 = vmatpush1.msra.mxu0 0.0
    %3087 = vmatprep.subr.mxu0 0.0
    %3088 = vmatpush1.msra.mxu0 0.0
    %3089 = vmatprep.subr.mxu0 0.0
    %3090 = vmatpush1.msra.mxu0 0.0
    %3091 = vmatprep.subr.mxu0 0.0
    %3092 = vmatpush1.msra.mxu0 0.0
    %3093 = vmatprep.subr.mxu0 0.0
    %3094 = vmatpush1.msra.mxu0 0.0
    %3095 = vmatprep.subr.mxu0 0.0
    %3096 = vmatpush1.msra.mxu0 0.0
    %3097 = vmatprep.subr.mxu0 0.0
    %3098 = vmatpush1.msra.mxu0 0.0
    %3099 = vmatprep.subr.mxu0 0.0
    %3100 = vmatpush1.msra.mxu0 0.0
    %3101 = vmatprep.subr.mxu0 0.0
    %3102 = vmatpush1.msra.mxu0 0.0
    %3103 = vmatprep.subr.mxu0 0.0
    %3104 = vmatpush1.msra.mxu0 0.0
    %3105 = vmatprep.subr.mxu0 0.0
    %3106 = vmatpush1.msra.mxu0 0.0
    %3107 = vmatprep.subr.mxu0 0.0
    %3108 = vmatpush1.msra.mxu0 0.0
    %3109 = vmatprep.mubr.f32.mxu0 0.0
    %3110 = vmatmul.mubr.f32.gmra.mrb[0].mxu0 %v3040
    %v3111 = vpop.f32.mrb[0].mxu0
    %v3112 = vadd.f32 0.0, %v3111
    %v3113 = vpop.f32.mrb[0].mxu0
    %3114 = vmatprep.mubr.f32.mxu0 0.0
    %3115 = vmatmul.mubr.f32.gmra.mrb[0].mxu0 %v3043
    %v3116 = vpop.f32.mrb[0].mxu0
    %v3117 = vadd.f32 0.0, %v3116
    %v3118 = vpop.f32.mrb[0].mxu0
    %3119 = vdwg.mxu0
    %v3120 = vadd.f32 %v105, %v3112
    %v3121 = vadd.f32 %v106, %v3117
    %v3122 = vld [vmem:[%s2] sm:$0x1]
    %v3123 = vmul.f32 %v3120, %v3120
    %v3124 = vmul.f32 %v3121, %v3121
    %v3125 = vsel %vm110, %v3123, 0.0
    %3126 = vadd.xlane.f32.xlu0 %v3125
    %v3127 = vpop.xlane.xlu0 %3126
    %v3128 = vsel %vm110, %v3124, 0.0
    %3129 = vadd.xlane.f32.xlu0 %v3128
    %v3130 = vpop.xlane.xlu0 %3129
    %v3131 = vmul.f32 %v3127, %v117
    %v3132 = vmul.f32 %v3130, %v117
    %v3133 = vadd.f32 %v3131, 1e-08
    %v3134 = vadd.f32 %v3132, 1e-08
    %v3135 = vrsqrt.pop %v3133
    %v3136 = vrsqrt.pop %v3134
    %v3137 = vmul.f32 %v3120, %v3135
    %v3138 = vmul.f32 %v3121, %v3136
    %v3140 = vlaneseq
    %v3141 = vshrl.u32 %v3140, 7
    %v3142 = vsub.s32 0, %v3141
    %v3143 = vrot.slane %v3122, %v3142
    %v3145 = vmul.f32 %v3137, %v3143
    %v3146 = vmul.f32 %v3138, %v3143
    %v3147 = vld [vmem:[%s9] sm:$0xff]
    %v3148 = vld [vmem:[%s9 + $0x8] sm:$0xff]
    %v3149 = vld [vmem:[%s9 + $0x10] sm:$0xff]
    %v3150 = vld [vmem:[%s9 + $0x18] sm:$0xff]
    %v3151 = vld [vmem:[%s9 + $0x20] sm:$0xff]
    %v3152 = vld [vmem:[%s9 + $0x28] sm:$0xff]
    %v3153 = vld [vmem:[%s9 + $0x30] sm:$0xff]
    %v3154 = vld [vmem:[%s9 + $0x38] sm:$0xff]
    %v3156 = vsel %vm110, %v3145, 0
    %v3159 = vsel %vm110, %v3146, 0
    %3161 = vmatprep.subr.mxu0 %v3148
    %3162 = vmatpush1.msra.mxu0 %v3147
    %3163 = vmatprep.subr.mxu0 %v3150
    %3164 = vmatpush1.msra.mxu0 %v3149
    %3165 = vmatprep.subr.mxu0 %v3152
    %3166 = vmatpush1.msra.mxu0 %v3151
    %3167 = vmatprep.subr.mxu0 %v3154
    %3168 = vmatpush1.msra.mxu0 %v3153
    %3169 = vmatprep.subr.mxu0 0.0
    %3170 = vmatpush1.msra.mxu0 0.0
    %3171 = vmatprep.subr.mxu0 0.0
    %3172 = vmatpush1.msra.mxu0 0.0
    %3173 = vmatprep.subr.mxu0 0.0
    %3174 = vmatpush1.msra.mxu0 0.0
    %3175 = vmatprep.subr.mxu0 0.0
    %3176 = vmatpush1.msra.mxu0 0.0
    %3177 = vmatprep.subr.mxu0 0.0
    %3178 = vmatpush1.msra.mxu0 0.0
    %3179 = vmatprep.subr.mxu0 0.0
    %3180 = vmatpush1.msra.mxu0 0.0
    %3181 = vmatprep.subr.mxu0 0.0
    %3182 = vmatpush1.msra.mxu0 0.0
    %3183 = vmatprep.subr.mxu0 0.0
    %3184 = vmatpush1.msra.mxu0 0.0
    %3185 = vmatprep.subr.mxu0 0.0
    %3186 = vmatpush1.msra.mxu0 0.0
    %3187 = vmatprep.subr.mxu0 0.0
    %3188 = vmatpush1.msra.mxu0 0.0
    %3189 = vmatprep.subr.mxu0 0.0
    %3190 = vmatpush1.msra.mxu0 0.0
    %3191 = vmatprep.subr.mxu0 0.0
    %3192 = vmatpush1.msra.mxu0 0.0
    %3193 = vmatprep.subr.mxu0 0.0
    %3194 = vmatpush1.msra.mxu0 0.0
    %3195 = vmatprep.subr.mxu0 0.0
    %3196 = vmatpush1.msra.mxu0 0.0
    %3197 = vmatprep.subr.mxu0 0.0
    %3198 = vmatpush1.msra.mxu0 0.0
    %3199 = vmatprep.subr.mxu0 0.0
    %3200 = vmatpush1.msra.mxu0 0.0
    %3201 = vmatprep.subr.mxu0 0.0
    %3202 = vmatpush1.msra.mxu0 0.0
    %3203 = vmatprep.subr.mxu0 0.0
    %3204 = vmatpush1.msra.mxu0 0.0
    %3205 = vmatprep.subr.mxu0 0.0
    %3206 = vmatpush1.msra.mxu0 0.0
    %3207 = vmatprep.subr.mxu0 0.0
    %3208 = vmatpush1.msra.mxu0 0.0
    %3209 = vmatprep.subr.mxu0 0.0
    %3210 = vmatpush1.msra.mxu0 0.0
    %3211 = vmatprep.subr.mxu0 0.0
    %3212 = vmatpush1.msra.mxu0 0.0
    %3213 = vmatprep.subr.mxu0 0.0
    %3214 = vmatpush1.msra.mxu0 0.0
    %3215 = vmatprep.subr.mxu0 0.0
    %3216 = vmatpush1.msra.mxu0 0.0
    %3217 = vmatprep.subr.mxu0 0.0
    %3218 = vmatpush1.msra.mxu0 0.0
    %3219 = vmatprep.subr.mxu0 0.0
    %3220 = vmatpush1.msra.mxu0 0.0
    %3221 = vmatprep.subr.mxu0 0.0
    %3222 = vmatpush1.msra.mxu0 0.0
    %3223 = vmatprep.subr.mxu0 0.0
    %3224 = vmatpush1.msra.mxu0 0.0
    %3225 = vmatprep.mubr.f32.mxu0 0.0
    %3226 = vmatmul.mubr.f32.gmra.mrb[0].mxu0 %v3156
    %v3227 = vpop.f32.mrb[0].mxu0
    %v3228 = vadd.f32 0.0, %v3227
    %v3229 = vpop.f32.mrb[0].mxu0
    %v3230 = vadd.f32 0.0, %v3229
    %3231 = vmatprep.mubr.f32.mxu0 0.0
    %3232 = vmatmul.mubr.f32.gmra.mrb[0].mxu0 %v3159
    %v3233 = vpop.f32.mrb[0].mxu0
    %v3234 = vadd.f32 0.0, %v3233
    %v3235 = vpop.f32.mrb[0].mxu0
    %v3236 = vadd.f32 0.0, %v3235
    %3237 = vdwg.mxu0
    %v3238 = vxor.u32 %v3228, 2147483648
    %v3239 = vxor.u32 %v3234, 2147483648
    %v3240 = vmul.f32 %v3238, 1.442695
    %v3241 = vpow.pop %v3240
    %v3242 = vmul.f32 %v3239, 1.442695
    %v3243 = vpow.pop %v3242
    %v3244 = vadd.f32 %v3241, 1.0
    %v3245 = vadd.f32 %v3243, 1.0
    %v3246 = vrcp.pop %v3244
    %v3247 = vmul.f32 1.0, %v3246
    %v3248 = vrcp.pop %v3245
    %v3249 = vmul.f32 1.0, %v3248
    %v3250 = vmul.f32 %v3228, %v3247
    %v3251 = vmul.f32 %v3234, %v3249
    %v3252 = vmul.f32 %v3250, %v3230
    %v3253 = vmul.f32 %v3251, %v3236
    %v3254 = vld [vmem:[%s10] sm:$0xff]
    %v3255 = vld [vmem:[%s10 + $0x8] sm:$0xff]
    %v3256 = vld [vmem:[%s10 + $0x10] sm:$0xff]
    %v3257 = vld [vmem:[%s10 + $0x18] sm:$0xff]
    %v3258 = vld [vmem:[%s10 + $0x20] sm:$0xff]
    %v3259 = vld [vmem:[%s10 + $0x28] sm:$0xff]
    %v3260 = vld [vmem:[%s10 + $0x30] sm:$0xff]
    %v3261 = vld [vmem:[%s10 + $0x38] sm:$0xff]
    %v3262 = vld [vmem:[%s10 + $0x40] sm:$0xff]
    %v3263 = vld [vmem:[%s10 + $0x48] sm:$0xff]
    %v3264 = vld [vmem:[%s10 + $0x50] sm:$0xff]
    %v3265 = vld [vmem:[%s10 + $0x58] sm:$0xff]
    %v3266 = vld [vmem:[%s10 + $0x60] sm:$0xff]
    %v3267 = vld [vmem:[%s10 + $0x68] sm:$0xff]
    %v3268 = vld [vmem:[%s10 + $0x70] sm:$0xff]
    %v3269 = vld [vmem:[%s10 + $0x78] sm:$0xff]
    %3270 = vmatprep.subr.mxu0 0.0
    %3271 = vmatpush1.msra.mxu0 %v3254
    %3272 = vmatprep.subr.mxu0 0.0
    %3273 = vmatpush1.msra.mxu0 %v3255
    %3274 = vmatprep.subr.mxu0 0.0
    %3275 = vmatpush1.msra.mxu0 %v3256
    %3276 = vmatprep.subr.mxu0 0.0
    %3277 = vmatpush1.msra.mxu0 %v3257
    %3278 = vmatprep.subr.mxu0 0.0
    %3279 = vmatpush1.msra.mxu0 %v3258
    %3280 = vmatprep.subr.mxu0 0.0
    %3281 = vmatpush1.msra.mxu0 %v3259
    %3282 = vmatprep.subr.mxu0 0.0
    %3283 = vmatpush1.msra.mxu0 %v3260
    %3284 = vmatprep.subr.mxu0 0.0
    %3285 = vmatpush1.msra.mxu0 %v3261
    %3286 = vmatprep.subr.mxu0 0.0
    %3287 = vmatpush1.msra.mxu0 %v3262
    %3288 = vmatprep.subr.mxu0 0.0
    %3289 = vmatpush1.msra.mxu0 %v3263
    %3290 = vmatprep.subr.mxu0 0.0
    %3291 = vmatpush1.msra.mxu0 %v3264
    %3292 = vmatprep.subr.mxu0 0.0
    %3293 = vmatpush1.msra.mxu0 %v3265
    %3294 = vmatprep.subr.mxu0 0.0
    %3295 = vmatpush1.msra.mxu0 %v3266
    %3296 = vmatprep.subr.mxu0 0.0
    %3297 = vmatpush1.msra.mxu0 %v3267
    %3298 = vmatprep.subr.mxu0 0.0
    %3299 = vmatpush1.msra.mxu0 %v3268
    %3300 = vmatprep.subr.mxu0 0.0
    %3301 = vmatpush1.msra.mxu0 %v3269
    %3302 = vmatprep.subr.mxu0 0.0
    %3303 = vmatpush1.msra.mxu0 0.0
    %3304 = vmatprep.subr.mxu0 0.0
    %3305 = vmatpush1.msra.mxu0 0.0
    %3306 = vmatprep.subr.mxu0 0.0
    %3307 = vmatpush1.msra.mxu0 0.0
    %3308 = vmatprep.subr.mxu0 0.0
    %3309 = vmatpush1.msra.mxu0 0.0
    %3310 = vmatprep.subr.mxu0 0.0
    %3311 = vmatpush1.msra.mxu0 0.0
    %3312 = vmatprep.subr.mxu0 0.0
    %3313 = vmatpush1.msra.mxu0 0.0
    %3314 = vmatprep.subr.mxu0 0.0
    %3315 = vmatpush1.msra.mxu0 0.0
    %3316 = vmatprep.subr.mxu0 0.0
    %3317 = vmatpush1.msra.mxu0 0.0
    %3318 = vmatprep.subr.mxu0 0.0
    %3319 = vmatpush1.msra.mxu0 0.0
    %3320 = vmatprep.subr.mxu0 0.0
    %3321 = vmatpush1.msra.mxu0 0.0
    %3322 = vmatprep.subr.mxu0 0.0
    %3323 = vmatpush1.msra.mxu0 0.0
    %3324 = vmatprep.subr.mxu0 0.0
    %3325 = vmatpush1.msra.mxu0 0.0
    %3326 = vmatprep.subr.mxu0 0.0
    %3327 = vmatpush1.msra.mxu0 0.0
    %3328 = vmatprep.subr.mxu0 0.0
    %3329 = vmatpush1.msra.mxu0 0.0
    %3330 = vmatprep.subr.mxu0 0.0
    %3331 = vmatpush1.msra.mxu0 0.0
    %3332 = vmatprep.subr.mxu0 0.0
    %3333 = vmatpush1.msra.mxu0 0.0
    %3334 = vmatprep.mubr.f32.mxu0 0.0
    %3335 = vmatmul.mubr.f32.gmra.mrb[0].mxu0 %v3252
    %v3336 = vpop.f32.mrb[0].mxu0
    %v3337 = vadd.f32 0.0, %v3336
    %v3338 = vpop.f32.mrb[0].mxu0
    %3339 = vmatprep.mubr.f32.mxu0 0.0
    %3340 = vmatmul.mubr.f32.gmra.mrb[0].mxu0 %v3253
    %v3341 = vpop.f32.mrb[0].mxu0
    %v3342 = vadd.f32 0.0, %v3341
    %v3343 = vpop.f32.mrb[0].mxu0
    %3344 = vdwg.mxu0
    %v3345 = vadd.f32 %v3120, %v3337
    %v3346 = vadd.f32 %v3121, %v3342
    %3347 = vst.msk [vmem:[#allocation11] sm:$0xff] %vm110, %v3345
    %3348 = vst.msk [vmem:[#allocation11 + $0x8] sm:$0xff] %vm110, %v3346
    // Predicated region
    $region66: #{tpu_custom_call.1} parent=1 // pred_check
      _
    $region67: #{tpu_custom_call.1} parent=1 // pred_check_branch
      %3350 = sbr.rel (0) target = $region69
    $region68: #{tpu_custom_call.1} parent=1 // pred_region
      %s3352 = ssub.s32 256, 256
      %3353 = vsyncadd [#allocation4], %s3352
      %s3354 = sshll.u32 [#allocation11], 4
      %s3355 = int_to_ptr.vmem [resolvable:$true] %s3354
      %3360 = dma.vmem_to_hbm [thread:$0]  %s3355, 256, %s11, [#allocation4], 128, 128, 8
    $region69: #{tpu_custom_call.1} parent=1 // pred_fallthru
      _
    // Predicated region
    $region70: #{tpu_custom_call.1} parent=1 // pred_check
      _
    $region71: #{tpu_custom_call.1} parent=1 // pred_check_branch
      %3362 = sbr.rel (0) target = $region73
    $region72: #{tpu_custom_call.1} parent=1 // pred_region
      %3363 = dma.done [#allocation4], 256
    $region73: #{tpu_custom_call.1} parent=1 // pred_fallthru
      _
    %3364 = vsyncpa [#allocation3], 1
    %3365 = vsyncpa [#allocation6], 1
    %3366 = vsyncpa [#allocation9], 1
    %3367 = vsyncpa [#allocation4], 1

</llo_original>
